<compile_context>
chip_gen: v7x
topology: tpu7x:2x2x1
jax: 0.10.0
libtpu: 0.0.40
codegen_flags: <defaults>
</compile_context>

<pallas_src>
import functools
import math

import jax
import jax.numpy as jnp
from jax.experimental import pallas as pl
from jax.experimental.pallas import tpu as pltpu

# ----------------------------- configuration -------------------------------
NODE_FEATURES = 128      # conv_config.node_features
EDGE_BINS = 128          # conv_config.edge_features (RBF bins)
NUM_SPECIES = 128        # must equal node_features for the "+" broadcast in forward
CONV_LAYERS = 3
NUM_TIMESTEPS = 1000
BN_EPS = 1e-5
RBF_GAMMA = (EDGE_BINS - 1) / 4.0   # 1/lengthscale with centers linspace(-4, 0, bins)

_PARAMS = pltpu.CompilerParams(
    dimension_semantics=("arbitrary",),          # layers are sequentially dependent
    vmem_limit_bytes=32 * 1024 * 1024,           # footprint is ~2 MiB; safe on v5e/v6e/v7x
)


def _softplus(x):
    return jnp.maximum(x, 0.0) + jnp.log1p(jnp.exp(-jnp.abs(x)))


def _sigmoid(x):
    # exp + approximate reciprocal both land in the EUP slot (VALU stays free)
    return pl.reciprocal(1.0 + jnp.exp(-x), approx=True)


# ------------------------------ fused kernel --------------------------------
def _fused_forward_kernel(
        # tiny int32 index vectors (one-hots are built in-kernel)
        at_ref, bcol_ref, brow_ref, src_ref, dst_ref, dstrow_ref,
        # layer-0 (embedding / RBF) inputs & weights (constant blocks, resident)
        ft_ref, tsel_ref, lflat_ref, ea_ref, centers_ref,
        coord_w_ref, coord_b_ref, lat_w_ref, lat_b_ref,
        atom_w_ref, atom_b_ref, rbf_w_ref, rbf_b_ref,
        # per-layer ComformerConv weights (one block per grid step)
        wqkv_ref, wefm_ref, wsq_ref, bwide_ref, bsq_ref,
        # output-head weights (constant blocks, used at the last layer)
        wnode_ref, bnode_ref, weps_ref, beps_ref,
        # outputs
        node_out_ref, crys_out_ref,
        # VMEM scratch, resident across grid steps
        x_sc, ef_sc,
        *, d, eps, gamma, num_graphs, num_species):
    layer = pl.program_id(0)
    n = x_sc.shape[0]
    e = ef_sc.shape[0]

    # ---- layer 0: node embedding + atom Linear, RBF expansion + lin_rbf ----
    @pl.when(layer == 0)
    def _():
        oneh = (at_ref[...] == jax.lax.broadcasted_iota(
            jnp.int32, (n, num_species), 1)).astype(jnp.float32)
        coord = jnp.dot(ft_ref[...].astype(jnp.bfloat16), coord_w_ref[...],
                        preferred_element_type=jnp.float32) + coord_b_ref[...]
        lemb = jnp.dot(lflat_ref[...].astype(jnp.bfloat16), lat_w_ref[...],
                       preferred_element_type=jnp.float32) + lat_b_ref[...]
        per_crystal = (tsel_ref[...] + lemb).astype(jnp.bfloat16)           # [B, D]
        pb = (bcol_ref[...] == jax.lax.broadcasted_iota(
            jnp.int32, (n, num_graphs), 1)).astype(jnp.bfloat16)            # [N, B]
        x0 = oneh + coord + jnp.dot(pb, per_crystal,
                                    preferred_element_type=jnp.float32)
        x_sc[...] = jnp.dot(x0.astype(jnp.bfloat16), atom_w_ref[...],
                            preferred_element_type=jnp.float32) + atom_b_ref[...]

        ea = ea_ref[...]                                                    # [E, 3]
        dist = jnp.sqrt(jnp.sum(ea * ea, axis=1, keepdims=True))            # [E, 1]
        edge_scalar = -0.75 * pl.reciprocal(dist, approx=True)
        rbf = jnp.exp(-gamma * (edge_scalar - centers_ref[...]) ** 2)       # [E, bins]
        y = jnp.dot(rbf.astype(jnp.bfloat16), rbf_w_ref[...],
                    preferred_element_type=jnp.float32) + rbf_b_ref[...]
        ef_sc[...] = _softplus(y).astype(jnp.bfloat16)

    # -------------------- ComformerConv layer (every step) ------------------
    x = x_sc[...]                                    # [N, D] f32, resident
    xb = x.astype(jnp.bfloat16)
    efb = ef_sc[...]                                 # [E, D] bf16, resident

    bw = bwide_ref[0]                                # [2, 3D] f32: [bq|bk|bv], [kb1|mb1|0]
    bs = bsq_ref[0]                                  # [4, D]  f32: be, bc, kb2, mb2

    # fused q|k|v projection (single 384-wide MXU matmul)
    qkvb = (jnp.dot(xb, wqkv_ref[0], preferred_element_type=jnp.float32)
            + bw[0:1]).astype(jnp.bfloat16)          # [N, 3D]

    # lin_edge + shared edge branch of both message MLPs (256-wide output)
    efpb = (jnp.dot(efb, wsq_ref[0, 0], preferred_element_type=jnp.float32)
            + bs[0:1]).astype(jnp.bfloat16)          # [E, D]
    ef_mlp = jnp.dot(efpb, wefm_ref[0],
                     preferred_element_type=jnp.float32) + bw[1:2, :2 * d]  # [E, 2D]

    # in-kernel one-hot gathers: dst fetches q|k|v, src fetches k|v
    gdst = (dst_ref[...] == jax.lax.broadcasted_iota(
        jnp.int32, (e, n), 1)).astype(jnp.bfloat16)  # [E, N]
    gsrc = (src_ref[...] == jax.lax.broadcasted_iota(
        jnp.int32, (e, n), 1)).astype(jnp.bfloat16)
    dst_qkv = jnp.dot(gdst, qkvb, preferred_element_type=jnp.float32)       # [E, 3D]
    src_kv = jnp.dot(gsrc, qkvb[:, d:], preferred_element_type=jnp.float32)  # [E, 2D]

    # key_update MLP on cat(k_i, k_j, edge): Linear(3D->D) + SiLU + Linear(D->D)
    h = (jnp.dot(dst_qkv[:, d:2 * d].astype(jnp.bfloat16), wsq_ref[0, 4],
                 preferred_element_type=jnp.float32)
         + jnp.dot(src_kv[:, :d].astype(jnp.bfloat16), wsq_ref[0, 5],
                   preferred_element_type=jnp.float32)
         + ef_mlp[:, :d])
    h = h * _sigmoid(h)                              # SiLU
    key_upd = jnp.dot(h.astype(jnp.bfloat16), wsq_ref[0, 2],
                      preferred_element_type=jnp.float32) + bs[2:3]
    alpha = (dst_qkv[:, :d] * key_upd) * (1.0 / math.sqrt(d))

    # lin_msg_update MLP on cat(v_i, v_j, edge)
    m = (jnp.dot(dst_qkv[:, 2 * d:].astype(jnp.bfloat16), wsq_ref[0, 6],
                 preferred_element_type=jnp.float32)
         + jnp.dot(src_kv[:, d:].astype(jnp.bfloat16), wsq_ref[0, 7],
                   preferred_element_type=jnp.float32)
         + ef_mlp[:, d:])
    m = m * _sigmoid(m)                              # SiLU
    msg = jnp.dot(m.astype(jnp.bfloat16), wsq_ref[0, 3],
                  preferred_element_type=jnp.float32) + bs[3:4]

    # bn_att (training-mode batch stats, identity affine) + sigmoid gate
    mu = jnp.mean(alpha, axis=0, keepdims=True)
    var = jnp.mean((alpha - mu) ** 2, axis=0, keepdims=True)
    msg = msg * _sigmoid((alpha - mu) * jax.lax.rsqrt(var + eps))

    # scatter-add onto destination nodes ([N,E] one-hot @ [E,D]) + lin_concate
    smat = (dstrow_ref[...] == jax.lax.broadcasted_iota(
        jnp.int32, (n, e), 0)).astype(jnp.bfloat16)  # [N, E]
    agg = jnp.dot(smat, msg.astype(jnp.bfloat16), preferred_element_type=jnp.float32)
    agg = jnp.dot(agg.astype(jnp.bfloat16), wsq_ref[0, 1],
                  preferred_element_type=jnp.float32) + bs[1:2]

    # node update: softplus(x + bn(agg))  (training-mode batch stats)
    mu2 = jnp.mean(agg, axis=0, keepdims=True)
    var2 = jnp.mean((agg - mu2) ** 2, axis=0, keepdims=True)
    x_new = _softplus(x + (agg - mu2) * jax.lax.rsqrt(var2 + eps))
    x_sc[...] = x_new

    # ----------------- last layer: pooling + fused output heads -------------
    @pl.when(layer == pl.num_programs(0) - 1)
    def _():
        nfb = x_new.astype(jnp.bfloat16)
        node_out_ref[...] = jnp.dot(nfb, wnode_ref[...],
                                    preferred_element_type=jnp.float32) + bnode_ref[...]
        poolf = (brow_ref[...] == jax.lax.broadcasted_iota(
            jnp.int32, (num_graphs, n), 0)).astype(jnp.float32)             # [B, N]
        cnt = jnp.maximum(jnp.sum(poolf, axis=1, keepdims=True), 1.0)
        pooled = (jnp.dot(poolf.astype(jnp.bfloat16), nfb,
                          preferred_element_type=jnp.float32)
                  * pl.reciprocal(cnt, approx=True))                         # [B, D]
        crys_out_ref[...] = jnp.dot(pooled.astype(jnp.bfloat16), weps_ref[...],
                                    preferred_element_type=jnp.float32) + beps_ref[...]


# ------------------------------ kernel wrapper -------------------------------
def pallas_joint_forward(packed, At, Ft, batch, time_sel, L_flat, edge_attr, src, dst):
    n = Ft.shape[0]
    e = edge_attr.shape[0]
    b = time_sel.shape[0]
    d = NODE_FEATURES
    num_layers = packed["wqkv"].shape[0]

    args = (
        At.reshape(n, 1).astype(jnp.int32),        # 1  species ids
        batch.reshape(n, 1).astype(jnp.int32),     # 2  node -> crystal (column)
        batch.reshape(1, n).astype(jnp.int32),     # 3  node -> crystal (row, for pooling)
        src.reshape(e, 1).astype(jnp.int32),       # 4  edge source
        dst.reshape(e, 1).astype(jnp.int32),       # 5  edge destination
        dst.reshape(1, e).astype(jnp.int32),       # 6  edge destination (row, for scatter)
        Ft.astype(jnp.float32),                    # 7  fractional coords
        time_sel.astype(jnp.float32),              # 8  time embeddings [B, D]
        L_flat.astype(jnp.float32),                # 9  flattened lattices [B, 9]
        edge_attr.astype(jnp.float32),             # 10 edge vectors [E, 3]
        packed["centers"],                         # 11 RBF centers
        packed["coord_w"], packed["coord_b"],      # 12, 13
        packed["lat_w"], packed["lat_b"],          # 14, 15
        packed["atom_w"], packed["atom_b"],        # 16, 17
        packed["rbf_w"], packed["rbf_b"],          # 18, 19
        packed["wqkv"], packed["wefm"], packed["wsq"],   # 20, 21, 22  per-layer
        packed["bwide"], packed["bsq"],            # 23, 24       per-layer
        packed["wnode"], packed["bnode"],          # 25, 26       heads
        packed["weps"], packed["beps"],            # 27, 28       heads
    )

    def const2d(a):
        return pl.BlockSpec(a.shape, lambda l: (0, 0))

    in_specs = ([const2d(a) for a in args[:19]]
                + [pl.BlockSpec((1, d, 3 * d), lambda l: (l, 0, 0)),
                   pl.BlockSpec((1, d, 2 * d), lambda l: (l, 0, 0)),
                   pl.BlockSpec((1, 8, d, d), lambda l: (l, 0, 0, 0)),
                   pl.BlockSpec((1, 2, 3 * d), lambda l: (l, 0, 0)),
                   pl.BlockSpec((1, 4, d), lambda l: (l, 0, 0))]
                + [const2d(a) for a in args[24:]])

    grid_spec = pltpu.PrefetchScalarGridSpec(
        num_scalar_prefetch=0,
        grid=(num_layers,),
        in_specs=in_specs,
        out_specs=(pl.BlockSpec((n, 2 * d), lambda l: (0, 0)),
                   pl.BlockSpec((b, 128), lambda l: (0, 0))),
        scratch_shapes=[pltpu.VMEM((n, d), jnp.float32),      # node features (resident)
                        pltpu.VMEM((e, d), jnp.bfloat16)],    # edge features (resident)
    )
    return pl.pallas_call(
        functools.partial(_fused_forward_kernel, d=d, eps=BN_EPS, gamma=RBF_GAMMA,
                          num_graphs=b, num_species=NUM_SPECIES),
        grid_spec=grid_spec,
        out_shape=(jax.ShapeDtypeStruct((n, 2 * d), jnp.float32),
                   jax.ShapeDtypeStruct((b, 128), jnp.float32)),
        compiler_params=_PARAMS,
    )(*args)


# --------------------------- parameter construction -------------------------
def _linear_params(key, fan_in, fan_out):
    # PyTorch nn.Linear default init: U(-1/sqrt(fan_in), 1/sqrt(fan_in))
    kw, kb = jax.random.split(key)
    bound = 1.0 / math.sqrt(fan_in)
    w = jax.random.uniform(kw, (fan_in, fan_out), jnp.float32, -bound, bound)
    b = jax.random.uniform(kb, (fan_out,), jnp.float32, -bound, bound)
    return w, b


def init_params(key, num_species=NUM_SPECIES, d=NODE_FEATURES, bins=EDGE_BINS):
    keys = iter(jax.random.split(key, 64))
    p = {}
    # JointDiffusionTransformer heads / embeddings
    p["epsL_w"], p["epsL_b"] = _linear_params(next(keys), d, 9)
    p["scoreF_w"], p["scoreF_b"] = _linear_params(next(keys), d, 3)
    p["species_w"], p["species_b"] = _linear_params(next(keys), d, num_species)
    p["time_embed"] = jax.random.normal(next(keys), (NUM_TIMESTEPS, d), jnp.float32)
    # Linear layers created inside forward() in the reference (fixed deterministically here)
    p["coord_w"], p["coord_b"] = _linear_params(next(keys), 3, num_species)
    p["lat_w"], p["lat_b"] = _linear_params(next(keys), 9, d)
    # eComformer
    p["atom_w"], p["atom_b"] = _linear_params(next(keys), d, d)
    p["rbf_w"], p["rbf_b"] = _linear_params(next(keys), bins, d)
    p["layers"] = []
    for _ in range(CONV_LAYERS):
        lp = {}
        lp["wq"], lp["bq"] = _linear_params(next(keys), d, d)
        lp["wk"], lp["bk"] = _linear_params(next(keys), d, d)
        lp["wv"], lp["bv"] = _linear_params(next(keys), d, d)
        lp["we"], lp["be"] = _linear_params(next(keys), d, d)        # lin_edge
        lp["wc"], lp["bc"] = _linear_params(next(keys), d, d)        # lin_concate (heads=1)
        lp["kw1"], lp["kb1"] = _linear_params(next(keys), 3 * d, d)  # key_update MLP
        lp["kw2"], lp["kb2"] = _linear_params(next(keys), d, d)
        lp["mw1"], lp["mb1"] = _linear_params(next(keys), 3 * d, d)  # lin_msg_update MLP
        lp["mw2"], lp["mb2"] = _linear_params(next(keys), d, d)
        p["layers"].append(lp)
    return p


def pack_params(p):
    """Static weight packing — called ONCE outside the jitted forward."""
    d = NODE_FEATURES
    bins = EDGE_BINS
    bf = jnp.bfloat16

    def row(v):
        return v.reshape(1, -1).astype(jnp.float32)

    layers = p["layers"]
    wqkv = jnp.stack([jnp.concatenate([lp["wq"], lp["wk"], lp["wv"]], axis=1)
                      for lp in layers]).astype(bf)                            # [L, D, 3D]
    wefm = jnp.stack([jnp.concatenate([lp["kw1"][2 * d:], lp["mw1"][2 * d:]], axis=1)
                      for lp in layers]).astype(bf)                            # [L, D, 2D]
    wsq = jnp.stack([jnp.stack([lp["we"], lp["wc"], lp["kw2"], lp["mw2"],
                                lp["kw1"][:d], lp["kw1"][d:2 * d],
                                lp["mw1"][:d], lp["mw1"][d:2 * d]])
                     for lp in layers]).astype(bf)                             # [L, 8, D, D]
    bwide = jnp.stack([jnp.stack([
        jnp.concatenate([lp["bq"], lp["bk"], lp["bv"]]),
        jnp.concatenate([lp["kb1"], lp["mb1"], jnp.zeros((d,), jnp.float32)])])
        for lp in layers]).astype(jnp.float32)                                 # [L, 2, 3D]
    bsq = jnp.stack([jnp.stack([lp["be"], lp["bc"], lp["kb2"], lp["mb2"]])
                     for lp in layers]).astype(jnp.float32)                    # [L, 4, D]

    # lane-dense head slabs: [species | scoreF] on node feats, padded epsL on pooled feats
    wnode = jnp.zeros((d, 2 * d), jnp.float32)
    wnode = wnode.at[:, :NUM_SPECIES].set(p["species_w"])
    wnode = wnode.at[:, NUM_SPECIES:NUM_SPECIES + 3].set(p["scoreF_w"])
    bnode = jnp.zeros((1, 2 * d), jnp.float32)
    bnode = bnode.at[0, :NUM_SPECIES].set(p["species_b"])
    bnode = bnode.at[0, NUM_SPECIES:NUM_SPECIES + 3].set(p["scoreF_b"])
    weps = jnp.zeros((d, 128), jnp.float32).at[:, :9].set(p["epsL_w"])
    beps = jnp.zeros((1, 128), jnp.float32).at[0, :9].set(p["epsL_b"])

    return {
        "time_embed": p["time_embed"].astype(jnp.float32),
        "centers": jnp.linspace(-4.0, 0.0, bins).reshape(1, bins).astype(jnp.float32),
        "coord_w": p["coord_w"].astype(bf), "coord_b": row(p["coord_b"]),
        "lat_w": p["lat_w"].astype(bf), "lat_b": row(p["lat_b"]),
        "atom_w": p["atom_w"].astype(bf), "atom_b": row(p["atom_b"]),
        "rbf_w": p["rbf_w"].astype(bf), "rbf_b": row(p["rbf_b"]),
        "wqkv": wqkv, "wefm": wefm, "wsq": wsq, "bwide": bwide, "bsq": bsq,
        "wnode": wnode.astype(bf), "bnode": bnode,
        "weps": weps.astype(bf), "beps": beps,
    }


# ------------------------------ forward pass --------------------------------
def joint_diffusion_transformer_forward(packed, Lt, Ft, At, edge_index, edge_attr, batch, t):
    assert NUM_SPECIES == NODE_FEATURES  # required by the reference's "+" broadcast
    B = Lt.shape[0]
    src, dst = edge_index[0], edge_index[1]   # PyG: row 0 = source j, row 1 = target i

    time_sel = packed["time_embed"][t]                                # [B, D] (tiny gather)
    node_out, crys_out = pallas_joint_forward(
        packed, At, Ft, batch, time_sel, Lt.reshape(B, 9), edge_attr, src, dst)

    logitsA = node_out[:, :NUM_SPECIES]
    scoreF_hat = node_out[:, NUM_SPECIES:NUM_SPECIES + 3]
    epsL_hat = crys_out[:, :9].reshape(B, 3, 3)
    return epsL_hat, scoreF_hat, logitsA


# ----------------------------------- main ------------------------------------
if __name__ == "__main__":
    key = jax.random.PRNGKey(0)
    pk, dk = jax.random.split(key)
    params = init_params(pk)
    packed = pack_params(params)          # static packing hoisted out of the jitted path

    B, N, E = 2, 16, 48
    ks = jax.random.split(dk, 8)
    Lt = jax.random.normal(ks[0], (B, 3, 3), jnp.float32)            # noisy lattices
    Ft = jax.random.normal(ks[1], (N, 3), jnp.float32)               # fractional coords
    At = jax.random.randint(ks[2], (N,), 0, NUM_SPECIES)             # species ids
    batch = jnp.concatenate([jnp.zeros(N // 2, jnp.int32),
                             jnp.ones(N // 2, jnp.int32)])           # node -> crystal
    # edges stay within each crystal
    src0 = jax.random.randint(ks[3], (E // 2,), 0, N // 2)
    dst0 = jax.random.randint(ks[4], (E // 2,), 0, N // 2)
    src1 = jax.random.randint(ks[5], (E // 2,), N // 2, N)
    dst1 = jax.random.randint(ks[6], (E // 2,), N // 2, N)
    edge_index = jnp.stack([jnp.concatenate([src0, src1]),
                            jnp.concatenate([dst0, dst1])]).astype(jnp.int32)  # [2, E]
    edge_attr = jax.random.normal(ks[7], (E, 3), jnp.float32)        # edge vectors
    t = jnp.array([17, 503], jnp.int32)                              # diffusion timesteps

    fwd = jax.jit(joint_diffusion_transformer_forward)
    epsL, scoreF, logitsA = fwd(packed, Lt, Ft, At, edge_index, edge_attr, batch, t)
    jax.block_until_ready((epsL, scoreF, logitsA))

    assert epsL.shape == (B, 3, 3)
    assert scoreF.shape == (N, 3)
    assert logitsA.shape == (N, NUM_SPECIES)
    assert jnp.all(jnp.isfinite(epsL)) and jnp.all(jnp.isfinite(scoreF)) and jnp.all(jnp.isfinite(logitsA))
    print("KERNEL_OK")
</pallas_src>

<mosaic_0001>
module attributes {stable_mosaic.version = 11 : i64} {
  func.func @_fused_forward_kernel(%arg0: i32, %arg1: memref<16x1xi32, #tpu.memory_space<vmem>>, %arg2: memref<16x1xi32, #tpu.memory_space<vmem>>, %arg3: memref<1x16xi32, #tpu.memory_space<vmem>>, %arg4: memref<48x1xi32, #tpu.memory_space<vmem>>, %arg5: memref<48x1xi32, #tpu.memory_space<vmem>>, %arg6: memref<1x48xi32, #tpu.memory_space<vmem>>, %arg7: memref<16x3xf32, #tpu.memory_space<vmem>>, %arg8: memref<2x128xf32, #tpu.memory_space<vmem>>, %arg9: memref<2x9xf32, #tpu.memory_space<vmem>>, %arg10: memref<48x3xf32, #tpu.memory_space<vmem>>, %arg11: memref<1x128xf32, #tpu.memory_space<vmem>>, %arg12: memref<3x128xbf16, #tpu.memory_space<vmem>>, %arg13: memref<1x128xf32, #tpu.memory_space<vmem>>, %arg14: memref<9x128xbf16, #tpu.memory_space<vmem>>, %arg15: memref<1x128xf32, #tpu.memory_space<vmem>>, %arg16: memref<128x128xbf16, #tpu.memory_space<vmem>>, %arg17: memref<1x128xf32, #tpu.memory_space<vmem>>, %arg18: memref<128x128xbf16, #tpu.memory_space<vmem>>, %arg19: memref<1x128xf32, #tpu.memory_space<vmem>>, %arg20: memref<1x128x384xbf16, #tpu.memory_space<vmem>>, %arg21: memref<1x128x256xbf16, #tpu.memory_space<vmem>>, %arg22: memref<1x8x128x128xbf16, #tpu.memory_space<vmem>>, %arg23: memref<1x2x384xf32, #tpu.memory_space<vmem>>, %arg24: memref<1x4x128xf32, #tpu.memory_space<vmem>>, %arg25: memref<128x256xbf16, #tpu.memory_space<vmem>>, %arg26: memref<1x256xf32, #tpu.memory_space<vmem>>, %arg27: memref<128x128xbf16, #tpu.memory_space<vmem>>, %arg28: memref<1x128xf32, #tpu.memory_space<vmem>>, %arg29: memref<16x256xf32, #tpu.memory_space<vmem>>, %arg30: memref<2x128xf32, #tpu.memory_space<vmem>>, %arg31: memref<16x128xf32, #tpu.memory_space<vmem>>, %arg32: memref<48x128xbf16, #tpu.memory_space<vmem>>) attributes {dimension_semantics = [#tpu.dimension_semantics<arbitrary>], iteration_bounds = array<i64: 3>, scalar_prefetch = 0 : i64, scratch_operands = 2 : i64, tpu.core_type = #tpu.core_type<tc>, window_params = [{pipeline_mode = #tpu.pipeline_mode<synchronous>, transform_indices = @transform_0, window_bounds = array<i64: 16, 1>}, {pipeline_mode = #tpu.pipeline_mode<synchronous>, transform_indices = @transform_1, window_bounds = array<i64: 16, 1>}, {pipeline_mode = #tpu.pipeline_mode<synchronous>, transform_indices = @transform_2, window_bounds = array<i64: 1, 16>}, {pipeline_mode = #tpu.pipeline_mode<synchronous>, transform_indices = @transform_3, window_bounds = array<i64: 48, 1>}, {pipeline_mode = #tpu.pipeline_mode<synchronous>, transform_indices = @transform_4, window_bounds = array<i64: 48, 1>}, {pipeline_mode = #tpu.pipeline_mode<synchronous>, transform_indices = @transform_5, window_bounds = array<i64: 1, 48>}, {pipeline_mode = #tpu.pipeline_mode<synchronous>, transform_indices = @transform_6, window_bounds = array<i64: 16, 3>}, {pipeline_mode = #tpu.pipeline_mode<synchronous>, transform_indices = @transform_7, window_bounds = array<i64: 2, 128>}, {pipeline_mode = #tpu.pipeline_mode<synchronous>, transform_indices = @transform_8, window_bounds = array<i64: 2, 9>}, {pipeline_mode = #tpu.pipeline_mode<synchronous>, transform_indices = @transform_9, window_bounds = array<i64: 48, 3>}, {pipeline_mode = #tpu.pipeline_mode<synchronous>, transform_indices = @transform_10, window_bounds = array<i64: 1, 128>}, {pipeline_mode = #tpu.pipeline_mode<synchronous>, transform_indices = @transform_11, window_bounds = array<i64: 3, 128>}, {pipeline_mode = #tpu.pipeline_mode<synchronous>, transform_indices = @transform_12, window_bounds = array<i64: 1, 128>}, {pipeline_mode = #tpu.pipeline_mode<synchronous>, transform_indices = @transform_13, window_bounds = array<i64: 9, 128>}, {pipeline_mode = #tpu.pipeline_mode<synchronous>, transform_indices = @transform_14, window_bounds = array<i64: 1, 128>}, {pipeline_mode = #tpu.pipeline_mode<synchronous>, transform_indices = @transform_15, window_bounds = array<i64: 128, 128>}, {pipeline_mode = #tpu.pipeline_mode<synchronous>, transform_indices = @transform_16, window_bounds = array<i64: 1, 128>}, {pipeline_mode = #tpu.pipeline_mode<synchronous>, transform_indices = @transform_17, window_bounds = array<i64: 128, 128>}, {pipeline_mode = #tpu.pipeline_mode<synchronous>, transform_indices = @transform_18, window_bounds = array<i64: 1, 128>}, {transform_indices = @transform_19, window_bounds = array<i64: 1, 128, 384>}, {transform_indices = @transform_20, window_bounds = array<i64: 1, 128, 256>}, {transform_indices = @transform_21, window_bounds = array<i64: 1, 8, 128, 128>}, {transform_indices = @transform_22, window_bounds = array<i64: 1, 2, 384>}, {transform_indices = @transform_23, window_bounds = array<i64: 1, 4, 128>}, {pipeline_mode = #tpu.pipeline_mode<synchronous>, transform_indices = @transform_24, window_bounds = array<i64: 128, 256>}, {pipeline_mode = #tpu.pipeline_mode<synchronous>, transform_indices = @transform_25, window_bounds = array<i64: 1, 256>}, {pipeline_mode = #tpu.pipeline_mode<synchronous>, transform_indices = @transform_26, window_bounds = array<i64: 128, 128>}, {pipeline_mode = #tpu.pipeline_mode<synchronous>, transform_indices = @transform_27, window_bounds = array<i64: 1, 128>}, {pipeline_mode = #tpu.pipeline_mode<synchronous>, transform_indices = @transform_28, window_bounds = array<i64: 16, 256>}, {pipeline_mode = #tpu.pipeline_mode<synchronous>, transform_indices = @transform_29, window_bounds = array<i64: 2, 128>}]} {
    %c0_i32 = arith.constant 0 : i32
    %0 = arith.cmpi eq, %arg0, %c0_i32 : i32
    %1 = arith.extui %0 : i1 to i32
    %c0_i32_0 = arith.constant 0 : i32
    %2 = arith.cmpi ne, %1, %c0_i32_0 : i32
    scf.if %2 {
      %c0_81 = arith.constant 0 : index
      %c0_82 = arith.constant 0 : index
      %177 = vector.load %arg1[%c0_81, %c0_82] : memref<16x1xi32, #tpu.memory_space<vmem>>, vector<16x1xi32>
      %178 = tpu.iota {dimensions = array<i32: 1>} : vector<16x128xi32>
      %179 = vector.broadcast %177 : vector<16x1xi32> to vector<16x128xi32>
      %180 = arith.cmpi eq, %179, %178 : vector<16x128xi32>
      %181 = arith.extui %180 : vector<16x128xi1> to vector<16x128xi32>
      %182 = arith.sitofp %181 : vector<16x128xi32> to vector<16x128xf32>
      %c0_83 = arith.constant 0 : index
      %c0_84 = arith.constant 0 : index
      %183 = vector.load %arg7[%c0_83, %c0_84] : memref<16x3xf32, #tpu.memory_space<vmem>>, vector<16x3xf32>
      %184 = arith.truncf %183 : vector<16x3xf32> to vector<16x3xbf16>
      %c0_85 = arith.constant 0 : index
      %c0_86 = arith.constant 0 : index
      %185 = vector.load %arg12[%c0_85, %c0_86] : memref<3x128xbf16, #tpu.memory_space<vmem>>, vector<3x128xbf16>
      %cst_87 = arith.constant dense<0.000000e+00> : vector<16x128xf32>
      %186 = tpu.matmul %184, %185, %cst_87 {dimension_numbers = #tpu.dot_dimension_numbers<[1], [0], [0], [1], [0, 0, 1, 1], [], []>} : vector<16x3xbf16>, vector<3x128xbf16>, vector<16x128xf32> -> vector<16x128xf32>
      %c0_88 = arith.constant 0 : index
      %c0_89 = arith.constant 0 : index
      %187 = vector.load %arg13[%c0_88, %c0_89] : memref<1x128xf32, #tpu.memory_space<vmem>>, vector<1x128xf32>
      %188 = vector.broadcast %187 : vector<1x128xf32> to vector<16x128xf32>
      %189 = arith.addf %186, %188 : vector<16x128xf32>
      %c0_90 = arith.constant 0 : index
      %c0_91 = arith.constant 0 : index
      %190 = vector.load %arg9[%c0_90, %c0_91] : memref<2x9xf32, #tpu.memory_space<vmem>>, vector<2x9xf32>
      %191 = arith.truncf %190 : vector<2x9xf32> to vector<2x9xbf16>
      %c0_92 = arith.constant 0 : index
      %c0_93 = arith.constant 0 : index
      %192 = vector.load %arg14[%c0_92, %c0_93] : memref<9x128xbf16, #tpu.memory_space<vmem>>, vector<9x128xbf16>
      %cst_94 = arith.constant dense<0.000000e+00> : vector<2x128xf32>
      %193 = tpu.matmul %191, %192, %cst_94 {dimension_numbers = #tpu.dot_dimension_numbers<[1], [0], [0], [1], [0, 0, 1, 1], [], []>} : vector<2x9xbf16>, vector<9x128xbf16>, vector<2x128xf32> -> vector<2x128xf32>
      %c0_95 = arith.constant 0 : index
      %c0_96 = arith.constant 0 : index
      %194 = vector.load %arg15[%c0_95, %c0_96] : memref<1x128xf32, #tpu.memory_space<vmem>>, vector<1x128xf32>
      %195 = vector.broadcast %194 : vector<1x128xf32> to vector<2x128xf32>
      %196 = arith.addf %193, %195 : vector<2x128xf32>
      %c0_97 = arith.constant 0 : index
      %c0_98 = arith.constant 0 : index
      %197 = vector.load %arg8[%c0_97, %c0_98] : memref<2x128xf32, #tpu.memory_space<vmem>>, vector<2x128xf32>
      %198 = arith.addf %197, %196 : vector<2x128xf32>
      %199 = arith.truncf %198 : vector<2x128xf32> to vector<2x128xbf16>
      %c0_99 = arith.constant 0 : index
      %c0_100 = arith.constant 0 : index
      %200 = vector.load %arg2[%c0_99, %c0_100] : memref<16x1xi32, #tpu.memory_space<vmem>>, vector<16x1xi32>
      %201 = tpu.iota {dimensions = array<i32: 1>} : vector<16x2xi32>
      %202 = vector.broadcast %200 : vector<16x1xi32> to vector<16x2xi32>
      %203 = arith.cmpi eq, %202, %201 : vector<16x2xi32>
      %204 = arith.extui %203 : vector<16x2xi1> to vector<16x2xi32>
      %205 = arith.sitofp %204 : vector<16x2xi32> to vector<16x2xf32>
      %206 = arith.truncf %205 : vector<16x2xf32> to vector<16x2xbf16>
      %207 = arith.addf %182, %189 : vector<16x128xf32>
      %cst_101 = arith.constant dense<0.000000e+00> : vector<16x128xf32>
      %208 = tpu.matmul %206, %199, %cst_101 {dimension_numbers = #tpu.dot_dimension_numbers<[1], [0], [0], [1], [0, 0, 1, 1], [], []>} : vector<16x2xbf16>, vector<2x128xbf16>, vector<16x128xf32> -> vector<16x128xf32>
      %209 = arith.addf %207, %208 : vector<16x128xf32>
      %210 = arith.truncf %209 : vector<16x128xf32> to vector<16x128xbf16>
      %c0_102 = arith.constant 0 : index
      %c0_103 = arith.constant 0 : index
      %211 = vector.load %arg16[%c0_102, %c0_103] : memref<128x128xbf16, #tpu.memory_space<vmem>>, vector<128x128xbf16>
      %cst_104 = arith.constant dense<0.000000e+00> : vector<16x128xf32>
      %212 = tpu.matmul %210, %211, %cst_104 {dimension_numbers = #tpu.dot_dimension_numbers<[1], [0], [0], [1], [0, 0, 1, 1], [], []>} : vector<16x128xbf16>, vector<128x128xbf16>, vector<16x128xf32> -> vector<16x128xf32>
      %c0_105 = arith.constant 0 : index
      %c0_106 = arith.constant 0 : index
      %213 = vector.load %arg17[%c0_105, %c0_106] : memref<1x128xf32, #tpu.memory_space<vmem>>, vector<1x128xf32>
      %214 = vector.broadcast %213 : vector<1x128xf32> to vector<16x128xf32>
      %215 = arith.addf %212, %214 : vector<16x128xf32>
      %c0_107 = arith.constant 0 : index
      %c0_108 = arith.constant 0 : index
      %216 = vector.load %arg31[%c0_107, %c0_108] : memref<16x128xf32, #tpu.memory_space<vmem>>, vector<16x128xf32>
      tpu.vector_store %arg31[%c0_107, %c0_108], %215 {strides = array<i32>} : memref<16x128xf32, #tpu.memory_space<vmem>>, vector<16x128xf32>,
      %c0_109 = arith.constant 0 : index
      %c0_110 = arith.constant 0 : index
      %217 = vector.load %arg10[%c0_109, %c0_110] : memref<48x3xf32, #tpu.memory_space<vmem>>, vector<48x3xf32>
      %218 = arith.mulf %217, %217 : vector<48x3xf32>
      %cst_111 = arith.constant dense<0.000000e+00> : vector<48xf32>
      %219 = vector.multi_reduction <add>, %218, %cst_111 [1] : vector<48x3xf32> to vector<48xf32>
      %220 = vector.shape_cast %219 : vector<48xf32> to vector<48x1xf32>
      %221 = math.sqrt %220 : vector<48x1xf32>
      %222 = tpu.reciprocal %221 {approx = true} : vector<48x1xf32> -> vector<48x1xf32>
      %cst_112 = arith.constant -7.500000e-01 : f32
      %223 = vector.broadcast %cst_112 : f32 to vector<48x1xf32>
      %224 = arith.mulf %223, %222 : vector<48x1xf32>
      %c0_113 = arith.constant 0 : index
      %c0_114 = arith.constant 0 : index
      %225 = vector.load %arg11[%c0_113, %c0_114] : memref<1x128xf32, #tpu.memory_space<vmem>>, vector<1x128xf32>
      %226 = vector.broadcast %224 : vector<48x1xf32> to vector<48x128xf32>
      %227 = vector.broadcast %225 : vector<1x128xf32> to vector<48x128xf32>
      %228 = arith.subf %226, %227 : vector<48x128xf32>
      %229 = arith.mulf %228, %228 : vector<48x128xf32>
      %cst_115 = arith.constant -3.175000e+01 : f32
      %230 = vector.broadcast %cst_115 : f32 to vector<48x128xf32>
      %231 = arith.mulf %230, %229 : vector<48x128xf32>
      %232 = math.exp %231 : vector<48x128xf32>
      %233 = arith.truncf %232 : vector<48x128xf32> to vector<48x128xbf16>
      %c0_116 = arith.constant 0 : index
      %c0_117 = arith.constant 0 : index
      %234 = vector.load %arg18[%c0_116, %c0_117] : memref<128x128xbf16, #tpu.memory_space<vmem>>, vector<128x128xbf16>
      %cst_118 = arith.constant dense<0.000000e+00> : vector<48x128xf32>
      %235 = tpu.matmul %233, %234, %cst_118 {dimension_numbers = #tpu.dot_dimension_numbers<[1], [0], [0], [1], [0, 0, 1, 1], [], []>} : vector<48x128xbf16>, vector<128x128xbf16>, vector<48x128xf32> -> vector<48x128xf32>
      %c0_119 = arith.constant 0 : index
      %c0_120 = arith.constant 0 : index
      %236 = vector.load %arg19[%c0_119, %c0_120] : memref<1x128xf32, #tpu.memory_space<vmem>>, vector<1x128xf32>
      %237 = vector.broadcast %236 : vector<1x128xf32> to vector<48x128xf32>
      %238 = arith.addf %235, %237 : vector<48x128xf32>
      %cst_121 = arith.constant 0.000000e+00 : f32
      %239 = vector.broadcast %cst_121 : f32 to vector<48x128xf32>
      %240 = arith.maximumf %238, %239 : vector<48x128xf32>
      %241 = math.absf %238 : vector<48x128xf32>
      %cst_122 = arith.constant 0.000000e+00 : f32
      %242 = vector.broadcast %cst_122 : f32 to vector<48x128xf32>
      %243 = arith.subf %242, %241 : vector<48x128xf32>
      %244 = math.exp %243 : vector<48x128xf32>
      %245 = math.log1p %244 : vector<48x128xf32>
      %246 = arith.addf %240, %245 : vector<48x128xf32>
      %247 = arith.truncf %246 : vector<48x128xf32> to vector<48x128xbf16>
      %c0_123 = arith.constant 0 : index
      %c0_124 = arith.constant 0 : index
      %248 = vector.load %arg32[%c0_123, %c0_124] : memref<48x128xbf16, #tpu.memory_space<vmem>>, vector<48x128xbf16>
      tpu.vector_store %arg32[%c0_123, %c0_124], %247 {strides = array<i32>} : memref<48x128xbf16, #tpu.memory_space<vmem>>, vector<48x128xbf16>,
    } else {
    }
    %c0 = arith.constant 0 : index
    %c0_1 = arith.constant 0 : index
    %3 = vector.load %arg31[%c0, %c0_1] : memref<16x128xf32, #tpu.memory_space<vmem>>, vector<16x128xf32>
    %4 = arith.truncf %3 : vector<16x128xf32> to vector<16x128xbf16>
    %c0_2 = arith.constant 0 : index
    %c0_3 = arith.constant 0 : index
    %5 = vector.load %arg32[%c0_2, %c0_3] : memref<48x128xbf16, #tpu.memory_space<vmem>>, vector<48x128xbf16>
    %c0_4 = arith.constant 0 : index
    %c0_5 = arith.constant 0 : index
    %c0_6 = arith.constant 0 : index
    %6 = vector.load %arg23[%c0_4, %c0_5, %c0_6] : memref<1x2x384xf32, #tpu.memory_space<vmem>>, vector<1x2x384xf32>
    %7 = vector.shape_cast %6 : vector<1x2x384xf32> to vector<2x384xf32>
    %c0_7 = arith.constant 0 : index
    %c0_8 = arith.constant 0 : index
    %c0_9 = arith.constant 0 : index
    %8 = vector.load %arg24[%c0_7, %c0_8, %c0_9] : memref<1x4x128xf32, #tpu.memory_space<vmem>>, vector<1x4x128xf32>
    %9 = vector.shape_cast %8 : vector<1x4x128xf32> to vector<4x128xf32>
    %c0_10 = arith.constant 0 : index
    %c0_11 = arith.constant 0 : index
    %c0_12 = arith.constant 0 : index
    %10 = vector.load %arg20[%c0_10, %c0_11, %c0_12] : memref<1x128x384xbf16, #tpu.memory_space<vmem>>, vector<1x128x384xbf16>
    %11 = vector.shape_cast %10 : vector<1x128x384xbf16> to vector<128x384xbf16>
    %cst = arith.constant dense<0.000000e+00> : vector<16x384xf32>
    %12 = tpu.matmul %4, %11, %cst {dimension_numbers = #tpu.dot_dimension_numbers<[1], [0], [0], [1], [0, 0, 1, 1], [], []>} : vector<16x128xbf16>, vector<128x384xbf16>, vector<16x384xf32> -> vector<16x384xf32>
    %13 = vector.extract_strided_slice %7 {offsets = [0, 0], sizes = [1, 384], strides = [1, 1]} : vector<2x384xf32> to vector<1x384xf32>
    %14 = vector.broadcast %13 : vector<1x384xf32> to vector<16x384xf32>
    %15 = arith.addf %12, %14 : vector<16x384xf32>
    %16 = arith.truncf %15 : vector<16x384xf32> to vector<16x384xbf16>
    %c0_13 = arith.constant 0 : index
    %c0_14 = arith.constant 0 : index
    %c0_15 = arith.constant 0 : index
    %c0_16 = arith.constant 0 : index
    %17 = vector.load %arg22[%c0_13, %c0_14, %c0_15, %c0_16] : memref<1x8x128x128xbf16, #tpu.memory_space<vmem>>, vector<1x1x128x128xbf16>
    %18 = vector.shape_cast %17 : vector<1x1x128x128xbf16> to vector<128x128xbf16>
    %cst_17 = arith.constant dense<0.000000e+00> : vector<48x128xf32>
    %19 = tpu.matmul %5, %18, %cst_17 {dimension_numbers = #tpu.dot_dimension_numbers<[1], [0], [0], [1], [0, 0, 1, 1], [], []>} : vector<48x128xbf16>, vector<128x128xbf16>, vector<48x128xf32> -> vector<48x128xf32>
    %20 = vector.extract_strided_slice %9 {offsets = [0, 0], sizes = [1, 128], strides = [1, 1]} : vector<4x128xf32> to vector<1x128xf32>
    %21 = vector.broadcast %20 : vector<1x128xf32> to vector<48x128xf32>
    %22 = arith.addf %19, %21 : vector<48x128xf32>
    %23 = arith.truncf %22 : vector<48x128xf32> to vector<48x128xbf16>
    %c0_18 = arith.constant 0 : index
    %c0_19 = arith.constant 0 : index
    %c0_20 = arith.constant 0 : index
    %24 = vector.load %arg21[%c0_18, %c0_19, %c0_20] : memref<1x128x256xbf16, #tpu.memory_space<vmem>>, vector<1x128x256xbf16>
    %25 = vector.shape_cast %24 : vector<1x128x256xbf16> to vector<128x256xbf16>
    %cst_21 = arith.constant dense<0.000000e+00> : vector<48x256xf32>
    %26 = tpu.matmul %23, %25, %cst_21 {dimension_numbers = #tpu.dot_dimension_numbers<[1], [0], [0], [1], [0, 0, 1, 1], [], []>} : vector<48x128xbf16>, vector<128x256xbf16>, vector<48x256xf32> -> vector<48x256xf32>
    %27 = vector.extract_strided_slice %7 {offsets = [1, 0], sizes = [1, 256], strides = [1, 1]} : vector<2x384xf32> to vector<1x256xf32>
    %28 = vector.broadcast %27 : vector<1x256xf32> to vector<48x256xf32>
    %29 = arith.addf %26, %28 : vector<48x256xf32>
    %c0_22 = arith.constant 0 : index
    %c0_23 = arith.constant 0 : index
    %30 = vector.load %arg5[%c0_22, %c0_23] : memref<48x1xi32, #tpu.memory_space<vmem>>, vector<48x1xi32>
    %31 = tpu.iota {dimensions = array<i32: 1>} : vector<48x16xi32>
    %32 = vector.broadcast %30 : vector<48x1xi32> to vector<48x16xi32>
    %33 = arith.cmpi eq, %32, %31 : vector<48x16xi32>
    %34 = arith.extui %33 : vector<48x16xi1> to vector<48x16xi32>
    %35 = arith.sitofp %34 : vector<48x16xi32> to vector<48x16xf32>
    %36 = arith.truncf %35 : vector<48x16xf32> to vector<48x16xbf16>
    %c0_24 = arith.constant 0 : index
    %c0_25 = arith.constant 0 : index
    %37 = vector.load %arg4[%c0_24, %c0_25] : memref<48x1xi32, #tpu.memory_space<vmem>>, vector<48x1xi32>
    %38 = tpu.iota {dimensions = array<i32: 1>} : vector<48x16xi32>
    %39 = vector.broadcast %37 : vector<48x1xi32> to vector<48x16xi32>
    %40 = arith.cmpi eq, %39, %38 : vector<48x16xi32>
    %41 = arith.extui %40 : vector<48x16xi1> to vector<48x16xi32>
    %42 = arith.sitofp %41 : vector<48x16xi32> to vector<48x16xf32>
    %43 = arith.truncf %42 : vector<48x16xf32> to vector<48x16xbf16>
    %cst_26 = arith.constant dense<0.000000e+00> : vector<48x384xf32>
    %44 = tpu.matmul %36, %16, %cst_26 {dimension_numbers = #tpu.dot_dimension_numbers<[1], [0], [0], [1], [0, 0, 1, 1], [], []>} : vector<48x16xbf16>, vector<16x384xbf16>, vector<48x384xf32> -> vector<48x384xf32>
    %45 = vector.extract_strided_slice %16 {offsets = [0, 128], sizes = [16, 256], strides = [1, 1]} : vector<16x384xbf16> to vector<16x256xbf16>
    %cst_27 = arith.constant dense<0.000000e+00> : vector<48x256xf32>
    %46 = tpu.matmul %43, %45, %cst_27 {dimension_numbers = #tpu.dot_dimension_numbers<[1], [0], [0], [1], [0, 0, 1, 1], [], []>} : vector<48x16xbf16>, vector<16x256xbf16>, vector<48x256xf32> -> vector<48x256xf32>
    %47 = vector.extract_strided_slice %44 {offsets = [0, 128], sizes = [48, 128], strides = [1, 1]} : vector<48x384xf32> to vector<48x128xf32>
    %48 = arith.truncf %47 : vector<48x128xf32> to vector<48x128xbf16>
    %c0_28 = arith.constant 0 : index
    %c4 = arith.constant 4 : index
    %c0_29 = arith.constant 0 : index
    %c0_30 = arith.constant 0 : index
    %49 = vector.load %arg22[%c0_28, %c4, %c0_29, %c0_30] : memref<1x8x128x128xbf16, #tpu.memory_space<vmem>>, vector<1x1x128x128xbf16>
    %50 = vector.shape_cast %49 : vector<1x1x128x128xbf16> to vector<128x128xbf16>
    %cst_31 = arith.constant dense<0.000000e+00> : vector<48x128xf32>
    %51 = tpu.matmul %48, %50, %cst_31 {dimension_numbers = #tpu.dot_dimension_numbers<[1], [0], [0], [1], [0, 0, 1, 1], [], []>} : vector<48x128xbf16>, vector<128x128xbf16>, vector<48x128xf32> -> vector<48x128xf32>
    %52 = vector.extract_strided_slice %46 {offsets = [0, 0], sizes = [48, 128], strides = [1, 1]} : vector<48x256xf32> to vector<48x128xf32>
    %53 = arith.truncf %52 : vector<48x128xf32> to vector<48x128xbf16>
    %c0_32 = arith.constant 0 : index
    %c5 = arith.constant 5 : index
    %c0_33 = arith.constant 0 : index
    %c0_34 = arith.constant 0 : index
    %54 = vector.load %arg22[%c0_32, %c5, %c0_33, %c0_34] : memref<1x8x128x128xbf16, #tpu.memory_space<vmem>>, vector<1x1x128x128xbf16>
    %55 = vector.shape_cast %54 : vector<1x1x128x128xbf16> to vector<128x128xbf16>
    %cst_35 = arith.constant dense<0.000000e+00> : vector<48x128xf32>
    %56 = tpu.matmul %53, %55, %cst_35 {dimension_numbers = #tpu.dot_dimension_numbers<[1], [0], [0], [1], [0, 0, 1, 1], [], []>} : vector<48x128xbf16>, vector<128x128xbf16>, vector<48x128xf32> -> vector<48x128xf32>
    %57 = arith.addf %51, %56 : vector<48x128xf32>
    %58 = vector.extract_strided_slice %29 {offsets = [0, 0], sizes = [48, 128], strides = [1, 1]} : vector<48x256xf32> to vector<48x128xf32>
    %59 = arith.addf %57, %58 : vector<48x128xf32>
    %cst_36 = arith.constant 0.000000e+00 : f32
    %60 = vector.broadcast %cst_36 : f32 to vector<48x128xf32>
    %61 = arith.subf %60, %59 : vector<48x128xf32>
    %62 = math.exp %61 : vector<48x128xf32>
    %cst_37 = arith.constant 1.000000e+00 : f32
    %63 = vector.broadcast %cst_37 : f32 to vector<48x128xf32>
    %64 = arith.addf %63, %62 : vector<48x128xf32>
    %65 = tpu.reciprocal %64 {approx = true} : vector<48x128xf32> -> vector<48x128xf32>
    %66 = arith.mulf %59, %65 : vector<48x128xf32>
    %67 = arith.truncf %66 : vector<48x128xf32> to vector<48x128xbf16>
    %c0_38 = arith.constant 0 : index
    %c2 = arith.constant 2 : index
    %c0_39 = arith.constant 0 : index
    %c0_40 = arith.constant 0 : index
    %68 = vector.load %arg22[%c0_38, %c2, %c0_39, %c0_40] : memref<1x8x128x128xbf16, #tpu.memory_space<vmem>>, vector<1x1x128x128xbf16>
    %69 = vector.shape_cast %68 : vector<1x1x128x128xbf16> to vector<128x128xbf16>
    %cst_41 = arith.constant dense<0.000000e+00> : vector<48x128xf32>
    %70 = tpu.matmul %67, %69, %cst_41 {dimension_numbers = #tpu.dot_dimension_numbers<[1], [0], [0], [1], [0, 0, 1, 1], [], []>} : vector<48x128xbf16>, vector<128x128xbf16>, vector<48x128xf32> -> vector<48x128xf32>
    %71 = vector.extract_strided_slice %9 {offsets = [2, 0], sizes = [1, 128], strides = [1, 1]} : vector<4x128xf32> to vector<1x128xf32>
    %72 = vector.broadcast %71 : vector<1x128xf32> to vector<48x128xf32>
    %73 = arith.addf %70, %72 : vector<48x128xf32>
    %74 = vector.extract_strided_slice %44 {offsets = [0, 0], sizes = [48, 128], strides = [1, 1]} : vector<48x384xf32> to vector<48x128xf32>
    %75 = arith.mulf %74, %73 : vector<48x128xf32>
    %cst_42 = arith.constant 0.0883883461 : f32
    %76 = vector.broadcast %cst_42 : f32 to vector<48x128xf32>
    %77 = arith.mulf %75, %76 : vector<48x128xf32>
    %78 = vector.extract_strided_slice %44 {offsets = [0, 256], sizes = [48, 128], strides = [1, 1]} : vector<48x384xf32> to vector<48x128xf32>
    %79 = arith.truncf %78 : vector<48x128xf32> to vector<48x128xbf16>
    %c0_43 = arith.constant 0 : index
    %c6 = arith.constant 6 : index
    %c0_44 = arith.constant 0 : index
    %c0_45 = arith.constant 0 : index
    %80 = vector.load %arg22[%c0_43, %c6, %c0_44, %c0_45] : memref<1x8x128x128xbf16, #tpu.memory_space<vmem>>, vector<1x1x128x128xbf16>
    %81 = vector.shape_cast %80 : vector<1x1x128x128xbf16> to vector<128x128xbf16>
    %cst_46 = arith.constant dense<0.000000e+00> : vector<48x128xf32>
    %82 = tpu.matmul %79, %81, %cst_46 {dimension_numbers = #tpu.dot_dimension_numbers<[1], [0], [0], [1], [0, 0, 1, 1], [], []>} : vector<48x128xbf16>, vector<128x128xbf16>, vector<48x128xf32> -> vector<48x128xf32>
    %83 = vector.extract_strided_slice %46 {offsets = [0, 128], sizes = [48, 128], strides = [1, 1]} : vector<48x256xf32> to vector<48x128xf32>
    %84 = arith.truncf %83 : vector<48x128xf32> to vector<48x128xbf16>
    %c0_47 = arith.constant 0 : index
    %c7 = arith.constant 7 : index
    %c0_48 = arith.constant 0 : index
    %c0_49 = arith.constant 0 : index
    %85 = vector.load %arg22[%c0_47, %c7, %c0_48, %c0_49] : memref<1x8x128x128xbf16, #tpu.memory_space<vmem>>, vector<1x1x128x128xbf16>
    %86 = vector.shape_cast %85 : vector<1x1x128x128xbf16> to vector<128x128xbf16>
    %cst_50 = arith.constant dense<0.000000e+00> : vector<48x128xf32>
    %87 = tpu.matmul %84, %86, %cst_50 {dimension_numbers = #tpu.dot_dimension_numbers<[1], [0], [0], [1], [0, 0, 1, 1], [], []>} : vector<48x128xbf16>, vector<128x128xbf16>, vector<48x128xf32> -> vector<48x128xf32>
    %88 = arith.addf %82, %87 : vector<48x128xf32>
    %89 = vector.extract_strided_slice %29 {offsets = [0, 128], sizes = [48, 128], strides = [1, 1]} : vector<48x256xf32> to vector<48x128xf32>
    %90 = arith.addf %88, %89 : vector<48x128xf32>
    %cst_51 = arith.constant 0.000000e+00 : f32
    %91 = vector.broadcast %cst_51 : f32 to vector<48x128xf32>
    %92 = arith.subf %91, %90 : vector<48x128xf32>
    %93 = math.exp %92 : vector<48x128xf32>
    %cst_52 = arith.constant 1.000000e+00 : f32
    %94 = vector.broadcast %cst_52 : f32 to vector<48x128xf32>
    %95 = arith.addf %94, %93 : vector<48x128xf32>
    %96 = tpu.reciprocal %95 {approx = true} : vector<48x128xf32> -> vector<48x128xf32>
    %97 = arith.mulf %90, %96 : vector<48x128xf32>
    %98 = arith.truncf %97 : vector<48x128xf32> to vector<48x128xbf16>
    %c0_53 = arith.constant 0 : index
    %c3 = arith.constant 3 : index
    %c0_54 = arith.constant 0 : index
    %c0_55 = arith.constant 0 : index
    %99 = vector.load %arg22[%c0_53, %c3, %c0_54, %c0_55] : memref<1x8x128x128xbf16, #tpu.memory_space<vmem>>, vector<1x1x128x128xbf16>
    %100 = vector.shape_cast %99 : vector<1x1x128x128xbf16> to vector<128x128xbf16>
    %cst_56 = arith.constant dense<0.000000e+00> : vector<48x128xf32>
    %101 = tpu.matmul %98, %100, %cst_56 {dimension_numbers = #tpu.dot_dimension_numbers<[1], [0], [0], [1], [0, 0, 1, 1], [], []>} : vector<48x128xbf16>, vector<128x128xbf16>, vector<48x128xf32> -> vector<48x128xf32>
    %102 = vector.extract_strided_slice %9 {offsets = [3, 0], sizes = [1, 128], strides = [1, 1]} : vector<4x128xf32> to vector<1x128xf32>
    %103 = vector.broadcast %102 : vector<1x128xf32> to vector<48x128xf32>
    %104 = arith.addf %101, %103 : vector<48x128xf32>
    %cst_57 = arith.constant dense<0.000000e+00> : vector<128xf32>
    %105 = vector.multi_reduction <add>, %77, %cst_57 [0] : vector<48x128xf32> to vector<128xf32>
    %106 = vector.shape_cast %105 : vector<128xf32> to vector<1x128xf32>
    %cst_58 = arith.constant 4.800000e+01 : f32
    %107 = vector.broadcast %cst_58 : f32 to vector<1x128xf32>
    %108 = arith.divf %106, %107 : vector<1x128xf32>
    %109 = vector.broadcast %108 : vector<1x128xf32> to vector<48x128xf32>
    %110 = arith.subf %77, %109 : vector<48x128xf32>
    %111 = arith.mulf %110, %110 : vector<48x128xf32>
    %cst_59 = arith.constant dense<0.000000e+00> : vector<128xf32>
    %112 = vector.multi_reduction <add>, %111, %cst_59 [0] : vector<48x128xf32> to vector<128xf32>
    %113 = vector.shape_cast %112 : vector<128xf32> to vector<1x128xf32>
    %cst_60 = arith.constant 4.800000e+01 : f32
    %114 = vector.broadcast %cst_60 : f32 to vector<1x128xf32>
    %115 = arith.divf %113, %114 : vector<1x128xf32>
    %116 = vector.broadcast %108 : vector<1x128xf32> to vector<48x128xf32>
    %117 = arith.subf %77, %116 : vector<48x128xf32>
    %cst_61 = arith.constant 9.99999974E-6 : f32
    %118 = vector.broadcast %cst_61 : f32 to vector<1x128xf32>
    %119 = arith.addf %115, %118 : vector<1x128xf32>
    %120 = math.rsqrt %119 : vector<1x128xf32>
    %121 = vector.broadcast %120 : vector<1x128xf32> to vector<48x128xf32>
    %122 = arith.mulf %117, %121 : vector<48x128xf32>
    %cst_62 = arith.constant 0.000000e+00 : f32
    %123 = vector.broadcast %cst_62 : f32 to vector<48x128xf32>
    %124 = arith.subf %123, %122 : vector<48x128xf32>
    %125 = math.exp %124 : vector<48x128xf32>
    %cst_63 = arith.constant 1.000000e+00 : f32
    %126 = vector.broadcast %cst_63 : f32 to vector<48x128xf32>
    %127 = arith.addf %126, %125 : vector<48x128xf32>
    %128 = tpu.reciprocal %127 {approx = true} : vector<48x128xf32> -> vector<48x128xf32>
    %129 = arith.mulf %104, %128 : vector<48x128xf32>
    %c0_64 = arith.constant 0 : index
    %c0_65 = arith.constant 0 : index
    %130 = vector.load %arg6[%c0_64, %c0_65] : memref<1x48xi32, #tpu.memory_space<vmem>>, vector<1x48xi32>
    %131 = tpu.iota {dimensions = array<i32: 0>} : vector<16x48xi32>
    %132 = vector.broadcast %130 : vector<1x48xi32> to vector<16x48xi32>
    %133 = arith.cmpi eq, %132, %131 : vector<16x48xi32>
    %134 = arith.extui %133 : vector<16x48xi1> to vector<16x48xi32>
    %135 = arith.sitofp %134 : vector<16x48xi32> to vector<16x48xf32>
    %136 = arith.truncf %135 : vector<16x48xf32> to vector<16x48xbf16>
    %137 = arith.truncf %129 : vector<48x128xf32> to vector<48x128xbf16>
    %cst_66 = arith.constant dense<0.000000e+00> : vector<16x128xf32>
    %138 = tpu.matmul %136, %137, %cst_66 {dimension_numbers = #tpu.dot_dimension_numbers<[1], [0], [0], [1], [0, 0, 1, 1], [], []>} : vector<16x48xbf16>, vector<48x128xbf16>, vector<16x128xf32> -> vector<16x128xf32>
    %139 = arith.truncf %138 : vector<16x128xf32> to vector<16x128xbf16>
    %c0_67 = arith.constant 0 : index
    %c1 = arith.constant 1 : index
    %c0_68 = arith.constant 0 : index
    %c0_69 = arith.constant 0 : index
    %140 = vector.load %arg22[%c0_67, %c1, %c0_68, %c0_69] : memref<1x8x128x128xbf16, #tpu.memory_space<vmem>>, vector<1x1x128x128xbf16>
    %141 = vector.shape_cast %140 : vector<1x1x128x128xbf16> to vector<128x128xbf16>
    %cst_70 = arith.constant dense<0.000000e+00> : vector<16x128xf32>
    %142 = tpu.matmul %139, %141, %cst_70 {dimension_numbers = #tpu.dot_dimension_numbers<[1], [0], [0], [1], [0, 0, 1, 1], [], []>} : vector<16x128xbf16>, vector<128x128xbf16>, vector<16x128xf32> -> vector<16x128xf32>
    %143 = vector.extract_strided_slice %9 {offsets = [1, 0], sizes = [1, 128], strides = [1, 1]} : vector<4x128xf32> to vector<1x128xf32>
    %144 = vector.broadcast %143 : vector<1x128xf32> to vector<16x128xf32>
    %145 = arith.addf %142, %144 : vector<16x128xf32>
    %cst_71 = arith.constant dense<0.000000e+00> : vector<128xf32>
    %146 = vector.multi_reduction <add>, %145, %cst_71 [0] : vector<16x128xf32> to vector<128xf32>
    %147 = vector.shape_cast %146 : vector<128xf32> to vector<1x128xf32>
    %cst_72 = arith.constant 1.600000e+01 : f32
    %148 = vector.broadcast %cst_72 : f32 to vector<1x128xf32>
    %149 = arith.divf %147, %148 : vector<1x128xf32>
    %150 = vector.broadcast %149 : vector<1x128xf32> to vector<16x128xf32>
    %151 = arith.subf %145, %150 : vector<16x128xf32>
    %152 = arith.mulf %151, %151 : vector<16x128xf32>
    %cst_73 = arith.constant dense<0.000000e+00> : vector<128xf32>
    %153 = vector.multi_reduction <add>, %152, %cst_73 [0] : vector<16x128xf32> to vector<128xf32>
    %154 = vector.shape_cast %153 : vector<128xf32> to vector<1x128xf32>
    %cst_74 = arith.constant 1.600000e+01 : f32
    %155 = vector.broadcast %cst_74 : f32 to vector<1x128xf32>
    %156 = arith.divf %154, %155 : vector<1x128xf32>
    %157 = vector.broadcast %149 : vector<1x128xf32> to vector<16x128xf32>
    %158 = arith.subf %145, %157 : vector<16x128xf32>
    %cst_75 = arith.constant 9.99999974E-6 : f32
    %159 = vector.broadcast %cst_75 : f32 to vector<1x128xf32>
    %160 = arith.addf %156, %159 : vector<1x128xf32>
    %161 = math.rsqrt %160 : vector<1x128xf32>
    %162 = vector.broadcast %161 : vector<1x128xf32> to vector<16x128xf32>
    %163 = arith.mulf %158, %162 : vector<16x128xf32>
    %164 = arith.addf %3, %163 : vector<16x128xf32>
    %cst_76 = arith.constant 0.000000e+00 : f32
    %165 = vector.broadcast %cst_76 : f32 to vector<16x128xf32>
    %166 = arith.maximumf %164, %165 : vector<16x128xf32>
    %167 = math.absf %164 : vector<16x128xf32>
    %cst_77 = arith.constant 0.000000e+00 : f32
    %168 = vector.broadcast %cst_77 : f32 to vector<16x128xf32>
    %169 = arith.subf %168, %167 : vector<16x128xf32>
    %170 = math.exp %169 : vector<16x128xf32>
    %171 = math.log1p %170 : vector<16x128xf32>
    %172 = arith.addf %166, %171 : vector<16x128xf32>
    %c0_78 = arith.constant 0 : index
    %c0_79 = arith.constant 0 : index
    %173 = vector.load %arg31[%c0_78, %c0_79] : memref<16x128xf32, #tpu.memory_space<vmem>>, vector<16x128xf32>
    tpu.vector_store %arg31[%c0_78, %c0_79], %172 {strides = array<i32>} : memref<16x128xf32, #tpu.memory_space<vmem>>, vector<16x128xf32>,
    %c2_i32 = arith.constant 2 : i32
    %174 = arith.cmpi eq, %arg0, %c2_i32 : i32
    %175 = arith.extui %174 : i1 to i32
    %c0_i32_80 = arith.constant 0 : i32
    %176 = arith.cmpi ne, %175, %c0_i32_80 : i32
    scf.if %176 {
      %177 = arith.truncf %172 : vector<16x128xf32> to vector<16x128xbf16>
      %c0_81 = arith.constant 0 : index
      %c0_82 = arith.constant 0 : index
      %178 = vector.load %arg25[%c0_81, %c0_82] : memref<128x256xbf16, #tpu.memory_space<vmem>>, vector<128x256xbf16>
      %cst_83 = arith.constant dense<0.000000e+00> : vector<16x256xf32>
      %179 = tpu.matmul %177, %178, %cst_83 {dimension_numbers = #tpu.dot_dimension_numbers<[1], [0], [0], [1], [0, 0, 1, 1], [], []>} : vector<16x128xbf16>, vector<128x256xbf16>, vector<16x256xf32> -> vector<16x256xf32>
      %c0_84 = arith.constant 0 : index
      %c0_85 = arith.constant 0 : index
      %180 = vector.load %arg26[%c0_84, %c0_85] : memref<1x256xf32, #tpu.memory_space<vmem>>, vector<1x256xf32>
      %181 = vector.broadcast %180 : vector<1x256xf32> to vector<16x256xf32>
      %182 = arith.addf %179, %181 : vector<16x256xf32>
      %c0_86 = arith.constant 0 : index
      %c0_87 = arith.constant 0 : index
      %183 = vector.load %arg29[%c0_86, %c0_87] : memref<16x256xf32, #tpu.memory_space<vmem>>, vector<16x256xf32>
      tpu.vector_store %arg29[%c0_86, %c0_87], %182 {strides = array<i32>} : memref<16x256xf32, #tpu.memory_space<vmem>>, vector<16x256xf32>,
      %c0_88 = arith.constant 0 : index
      %c0_89 = arith.constant 0 : index
      %184 = vector.load %arg3[%c0_88, %c0_89] : memref<1x16xi32, #tpu.memory_space<vmem>>, vector<1x16xi32>
      %185 = tpu.iota {dimensions = array<i32: 0>} : vector<2x16xi32>
      %186 = vector.broadcast %184 : vector<1x16xi32> to vector<2x16xi32>
      %187 = arith.cmpi eq, %186, %185 : vector<2x16xi32>
      %188 = arith.extui %187 : vector<2x16xi1> to vector<2x16xi32>
      %189 = arith.sitofp %188 : vector<2x16xi32> to vector<2x16xf32>
      %cst_90 = arith.constant dense<0.000000e+00> : vector<2xf32>
      %190 = vector.multi_reduction <add>, %189, %cst_90 [1] : vector<2x16xf32> to vector<2xf32>
      %191 = vector.shape_cast %190 : vector<2xf32> to vector<2x1xf32>
      %cst_91 = arith.constant 1.000000e+00 : f32
      %192 = vector.broadcast %cst_91 : f32 to vector<2x1xf32>
      %193 = arith.maximumf %191, %192 : vector<2x1xf32>
      %194 = arith.truncf %189 : vector<2x16xf32> to vector<2x16xbf16>
      %cst_92 = arith.constant dense<0.000000e+00> : vector<2x128xf32>
      %195 = tpu.matmul %194, %177, %cst_92 {dimension_numbers = #tpu.dot_dimension_numbers<[1], [0], [0], [1], [0, 0, 1, 1], [], []>} : vector<2x16xbf16>, vector<16x128xbf16>, vector<2x128xf32> -> vector<2x128xf32>
      %196 = tpu.reciprocal %193 {approx = true} : vector<2x1xf32> -> vector<2x1xf32>
      %197 = vector.broadcast %196 : vector<2x1xf32> to vector<2x128xf32>
      %198 = arith.mulf %195, %197 : vector<2x128xf32>
      %199 = arith.truncf %198 : vector<2x128xf32> to vector<2x128xbf16>
      %c0_93 = arith.constant 0 : index
      %c0_94 = arith.constant 0 : index
      %200 = vector.load %arg27[%c0_93, %c0_94] : memref<128x128xbf16, #tpu.memory_space<vmem>>, vector<128x128xbf16>
      %cst_95 = arith.constant dense<0.000000e+00> : vector<2x128xf32>
      %201 = tpu.matmul %199, %200, %cst_95 {dimension_numbers = #tpu.dot_dimension_numbers<[1], [0], [0], [1], [0, 0, 1, 1], [], []>} : vector<2x128xbf16>, vector<128x128xbf16>, vector<2x128xf32> -> vector<2x128xf32>
      %c0_96 = arith.constant 0 : index
      %c0_97 = arith.constant 0 : index
      %202 = vector.load %arg28[%c0_96, %c0_97] : memref<1x128xf32, #tpu.memory_space<vmem>>, vector<1x128xf32>
      %203 = vector.broadcast %202 : vector<1x128xf32> to vector<2x128xf32>
      %204 = arith.addf %201, %203 : vector<2x128xf32>
      %c0_98 = arith.constant 0 : index
      %c0_99 = arith.constant 0 : index
      %205 = vector.load %arg30[%c0_98, %c0_99] : memref<2x128xf32, #tpu.memory_space<vmem>>, vector<2x128xf32>
      tpu.vector_store %arg30[%c0_98, %c0_99], %204 {strides = array<i32>} : memref<2x128xf32, #tpu.memory_space<vmem>>, vector<2x128xf32>,
    } else {
    }
    return
  }
  func.func @transform_0(%arg0: i32) -> (i32, i32) {
    %c0_i32 = arith.constant 0 : i32
    %c0_i32_0 = arith.constant 0 : i32
    %c0_i32_1 = arith.constant 0 : i32
    return %c0_i32, %c0_i32_0 : i32, i32
  }
  func.func @transform_1(%arg0: i32) -> (i32, i32) {
    %c0_i32 = arith.constant 0 : i32
    %c0_i32_0 = arith.constant 0 : i32
    %c0_i32_1 = arith.constant 0 : i32
    return %c0_i32, %c0_i32_0 : i32, i32
  }
  func.func @transform_2(%arg0: i32) -> (i32, i32) {
    %c0_i32 = arith.constant 0 : i32
    %c0_i32_0 = arith.constant 0 : i32
    %c0_i32_1 = arith.constant 0 : i32
    return %c0_i32, %c0_i32_0 : i32, i32
  }
  func.func @transform_3(%arg0: i32) -> (i32, i32) {
    %c0_i32 = arith.constant 0 : i32
    %c0_i32_0 = arith.constant 0 : i32
    %c0_i32_1 = arith.constant 0 : i32
    return %c0_i32, %c0_i32_0 : i32, i32
  }
  func.func @transform_4(%arg0: i32) -> (i32, i32) {
    %c0_i32 = arith.constant 0 : i32
    %c0_i32_0 = arith.constant 0 : i32
    %c0_i32_1 = arith.constant 0 : i32
    return %c0_i32, %c0_i32_0 : i32, i32
  }
  func.func @transform_5(%arg0: i32) -> (i32, i32) {
    %c0_i32 = arith.constant 0 : i32
    %c0_i32_0 = arith.constant 0 : i32
    %c0_i32_1 = arith.constant 0 : i32
    return %c0_i32, %c0_i32_0 : i32, i32
  }
  func.func @transform_6(%arg0: i32) -> (i32, i32) {
    %c0_i32 = arith.constant 0 : i32
    %c0_i32_0 = arith.constant 0 : i32
    %c0_i32_1 = arith.constant 0 : i32
    return %c0_i32, %c0_i32_0 : i32, i32
  }
  func.func @transform_7(%arg0: i32) -> (i32, i32) {
    %c0_i32 = arith.constant 0 : i32
    %c0_i32_0 = arith.constant 0 : i32
    %c0_i32_1 = arith.constant 0 : i32
    return %c0_i32, %c0_i32_0 : i32, i32
  }
  func.func @transform_8(%arg0: i32) -> (i32, i32) {
    %c0_i32 = arith.constant 0 : i32
    %c0_i32_0 = arith.constant 0 : i32
    %c0_i32_1 = arith.constant 0 : i32
    return %c0_i32, %c0_i32_0 : i32, i32
  }
  func.func @transform_9(%arg0: i32) -> (i32, i32) {
    %c0_i32 = arith.constant 0 : i32
    %c0_i32_0 = arith.constant 0 : i32
    %c0_i32_1 = arith.constant 0 : i32
    return %c0_i32, %c0_i32_0 : i32, i32
  }
  func.func @transform_10(%arg0: i32) -> (i32, i32) {
    %c0_i32 = arith.constant 0 : i32
    %c0_i32_0 = arith.constant 0 : i32
    %c0_i32_1 = arith.constant 0 : i32
    return %c0_i32, %c0_i32_0 : i32, i32
  }
  func.func @transform_11(%arg0: i32) -> (i32, i32) {
    %c0_i32 = arith.constant 0 : i32
    %c0_i32_0 = arith.constant 0 : i32
    %c0_i32_1 = arith.constant 0 : i32
    return %c0_i32, %c0_i32_0 : i32, i32
  }
  func.func @transform_12(%arg0: i32) -> (i32, i32) {
    %c0_i32 = arith.constant 0 : i32
    %c0_i32_0 = arith.constant 0 : i32
    %c0_i32_1 = arith.constant 0 : i32
    return %c0_i32, %c0_i32_0 : i32, i32
  }
  func.func @transform_13(%arg0: i32) -> (i32, i32) {
    %c0_i32 = arith.constant 0 : i32
    %c0_i32_0 = arith.constant 0 : i32
    %c0_i32_1 = arith.constant 0 : i32
    return %c0_i32, %c0_i32_0 : i32, i32
  }
  func.func @transform_14(%arg0: i32) -> (i32, i32) {
    %c0_i32 = arith.constant 0 : i32
    %c0_i32_0 = arith.constant 0 : i32
    %c0_i32_1 = arith.constant 0 : i32
    return %c0_i32, %c0_i32_0 : i32, i32
  }
  func.func @transform_15(%arg0: i32) -> (i32, i32) {
    %c0_i32 = arith.constant 0 : i32
    %c0_i32_0 = arith.constant 0 : i32
    %c0_i32_1 = arith.constant 0 : i32
    return %c0_i32, %c0_i32_0 : i32, i32
  }
  func.func @transform_16(%arg0: i32) -> (i32, i32) {
    %c0_i32 = arith.constant 0 : i32
    %c0_i32_0 = arith.constant 0 : i32
    %c0_i32_1 = arith.constant 0 : i32
    return %c0_i32, %c0_i32_0 : i32, i32
  }
  func.func @transform_17(%arg0: i32) -> (i32, i32) {
    %c0_i32 = arith.constant 0 : i32
    %c0_i32_0 = arith.constant 0 : i32
    %c0_i32_1 = arith.constant 0 : i32
    return %c0_i32, %c0_i32_0 : i32, i32
  }
  func.func @transform_18(%arg0: i32) -> (i32, i32) {
    %c0_i32 = arith.constant 0 : i32
    %c0_i32_0 = arith.constant 0 : i32
    %c0_i32_1 = arith.constant 0 : i32
    return %c0_i32, %c0_i32_0 : i32, i32
  }
  func.func @transform_19(%arg0: i32) -> (i32, i32, i32) {
    %c0_i32 = arith.constant 0 : i32
    %c0_i32_0 = arith.constant 0 : i32
    %c0_i32_1 = arith.constant 0 : i32
    return %arg0, %c0_i32, %c0_i32_0 : i32, i32, i32
  }
  func.func @transform_20(%arg0: i32) -> (i32, i32, i32) {
    %c0_i32 = arith.constant 0 : i32
    %c0_i32_0 = arith.constant 0 : i32
    %c0_i32_1 = arith.constant 0 : i32
    return %arg0, %c0_i32, %c0_i32_0 : i32, i32, i32
  }
  func.func @transform_21(%arg0: i32) -> (i32, i32, i32, i32) {
    %c0_i32 = arith.constant 0 : i32
    %c0_i32_0 = arith.constant 0 : i32
    %c0_i32_1 = arith.constant 0 : i32
    %c0_i32_2 = arith.constant 0 : i32
    return %arg0, %c0_i32, %c0_i32_0, %c0_i32_1 : i32, i32, i32, i32
  }
  func.func @transform_22(%arg0: i32) -> (i32, i32, i32) {
    %c0_i32 = arith.constant 0 : i32
    %c0_i32_0 = arith.constant 0 : i32
    %c0_i32_1 = arith.constant 0 : i32
    return %arg0, %c0_i32, %c0_i32_0 : i32, i32, i32
  }
  func.func @transform_23(%arg0: i32) -> (i32, i32, i32) {
    %c0_i32 = arith.constant 0 : i32
    %c0_i32_0 = arith.constant 0 : i32
    %c0_i32_1 = arith.constant 0 : i32
    return %arg0, %c0_i32, %c0_i32_0 : i32, i32, i32
  }
  func.func @transform_24(%arg0: i32) -> (i32, i32) {
    %c0_i32 = arith.constant 0 : i32
    %c0_i32_0 = arith.constant 0 : i32
    %c0_i32_1 = arith.constant 0 : i32
    return %c0_i32, %c0_i32_0 : i32, i32
  }
  func.func @transform_25(%arg0: i32) -> (i32, i32) {
    %c0_i32 = arith.constant 0 : i32
    %c0_i32_0 = arith.constant 0 : i32
    %c0_i32_1 = arith.constant 0 : i32
    return %c0_i32, %c0_i32_0 : i32, i32
  }
  func.func @transform_26(%arg0: i32) -> (i32, i32) {
    %c0_i32 = arith.constant 0 : i32
    %c0_i32_0 = arith.constant 0 : i32
    %c0_i32_1 = arith.constant 0 : i32
    return %c0_i32, %c0_i32_0 : i32, i32
  }
  func.func @transform_27(%arg0: i32) -> (i32, i32) {
    %c0_i32 = arith.constant 0 : i32
    %c0_i32_0 = arith.constant 0 : i32
    %c0_i32_1 = arith.constant 0 : i32
    return %c0_i32, %c0_i32_0 : i32, i32
  }
  func.func @transform_28(%arg0: i32) -> (i32, i32) {
    %c0_i32 = arith.constant 0 : i32
    %c0_i32_0 = arith.constant 0 : i32
    %c0_i32_1 = arith.constant 0 : i32
    return %c0_i32, %c0_i32_0 : i32, i32
  }
  func.func @transform_29(%arg0: i32) -> (i32, i32) {
    %c0_i32 = arith.constant 0 : i32
    %c0_i32_0 = arith.constant 0 : i32
    %c0_i32_1 = arith.constant 0 : i32
    return %c0_i32, %c0_i32_0 : i32, i32
  }
}

</mosaic_0001>

<llo_original>
// kernel: joint_diffusion_transformer_forward.1
$region0: #{joint_diffusion_transformer_forward.1}
  #allocation0 [shape = 'u32[]', space=smem, size = 0x4, offset = 0x4, fixed_abs, tag = 'smem constant byte address 0x4 - core index']
  #allocation1 [shape = 'u32[144,128]{1,0:T(1,128)}', space=vmem, size = 0x12000, scoped, tag = 'internal scratch']
  #allocation2 [shape = 'f32[16,128]{1,0:T(8,128)}', space=vmem, size = 0x2000, scoped, tag = 'scratch operand']
  #allocation3 [shape = 'bf16[48,128]{1,0:T(16,128)(2,1)}', space=vmem, size = 0x3000, scoped, tag = 'scratch operand']
  %s0 = inlined_call_operand.smem [shape: u32[30], index: -1, kind: input, shape index: {}]
  %s1 = sld [smem:[%s0]]
  %s2 = scalar_lea.smem %s0, 1
  %s3 = sld [smem:[%s2]]
  %s4 = scalar_lea.smem %s0, 2
  %s5 = sld [smem:[%s4]]
  %s6 = scalar_lea.smem %s0, 3
  %s7 = sld [smem:[%s6]]
  %s8 = scalar_lea.smem %s0, 4
  %s9 = sld [smem:[%s8]]
  %s10 = scalar_lea.smem %s0, 5
  %s11 = sld [smem:[%s10]]
  %s12 = scalar_lea.smem %s0, 6
  %s13 = sld [smem:[%s12]]
  %s14 = scalar_lea.smem %s0, 7
  %s15 = sld [smem:[%s14]]
  %s16 = scalar_lea.smem %s0, 8
  %s17 = sld [smem:[%s16]]
  %s18 = scalar_lea.smem %s0, 9
  %s19 = sld [smem:[%s18]]
  %s20 = scalar_lea.smem %s0, 10
  %s21 = sld [smem:[%s20]]
  %s22 = scalar_lea.smem %s0, 11
  %s23 = sld [smem:[%s22]]
  %s24 = scalar_lea.smem %s0, 12
  %s25 = sld [smem:[%s24]]
  %s26 = scalar_lea.smem %s0, 13
  %s27 = sld [smem:[%s26]]
  %s28 = scalar_lea.smem %s0, 14
  %s29 = sld [smem:[%s28]]
  %s30 = scalar_lea.smem %s0, 15
  %s31 = sld [smem:[%s30]]
  %s32 = scalar_lea.smem %s0, 16
  %s33 = sld [smem:[%s32]]
  %s34 = scalar_lea.smem %s0, 17
  %s35 = sld [smem:[%s34]]
  %s36 = scalar_lea.smem %s0, 18
  %s37 = sld [smem:[%s36]]
  %s38 = scalar_lea.smem %s0, 19
  %s39 = sld [smem:[%s38]]
  %s40 = scalar_lea.smem %s0, 20
  %s41 = sld [smem:[%s40]]
  %s42 = scalar_lea.smem %s0, 21
  %s43 = sld [smem:[%s42]]
  %s44 = scalar_lea.smem %s0, 22
  %s45 = sld [smem:[%s44]]
  %s46 = scalar_lea.smem %s0, 23
  %s47 = sld [smem:[%s46]]
  %s48 = scalar_lea.smem %s0, 24
  %s49 = sld [smem:[%s48]]
  %s50 = scalar_lea.smem %s0, 25
  %s51 = sld [smem:[%s50]]
  %s52 = scalar_lea.smem %s0, 26
  %s53 = sld [smem:[%s52]]
  %s54 = scalar_lea.smem %s0, 27
  %s55 = sld [smem:[%s54]]
  %s56 = scalar_lea.smem %s0, 28
  %s57 = sld [smem:[%s56]]
  %s58 = scalar_lea.smem %s0, 29
  %s59 = sld [smem:[%s58]]
  %60 = xla_tuple %s57, %s59
  %s61 = sld [smem:[#allocation0]]
  $region213: #{joint_diffusion_transformer_forward.1} parent=0
    _
  %s63 = ssub.s32 1, %s61
  %s64 = scalar_select 0, %s63, %s61
  $region1: #{joint_diffusion_transformer_forward.1} parent=0
    #allocation4 [shape = 'u8[512]{0}', space=vmem, size = 0x400, scoped, tag = 'input window, operand 10, single buffered']
    #allocation5 [shape = 's32[2]{0}', space=sflag, size = 0x8, scoped, tag = 'scoped memory for joint_diffusion_transformer_forward.1']
    #allocation6 [shape = 'u8[1024]{0}', space=vmem, size = 0x400, scoped, tag = 'input window, operand 11, single buffered']
    #allocation7 [shape = 's32[1]{0}', space=sflag, size = 0x4, scoped, tag = 'scoped memory for joint_diffusion_transformer_forward.1']
    #allocation8 [shape = 'u8[512]{0}', space=vmem, size = 0x400, scoped, tag = 'input window, operand 12, single buffered']
    #allocation9 [shape = 'u8[4096]{0}', space=vmem, size = 0x1000, scoped, tag = 'input window, operand 13, single buffered']
    #allocation10 [shape = 's32[1]{0}', space=sflag, size = 0x4, scoped, tag = 'scoped memory for joint_diffusion_transformer_forward.1']
    #allocation11 [shape = 'u8[512]{0}', space=vmem, size = 0x400, scoped, tag = 'input window, operand 14, single buffered']
    #allocation12 [shape = 'u8[512]{0}', space=vmem, size = 0x400, scoped, tag = 'input window, operand 16, single buffered']
    #allocation13 [shape = 's32[1]{0}', space=sflag, size = 0x4, scoped, tag = 'scoped memory for joint_diffusion_transformer_forward.1']
    #allocation14 [shape = 'u8[196608]{0}', space=vmem, size = 0x30000, scoped, tag = 'input window, operand 19']
    #allocation15 [shape = 'u8[131072]{0}', space=vmem, size = 0x20000, scoped, tag = 'input window, operand 20']
    #allocation16 [shape = 'u8[524288]{0}', space=vmem, size = 0x80000, scoped, tag = 'input window, operand 21']
    #allocation17 [shape = 'u8[6144]{0}', space=vmem, size = 0x1800, scoped, tag = 'input window, operand 22']
    #allocation18 [shape = 'u8[4096]{0}', space=vmem, size = 0x1000, scoped, tag = 'input window, operand 23']
    #allocation19 [shape = 'u8[1024]{0}', space=vmem, size = 0x400, scoped, tag = 'input window, operand 25, single buffered']
    #allocation20 [shape = 'u8[512]{0}', space=vmem, size = 0x400, scoped, tag = 'input window, operand 27, single buffered']
    %65 = vsyncpa [#allocation5], 0
    %66 = vsyncpa [#allocation7], 0
    %67 = vsyncpa [#allocation10], 0
    %68 = vsyncpa [#allocation13], 0
    loop: start=0, step=1, limit=5
    $region2: #{joint_diffusion_transformer_forward.1} parent=1 // loop_pre_header
      _
    $region3: #{joint_diffusion_transformer_forward.1} parent=1 // loop_header
      %s70 = sphi 0, %s74
      %p71 = scmp.ge.s32.totalorder %s70, 5
      %s78 = sphi 0, %s78
      %s80 = sphi 0, %s78
      %s81 = sphi 0, %s80
      %s95 = sphi 0, %s81
      %s99 = sphi 0, %s99
      %s101 = sphi 0, %s99
      %s102 = sphi 0, %s101
      %s116 = sphi 0, %s102
      %s120 = sphi 0, %s120
      %s122 = sphi 0, %s120
      %s123 = sphi 0, %s122
      %s137 = sphi 0, %s123
      %s141 = sphi 0, %s141
      %s143 = sphi 0, %s141
      %s144 = sphi 0, %s143
      %s158 = sphi 0, %s144
      %s162 = sphi 0, %s162
      %s164 = sphi 0, %s162
      %s165 = sphi 0, %s164
      %s179 = sphi 0, %s165
      %s183 = sphi 0, %s183
      %s185 = sphi 0, %s183
      %s186 = sphi 0, %s185
      %s200 = sphi 0, %s186
      %s204 = sphi 0, %s204
      %s206 = sphi 0, %s204
      %s207 = sphi 0, %s206
      %s221 = sphi 0, %s207
      %s225 = sphi 0, %s225
      %s227 = sphi 0, %s225
      %s228 = sphi 0, %s227
      %s242 = sphi 0, %s228
      %s246 = sphi 0, %s246
      %s248 = sphi 0, %s246
      %s249 = sphi 0, %s248
      %s263 = sphi 0, %s249
      %s267 = sphi 0, %s267
      %s269 = sphi 0, %s267
      %s270 = sphi 0, %s269
      %s284 = sphi 0, %s270
      %s288 = sphi 0, %s288
      %s290 = sphi 0, %s288
      %s291 = sphi 0, %s290
      %s305 = sphi 0, %s291
      %s309 = sphi 0, %s309
      %s311 = sphi 0, %s309
      %s312 = sphi 0, %s311
      %s326 = sphi 0, %s312
      %s330 = sphi 0, %s330
      %s332 = sphi 0, %s330
      %s333 = sphi 0, %s332
      %s347 = sphi 0, %s333
      %s351 = sphi 0, %s351
      %s353 = sphi 0, %s351
      %s354 = sphi 0, %s353
      %s368 = sphi 0, %s354
      %s372 = sphi 0, %s372
      %s374 = sphi 0, %s372
      %s375 = sphi 0, %s374
      %s389 = sphi 0, %s375
      %s393 = sphi 0, %s393
      %s395 = sphi 0, %s393
      %s396 = sphi 0, %s395
      %s410 = sphi 0, %s396
      %s414 = sphi 0, %s414
      %s416 = sphi 0, %s414
      %s417 = sphi 0, %s416
      %s431 = sphi 0, %s417
      %s435 = sphi 0, %s435
      %s437 = sphi 0, %s435
      %s438 = sphi 0, %s437
      %s452 = sphi 0, %s438
      %s456 = sphi 0, %s456
      %s458 = sphi 0, %s456
      %s459 = sphi 0, %s458
      %s473 = sphi 0, %s459
      %s479 = sphi 0, %s481
      %s482 = sphi 0, %s479
      %s483 = sphi 0, %s482
      %s499 = sphi 0, %s483
      %s505 = sphi 0, %s507
      %s508 = sphi 0, %s505
      %s509 = sphi 0, %s508
      %s525 = sphi 0, %s509
      %s531 = sphi 0, %s533
      %s534 = sphi 0, %s531
      %s535 = sphi 0, %s534
      %s551 = sphi 0, %s535
      %s557 = sphi 0, %s559
      %s560 = sphi 0, %s557
      %s561 = sphi 0, %s560
      %s577 = sphi 0, %s561
      %s583 = sphi 0, %s585
      %s586 = sphi 0, %s583
      %s587 = sphi 0, %s586
      %s603 = sphi 0, %s587
      %s607 = sphi 0, %s607
      %s609 = sphi 0, %s607
      %s610 = sphi 0, %s609
      %s624 = sphi 0, %s610
      %s628 = sphi 0, %s628
      %s630 = sphi 0, %s628
      %s631 = sphi 0, %s630
      %s645 = sphi 0, %s631
      %s649 = sphi 0, %s649
      %s651 = sphi 0, %s649
      %s652 = sphi 0, %s651
      %s666 = sphi 0, %s652
      %s670 = sphi 0, %s670
      %s672 = sphi 0, %s670
      %s673 = sphi 0, %s672
      %s687 = sphi 0, %s673
      %s691 = sphi 0, %s691
      %s693 = sphi 0, %s691
      %s694 = sphi 0, %s693
      %s708 = sphi 0, %s694
      %s712 = sphi 0, %s712
      %s714 = sphi 0, %s712
      %s715 = sphi 0, %s714
      %s729 = sphi 0, %s715
    $region4: #{joint_diffusion_transformer_forward.1} parent=1 // loop_header_branch
      %73 = sbr.rel (%p71) target = $region8
    $region5: #{joint_diffusion_transformer_forward.1} parent=1 // loop_body
      %s75 = ssub.s32 %s70, 1
      %s76 = ssub.s32 %s70, 2
      %s77 = sadd.s32 %s70, 1
      %s79 = sadd.s32 %s78, 1
      %p82 = scmp.eq.s32.totalorder %s70, 2
      %p83 = scmp.ne.s32.totalorder %s78, %s80
      %p84 = scmp.eq.s32.totalorder %s70, 0
      %p85 = por %p83, %p84
      %p86 = scmp.ne.s32.totalorder %s78, %s80
      %p87 = scmp.eq.s32.totalorder %s75, 2
      %p88 = por %p86, %p87
      %p89 = scmp.ne.s32.totalorder %s80, %s81
      %p90 = scmp.eq.s32.totalorder %s75, 0
      %p91 = por %p89, %p90
      %p92 = scmp.ne.s32.totalorder %s80, %s81
      %p93 = scmp.eq.s32.totalorder %s76, 2
      %p94 = por %p92, %p93
      %p96 = scmp.ne.s32.totalorder %s81, %s95
      %p97 = scmp.eq.s32.totalorder %s76, 0
      %p98 = por %p96, %p97
      %s100 = sadd.s32 %s99, 1
      %p103 = scmp.eq.s32.totalorder %s70, 2
      %p104 = scmp.ne.s32.totalorder %s99, %s101
      %p105 = scmp.eq.s32.totalorder %s70, 0
      %p106 = por %p104, %p105
      %p107 = scmp.ne.s32.totalorder %s99, %s101
      %p108 = scmp.eq.s32.totalorder %s75, 2
      %p109 = por %p107, %p108
      %p110 = scmp.ne.s32.totalorder %s101, %s102
      %p111 = scmp.eq.s32.totalorder %s75, 0
      %p112 = por %p110, %p111
      %p113 = scmp.ne.s32.totalorder %s101, %s102
      %p114 = scmp.eq.s32.totalorder %s76, 2
      %p115 = por %p113, %p114
      %p117 = scmp.ne.s32.totalorder %s102, %s116
      %p118 = scmp.eq.s32.totalorder %s76, 0
      %p119 = por %p117, %p118
      %s121 = sadd.s32 %s120, 1
      %p124 = scmp.eq.s32.totalorder %s70, 2
      %p125 = scmp.ne.s32.totalorder %s120, %s122
      %p126 = scmp.eq.s32.totalorder %s70, 0
      %p127 = por %p125, %p126
      %p128 = scmp.ne.s32.totalorder %s120, %s122
      %p129 = scmp.eq.s32.totalorder %s75, 2
      %p130 = por %p128, %p129
      %p131 = scmp.ne.s32.totalorder %s122, %s123
      %p132 = scmp.eq.s32.totalorder %s75, 0
      %p133 = por %p131, %p132
      %p134 = scmp.ne.s32.totalorder %s122, %s123
      %p135 = scmp.eq.s32.totalorder %s76, 2
      %p136 = por %p134, %p135
      %p138 = scmp.ne.s32.totalorder %s123, %s137
      %p139 = scmp.eq.s32.totalorder %s76, 0
      %p140 = por %p138, %p139
      %s142 = sadd.s32 %s141, 1
      %p145 = scmp.eq.s32.totalorder %s70, 2
      %p146 = scmp.ne.s32.totalorder %s141, %s143
      %p147 = scmp.eq.s32.totalorder %s70, 0
      %p148 = por %p146, %p147
      %p149 = scmp.ne.s32.totalorder %s141, %s143
      %p150 = scmp.eq.s32.totalorder %s75, 2
      %p151 = por %p149, %p150
      %p152 = scmp.ne.s32.totalorder %s143, %s144
      %p153 = scmp.eq.s32.totalorder %s75, 0
      %p154 = por %p152, %p153
      %p155 = scmp.ne.s32.totalorder %s143, %s144
      %p156 = scmp.eq.s32.totalorder %s76, 2
      %p157 = por %p155, %p156
      %p159 = scmp.ne.s32.totalorder %s144, %s158
      %p160 = scmp.eq.s32.totalorder %s76, 0
      %p161 = por %p159, %p160
      %s163 = sadd.s32 %s162, 1
      %p166 = scmp.eq.s32.totalorder %s70, 2
      %p167 = scmp.ne.s32.totalorder %s162, %s164
      %p168 = scmp.eq.s32.totalorder %s70, 0
      %p169 = por %p167, %p168
      %p170 = scmp.ne.s32.totalorder %s162, %s164
      %p171 = scmp.eq.s32.totalorder %s75, 2
      %p172 = por %p170, %p171
      %p173 = scmp.ne.s32.totalorder %s164, %s165
      %p174 = scmp.eq.s32.totalorder %s75, 0
      %p175 = por %p173, %p174
      %p176 = scmp.ne.s32.totalorder %s164, %s165
      %p177 = scmp.eq.s32.totalorder %s76, 2
      %p178 = por %p176, %p177
      %p180 = scmp.ne.s32.totalorder %s165, %s179
      %p181 = scmp.eq.s32.totalorder %s76, 0
      %p182 = por %p180, %p181
      %s184 = sadd.s32 %s183, 1
      %p187 = scmp.eq.s32.totalorder %s70, 2
      %p188 = scmp.ne.s32.totalorder %s183, %s185
      %p189 = scmp.eq.s32.totalorder %s70, 0
      %p190 = por %p188, %p189
      %p191 = scmp.ne.s32.totalorder %s183, %s185
      %p192 = scmp.eq.s32.totalorder %s75, 2
      %p193 = por %p191, %p192
      %p194 = scmp.ne.s32.totalorder %s185, %s186
      %p195 = scmp.eq.s32.totalorder %s75, 0
      %p196 = por %p194, %p195
      %p197 = scmp.ne.s32.totalorder %s185, %s186
      %p198 = scmp.eq.s32.totalorder %s76, 2
      %p199 = por %p197, %p198
      %p201 = scmp.ne.s32.totalorder %s186, %s200
      %p202 = scmp.eq.s32.totalorder %s76, 0
      %p203 = por %p201, %p202
      %s205 = sadd.s32 %s204, 1
      %p208 = scmp.eq.s32.totalorder %s70, 2
      %p209 = scmp.ne.s32.totalorder %s204, %s206
      %p210 = scmp.eq.s32.totalorder %s70, 0
      %p211 = por %p209, %p210
      %p212 = scmp.ne.s32.totalorder %s204, %s206
      %p213 = scmp.eq.s32.totalorder %s75, 2
      %p214 = por %p212, %p213
      %p215 = scmp.ne.s32.totalorder %s206, %s207
      %p216 = scmp.eq.s32.totalorder %s75, 0
      %p217 = por %p215, %p216
      %p218 = scmp.ne.s32.totalorder %s206, %s207
      %p219 = scmp.eq.s32.totalorder %s76, 2
      %p220 = por %p218, %p219
      %p222 = scmp.ne.s32.totalorder %s207, %s221
      %p223 = scmp.eq.s32.totalorder %s76, 0
      %p224 = por %p222, %p223
      %s226 = sadd.s32 %s225, 1
      %p229 = scmp.eq.s32.totalorder %s70, 2
      %p230 = scmp.ne.s32.totalorder %s225, %s227
      %p231 = scmp.eq.s32.totalorder %s70, 0
      %p232 = por %p230, %p231
      %p233 = scmp.ne.s32.totalorder %s225, %s227
      %p234 = scmp.eq.s32.totalorder %s75, 2
      %p235 = por %p233, %p234
      %p236 = scmp.ne.s32.totalorder %s227, %s228
      %p237 = scmp.eq.s32.totalorder %s75, 0
      %p238 = por %p236, %p237
      %p239 = scmp.ne.s32.totalorder %s227, %s228
      %p240 = scmp.eq.s32.totalorder %s76, 2
      %p241 = por %p239, %p240
      %p243 = scmp.ne.s32.totalorder %s228, %s242
      %p244 = scmp.eq.s32.totalorder %s76, 0
      %p245 = por %p243, %p244
      %s247 = sadd.s32 %s246, 1
      %p250 = scmp.eq.s32.totalorder %s70, 2
      %p251 = scmp.ne.s32.totalorder %s246, %s248
      %p252 = scmp.eq.s32.totalorder %s70, 0
      %p253 = por %p251, %p252
      %p254 = scmp.ne.s32.totalorder %s246, %s248
      %p255 = scmp.eq.s32.totalorder %s75, 2
      %p256 = por %p254, %p255
      %p257 = scmp.ne.s32.totalorder %s248, %s249
      %p258 = scmp.eq.s32.totalorder %s75, 0
      %p259 = por %p257, %p258
      %p260 = scmp.ne.s32.totalorder %s248, %s249
      %p261 = scmp.eq.s32.totalorder %s76, 2
      %p262 = por %p260, %p261
      %p264 = scmp.ne.s32.totalorder %s249, %s263
      %p265 = scmp.eq.s32.totalorder %s76, 0
      %p266 = por %p264, %p265
      %s268 = sadd.s32 %s267, 1
      %p271 = scmp.eq.s32.totalorder %s70, 2
      %p272 = scmp.ne.s32.totalorder %s267, %s269
      %p273 = scmp.eq.s32.totalorder %s70, 0
      %p274 = por %p272, %p273
      %p275 = scmp.ne.s32.totalorder %s267, %s269
      %p276 = scmp.eq.s32.totalorder %s75, 2
      %p277 = por %p275, %p276
      %p278 = scmp.ne.s32.totalorder %s269, %s270
      %p279 = scmp.eq.s32.totalorder %s75, 0
      %p280 = por %p278, %p279
      %p281 = scmp.ne.s32.totalorder %s269, %s270
      %p282 = scmp.eq.s32.totalorder %s76, 2
      %p283 = por %p281, %p282
      %p285 = scmp.ne.s32.totalorder %s270, %s284
      %p286 = scmp.eq.s32.totalorder %s76, 0
      %p287 = por %p285, %p286
      %s289 = sadd.s32 %s288, 1
      %p292 = scmp.eq.s32.totalorder %s70, 2
      %p293 = scmp.ne.s32.totalorder %s288, %s290
      %p294 = scmp.eq.s32.totalorder %s70, 0
      %p295 = por %p293, %p294
      %p296 = scmp.ne.s32.totalorder %s288, %s290
      %p297 = scmp.eq.s32.totalorder %s75, 2
      %p298 = por %p296, %p297
      %p299 = scmp.ne.s32.totalorder %s290, %s291
      %p300 = scmp.eq.s32.totalorder %s75, 0
      %p301 = por %p299, %p300
      %p302 = scmp.ne.s32.totalorder %s290, %s291
      %p303 = scmp.eq.s32.totalorder %s76, 2
      %p304 = por %p302, %p303
      %p306 = scmp.ne.s32.totalorder %s291, %s305
      %p307 = scmp.eq.s32.totalorder %s76, 0
      %p308 = por %p306, %p307
      %s310 = sadd.s32 %s309, 1
      %p313 = scmp.eq.s32.totalorder %s70, 2
      %p314 = scmp.ne.s32.totalorder %s309, %s311
      %p315 = scmp.eq.s32.totalorder %s70, 0
      %p316 = por %p314, %p315
      %p317 = scmp.ne.s32.totalorder %s309, %s311
      %p318 = scmp.eq.s32.totalorder %s75, 2
      %p319 = por %p317, %p318
      %p320 = scmp.ne.s32.totalorder %s311, %s312
      %p321 = scmp.eq.s32.totalorder %s75, 0
      %p322 = por %p320, %p321
      %p323 = scmp.ne.s32.totalorder %s311, %s312
      %p324 = scmp.eq.s32.totalorder %s76, 2
      %p325 = por %p323, %p324
      %p327 = scmp.ne.s32.totalorder %s312, %s326
      %p328 = scmp.eq.s32.totalorder %s76, 0
      %p329 = por %p327, %p328
      %s331 = sadd.s32 %s330, 1
      %p334 = scmp.eq.s32.totalorder %s70, 2
      %p335 = scmp.ne.s32.totalorder %s330, %s332
      %p336 = scmp.eq.s32.totalorder %s70, 0
      %p337 = por %p335, %p336
      %p338 = scmp.ne.s32.totalorder %s330, %s332
      %p339 = scmp.eq.s32.totalorder %s75, 2
      %p340 = por %p338, %p339
      %p341 = scmp.ne.s32.totalorder %s332, %s333
      %p342 = scmp.eq.s32.totalorder %s75, 0
      %p343 = por %p341, %p342
      %p344 = scmp.ne.s32.totalorder %s332, %s333
      %p345 = scmp.eq.s32.totalorder %s76, 2
      %p346 = por %p344, %p345
      %p348 = scmp.ne.s32.totalorder %s333, %s347
      %p349 = scmp.eq.s32.totalorder %s76, 0
      %p350 = por %p348, %p349
      %s352 = sadd.s32 %s351, 1
      %p355 = scmp.eq.s32.totalorder %s70, 2
      %p356 = scmp.ne.s32.totalorder %s351, %s353
      %p357 = scmp.eq.s32.totalorder %s70, 0
      %p358 = por %p356, %p357
      %p359 = scmp.ne.s32.totalorder %s351, %s353
      %p360 = scmp.eq.s32.totalorder %s75, 2
      %p361 = por %p359, %p360
      %p362 = scmp.ne.s32.totalorder %s353, %s354
      %p363 = scmp.eq.s32.totalorder %s75, 0
      %p364 = por %p362, %p363
      %p365 = scmp.ne.s32.totalorder %s353, %s354
      %p366 = scmp.eq.s32.totalorder %s76, 2
      %p367 = por %p365, %p366
      %p369 = scmp.ne.s32.totalorder %s354, %s368
      %p370 = scmp.eq.s32.totalorder %s76, 0
      %p371 = por %p369, %p370
      %s373 = sadd.s32 %s372, 1
      %p376 = scmp.eq.s32.totalorder %s70, 2
      %p377 = scmp.ne.s32.totalorder %s372, %s374
      %p378 = scmp.eq.s32.totalorder %s70, 0
      %p379 = por %p377, %p378
      %p380 = scmp.ne.s32.totalorder %s372, %s374
      %p381 = scmp.eq.s32.totalorder %s75, 2
      %p382 = por %p380, %p381
      %p383 = scmp.ne.s32.totalorder %s374, %s375
      %p384 = scmp.eq.s32.totalorder %s75, 0
      %p385 = por %p383, %p384
      %p386 = scmp.ne.s32.totalorder %s374, %s375
      %p387 = scmp.eq.s32.totalorder %s76, 2
      %p388 = por %p386, %p387
      %p390 = scmp.ne.s32.totalorder %s375, %s389
      %p391 = scmp.eq.s32.totalorder %s76, 0
      %p392 = por %p390, %p391
      %s394 = sadd.s32 %s393, 1
      %p397 = scmp.eq.s32.totalorder %s70, 2
      %p398 = scmp.ne.s32.totalorder %s393, %s395
      %p399 = scmp.eq.s32.totalorder %s70, 0
      %p400 = por %p398, %p399
      %p401 = scmp.ne.s32.totalorder %s393, %s395
      %p402 = scmp.eq.s32.totalorder %s75, 2
      %p403 = por %p401, %p402
      %p404 = scmp.ne.s32.totalorder %s395, %s396
      %p405 = scmp.eq.s32.totalorder %s75, 0
      %p406 = por %p404, %p405
      %p407 = scmp.ne.s32.totalorder %s395, %s396
      %p408 = scmp.eq.s32.totalorder %s76, 2
      %p409 = por %p407, %p408
      %p411 = scmp.ne.s32.totalorder %s396, %s410
      %p412 = scmp.eq.s32.totalorder %s76, 0
      %p413 = por %p411, %p412
      %s415 = sadd.s32 %s414, 1
      %p418 = scmp.eq.s32.totalorder %s70, 2
      %p419 = scmp.ne.s32.totalorder %s414, %s416
      %p420 = scmp.eq.s32.totalorder %s70, 0
      %p421 = por %p419, %p420
      %p422 = scmp.ne.s32.totalorder %s414, %s416
      %p423 = scmp.eq.s32.totalorder %s75, 2
      %p424 = por %p422, %p423
      %p425 = scmp.ne.s32.totalorder %s416, %s417
      %p426 = scmp.eq.s32.totalorder %s75, 0
      %p427 = por %p425, %p426
      %p428 = scmp.ne.s32.totalorder %s416, %s417
      %p429 = scmp.eq.s32.totalorder %s76, 2
      %p430 = por %p428, %p429
      %p432 = scmp.ne.s32.totalorder %s417, %s431
      %p433 = scmp.eq.s32.totalorder %s76, 0
      %p434 = por %p432, %p433
      %s436 = sadd.s32 %s435, 1
      %p439 = scmp.eq.s32.totalorder %s70, 2
      %p440 = scmp.ne.s32.totalorder %s435, %s437
      %p441 = scmp.eq.s32.totalorder %s70, 0
      %p442 = por %p440, %p441
      %p443 = scmp.ne.s32.totalorder %s435, %s437
      %p444 = scmp.eq.s32.totalorder %s75, 2
      %p445 = por %p443, %p444
      %p446 = scmp.ne.s32.totalorder %s437, %s438
      %p447 = scmp.eq.s32.totalorder %s75, 0
      %p448 = por %p446, %p447
      %p449 = scmp.ne.s32.totalorder %s437, %s438
      %p450 = scmp.eq.s32.totalorder %s76, 2
      %p451 = por %p449, %p450
      %p453 = scmp.ne.s32.totalorder %s438, %s452
      %p454 = scmp.eq.s32.totalorder %s76, 0
      %p455 = por %p453, %p454
      %s457 = sadd.s32 %s456, 1
      %p460 = scmp.eq.s32.totalorder %s70, 2
      %p461 = scmp.ne.s32.totalorder %s456, %s458
      %p462 = scmp.eq.s32.totalorder %s70, 0
      %p463 = por %p461, %p462
      %p464 = scmp.ne.s32.totalorder %s456, %s458
      %p465 = scmp.eq.s32.totalorder %s75, 2
      %p466 = por %p464, %p465
      %p467 = scmp.ne.s32.totalorder %s458, %s459
      %p468 = scmp.eq.s32.totalorder %s75, 0
      %p469 = por %p467, %p468
      %p470 = scmp.ne.s32.totalorder %s458, %s459
      %p471 = scmp.eq.s32.totalorder %s76, 2
      %p472 = por %p470, %p471
      %p474 = scmp.ne.s32.totalorder %s459, %s473
      %p475 = scmp.eq.s32.totalorder %s76, 0
      %p476 = por %p474, %p475
      %s477 = ssub.s32 %s70, %s77
      %p478 = scmp.eq.s32.totalorder %s477, 0
      %s480 = sadd.s32 %s479, 1
      %s481 = scalar_select %p478, %s479, %s480
      %p484 = pneg %p478
      %p485 = scmp.eq.s32.totalorder %s70, 2
      %p486 = por %p484, %p485
      %p487 = scmp.ne.s32.totalorder %s479, %s482
      %p488 = scmp.eq.s32.totalorder %s70, 0
      %p489 = por %p487, %p488
      %p490 = scmp.ne.s32.totalorder %s479, %s482
      %p491 = scmp.eq.s32.totalorder %s75, 2
      %p492 = por %p490, %p491
      %p493 = scmp.ne.s32.totalorder %s482, %s483
      %p494 = scmp.eq.s32.totalorder %s75, 0
      %p495 = por %p493, %p494
      %p496 = scmp.ne.s32.totalorder %s482, %s483
      %p497 = scmp.eq.s32.totalorder %s76, 2
      %p498 = por %p496, %p497
      %p500 = scmp.ne.s32.totalorder %s483, %s499
      %p501 = scmp.eq.s32.totalorder %s76, 0
      %p502 = por %p500, %p501
      %s503 = ssub.s32 %s70, %s77
      %p504 = scmp.eq.s32.totalorder %s503, 0
      %s506 = sadd.s32 %s505, 1
      %s507 = scalar_select %p504, %s505, %s506
      %p510 = pneg %p504
      %p511 = scmp.eq.s32.totalorder %s70, 2
      %p512 = por %p510, %p511
      %p513 = scmp.ne.s32.totalorder %s505, %s508
      %p514 = scmp.eq.s32.totalorder %s70, 0
      %p515 = por %p513, %p514
      %p516 = scmp.ne.s32.totalorder %s505, %s508
      %p517 = scmp.eq.s32.totalorder %s75, 2
      %p518 = por %p516, %p517
      %p519 = scmp.ne.s32.totalorder %s508, %s509
      %p520 = scmp.eq.s32.totalorder %s75, 0
      %p521 = por %p519, %p520
      %p522 = scmp.ne.s32.totalorder %s508, %s509
      %p523 = scmp.eq.s32.totalorder %s76, 2
      %p524 = por %p522, %p523
      %p526 = scmp.ne.s32.totalorder %s509, %s525
      %p527 = scmp.eq.s32.totalorder %s76, 0
      %p528 = por %p526, %p527
      %s529 = ssub.s32 %s70, %s77
      %p530 = scmp.eq.s32.totalorder %s529, 0
      %s532 = sadd.s32 %s531, 1
      %s533 = scalar_select %p530, %s531, %s532
      %p536 = pneg %p530
      %p537 = scmp.eq.s32.totalorder %s70, 2
      %p538 = por %p536, %p537
      %p539 = scmp.ne.s32.totalorder %s531, %s534
      %p540 = scmp.eq.s32.totalorder %s70, 0
      %p541 = por %p539, %p540
      %p542 = scmp.ne.s32.totalorder %s531, %s534
      %p543 = scmp.eq.s32.totalorder %s75, 2
      %p544 = por %p542, %p543
      %p545 = scmp.ne.s32.totalorder %s534, %s535
      %p546 = scmp.eq.s32.totalorder %s75, 0
      %p547 = por %p545, %p546
      %p548 = scmp.ne.s32.totalorder %s534, %s535
      %p549 = scmp.eq.s32.totalorder %s76, 2
      %p550 = por %p548, %p549
      %p552 = scmp.ne.s32.totalorder %s535, %s551
      %p553 = scmp.eq.s32.totalorder %s76, 0
      %p554 = por %p552, %p553
      %s555 = ssub.s32 %s70, %s77
      %p556 = scmp.eq.s32.totalorder %s555, 0
      %s558 = sadd.s32 %s557, 1
      %s559 = scalar_select %p556, %s557, %s558
      %p562 = pneg %p556
      %p563 = scmp.eq.s32.totalorder %s70, 2
      %p564 = por %p562, %p563
      %p565 = scmp.ne.s32.totalorder %s557, %s560
      %p566 = scmp.eq.s32.totalorder %s70, 0
      %p567 = por %p565, %p566
      %p568 = scmp.ne.s32.totalorder %s557, %s560
      %p569 = scmp.eq.s32.totalorder %s75, 2
      %p570 = por %p568, %p569
      %p571 = scmp.ne.s32.totalorder %s560, %s561
      %p572 = scmp.eq.s32.totalorder %s75, 0
      %p573 = por %p571, %p572
      %p574 = scmp.ne.s32.totalorder %s560, %s561
      %p575 = scmp.eq.s32.totalorder %s76, 2
      %p576 = por %p574, %p575
      %p578 = scmp.ne.s32.totalorder %s561, %s577
      %p579 = scmp.eq.s32.totalorder %s76, 0
      %p580 = por %p578, %p579
      %s581 = ssub.s32 %s70, %s77
      %p582 = scmp.eq.s32.totalorder %s581, 0
      %s584 = sadd.s32 %s583, 1
      %s585 = scalar_select %p582, %s583, %s584
      %p588 = pneg %p582
      %p589 = scmp.eq.s32.totalorder %s70, 2
      %p590 = por %p588, %p589
      %p591 = scmp.ne.s32.totalorder %s583, %s586
      %p592 = scmp.eq.s32.totalorder %s70, 0
      %p593 = por %p591, %p592
      %p594 = scmp.ne.s32.totalorder %s583, %s586
      %p595 = scmp.eq.s32.totalorder %s75, 2
      %p596 = por %p594, %p595
      %p597 = scmp.ne.s32.totalorder %s586, %s587
      %p598 = scmp.eq.s32.totalorder %s75, 0
      %p599 = por %p597, %p598
      %p600 = scmp.ne.s32.totalorder %s586, %s587
      %p601 = scmp.eq.s32.totalorder %s76, 2
      %p602 = por %p600, %p601
      %p604 = scmp.ne.s32.totalorder %s587, %s603
      %p605 = scmp.eq.s32.totalorder %s76, 0
      %p606 = por %p604, %p605
      %s608 = sadd.s32 %s607, 1
      %p611 = scmp.eq.s32.totalorder %s70, 2
      %p612 = scmp.ne.s32.totalorder %s607, %s609
      %p613 = scmp.eq.s32.totalorder %s70, 0
      %p614 = por %p612, %p613
      %p615 = scmp.ne.s32.totalorder %s607, %s609
      %p616 = scmp.eq.s32.totalorder %s75, 2
      %p617 = por %p615, %p616
      %p618 = scmp.ne.s32.totalorder %s609, %s610
      %p619 = scmp.eq.s32.totalorder %s75, 0
      %p620 = por %p618, %p619
      %p621 = scmp.ne.s32.totalorder %s609, %s610
      %p622 = scmp.eq.s32.totalorder %s76, 2
      %p623 = por %p621, %p622
      %p625 = scmp.ne.s32.totalorder %s610, %s624
      %p626 = scmp.eq.s32.totalorder %s76, 0
      %p627 = por %p625, %p626
      %s629 = sadd.s32 %s628, 1
      %p632 = scmp.eq.s32.totalorder %s70, 2
      %p633 = scmp.ne.s32.totalorder %s628, %s630
      %p634 = scmp.eq.s32.totalorder %s70, 0
      %p635 = por %p633, %p634
      %p636 = scmp.ne.s32.totalorder %s628, %s630
      %p637 = scmp.eq.s32.totalorder %s75, 2
      %p638 = por %p636, %p637
      %p639 = scmp.ne.s32.totalorder %s630, %s631
      %p640 = scmp.eq.s32.totalorder %s75, 0
      %p641 = por %p639, %p640
      %p642 = scmp.ne.s32.totalorder %s630, %s631
      %p643 = scmp.eq.s32.totalorder %s76, 2
      %p644 = por %p642, %p643
      %p646 = scmp.ne.s32.totalorder %s631, %s645
      %p647 = scmp.eq.s32.totalorder %s76, 0
      %p648 = por %p646, %p647
      %s650 = sadd.s32 %s649, 1
      %p653 = scmp.eq.s32.totalorder %s70, 2
      %p654 = scmp.ne.s32.totalorder %s649, %s651
      %p655 = scmp.eq.s32.totalorder %s70, 0
      %p656 = por %p654, %p655
      %p657 = scmp.ne.s32.totalorder %s649, %s651
      %p658 = scmp.eq.s32.totalorder %s75, 2
      %p659 = por %p657, %p658
      %p660 = scmp.ne.s32.totalorder %s651, %s652
      %p661 = scmp.eq.s32.totalorder %s75, 0
      %p662 = por %p660, %p661
      %p663 = scmp.ne.s32.totalorder %s651, %s652
      %p664 = scmp.eq.s32.totalorder %s76, 2
      %p665 = por %p663, %p664
      %p667 = scmp.ne.s32.totalorder %s652, %s666
      %p668 = scmp.eq.s32.totalorder %s76, 0
      %p669 = por %p667, %p668
      %s671 = sadd.s32 %s670, 1
      %p674 = scmp.eq.s32.totalorder %s70, 2
      %p675 = scmp.ne.s32.totalorder %s670, %s672
      %p676 = scmp.eq.s32.totalorder %s70, 0
      %p677 = por %p675, %p676
      %p678 = scmp.ne.s32.totalorder %s670, %s672
      %p679 = scmp.eq.s32.totalorder %s75, 2
      %p680 = por %p678, %p679
      %p681 = scmp.ne.s32.totalorder %s672, %s673
      %p682 = scmp.eq.s32.totalorder %s75, 0
      %p683 = por %p681, %p682
      %p684 = scmp.ne.s32.totalorder %s672, %s673
      %p685 = scmp.eq.s32.totalorder %s76, 2
      %p686 = por %p684, %p685
      %p688 = scmp.ne.s32.totalorder %s673, %s687
      %p689 = scmp.eq.s32.totalorder %s76, 0
      %p690 = por %p688, %p689
      %s692 = sadd.s32 %s691, 1
      %p695 = scmp.eq.s32.totalorder %s70, 2
      %p696 = scmp.ne.s32.totalorder %s691, %s693
      %p697 = scmp.eq.s32.totalorder %s70, 0
      %p698 = por %p696, %p697
      %p699 = scmp.ne.s32.totalorder %s691, %s693
      %p700 = scmp.eq.s32.totalorder %s75, 2
      %p701 = por %p699, %p700
      %p702 = scmp.ne.s32.totalorder %s693, %s694
      %p703 = scmp.eq.s32.totalorder %s75, 0
      %p704 = por %p702, %p703
      %p705 = scmp.ne.s32.totalorder %s693, %s694
      %p706 = scmp.eq.s32.totalorder %s76, 2
      %p707 = por %p705, %p706
      %p709 = scmp.ne.s32.totalorder %s694, %s708
      %p710 = scmp.eq.s32.totalorder %s76, 0
      %p711 = por %p709, %p710
      %s713 = sadd.s32 %s712, 1
      %p716 = scmp.eq.s32.totalorder %s70, 2
      %p717 = scmp.ne.s32.totalorder %s712, %s714
      %p718 = scmp.eq.s32.totalorder %s70, 0
      %p719 = por %p717, %p718
      %p720 = scmp.ne.s32.totalorder %s712, %s714
      %p721 = scmp.eq.s32.totalorder %s75, 2
      %p722 = por %p720, %p721
      %p723 = scmp.ne.s32.totalorder %s714, %s715
      %p724 = scmp.eq.s32.totalorder %s75, 0
      %p725 = por %p723, %p724
      %p726 = scmp.ne.s32.totalorder %s714, %s715
      %p727 = scmp.eq.s32.totalorder %s76, 2
      %p728 = por %p726, %p727
      %p730 = scmp.ne.s32.totalorder %s715, %s729
      %p731 = scmp.eq.s32.totalorder %s76, 0
      %p732 = por %p730, %p731
      %p733 = scmp.le.s32.totalorder 1, %s70
      %p734 = scmp.lt.s32.totalorder %s70, 4
      %p735 = pnand %p733, %p734
      %p736 = pneg %p735
      // Predicated region
      $region9: #{joint_diffusion_transformer_forward.1} parent=5 // pred_check
        _
      $region10: #{joint_diffusion_transformer_forward.1} parent=5 // pred_check_branch
        %738 = sbr.rel (%p735) target = $region12
      $region11: #{joint_diffusion_transformer_forward.1} parent=5 // pred_region
        %s739 = ssub.s32 %s70, 1
        // Predicated region
        $region13: #{joint_diffusion_transformer_forward.1} parent=11 // pred_check
          %p740 = pneg %p91
        $region14: #{joint_diffusion_transformer_forward.1} parent=11 // pred_check_branch
          %742 = sbr.rel (%p740) target = $region16
        $region15: #{joint_diffusion_transformer_forward.1} parent=11 // pred_region
          _
        $region16: #{joint_diffusion_transformer_forward.1} parent=11 // pred_fallthru
          _
        // Predicated region
        $region17: #{joint_diffusion_transformer_forward.1} parent=11 // pred_check
          %p743 = pneg %p112
        $region18: #{joint_diffusion_transformer_forward.1} parent=11 // pred_check_branch
          %745 = sbr.rel (%p743) target = $region20
        $region19: #{joint_diffusion_transformer_forward.1} parent=11 // pred_region
          _
        $region20: #{joint_diffusion_transformer_forward.1} parent=11 // pred_fallthru
          _
        // Predicated region
        $region21: #{joint_diffusion_transformer_forward.1} parent=11 // pred_check
          %p746 = pneg %p133
        $region22: #{joint_diffusion_transformer_forward.1} parent=11 // pred_check_branch
          %748 = sbr.rel (%p746) target = $region24
        $region23: #{joint_diffusion_transformer_forward.1} parent=11 // pred_region
          _
        $region24: #{joint_diffusion_transformer_forward.1} parent=11 // pred_fallthru
          _
        // Predicated region
        $region25: #{joint_diffusion_transformer_forward.1} parent=11 // pred_check
          %p749 = pneg %p154
        $region26: #{joint_diffusion_transformer_forward.1} parent=11 // pred_check_branch
          %751 = sbr.rel (%p749) target = $region28
        $region27: #{joint_diffusion_transformer_forward.1} parent=11 // pred_region
          _
        $region28: #{joint_diffusion_transformer_forward.1} parent=11 // pred_fallthru
          _
        // Predicated region
        $region29: #{joint_diffusion_transformer_forward.1} parent=11 // pred_check
          %p752 = pneg %p175
        $region30: #{joint_diffusion_transformer_forward.1} parent=11 // pred_check_branch
          %754 = sbr.rel (%p752) target = $region32
        $region31: #{joint_diffusion_transformer_forward.1} parent=11 // pred_region
          _
        $region32: #{joint_diffusion_transformer_forward.1} parent=11 // pred_fallthru
          _
        // Predicated region
        $region33: #{joint_diffusion_transformer_forward.1} parent=11 // pred_check
          %p755 = pneg %p196
        $region34: #{joint_diffusion_transformer_forward.1} parent=11 // pred_check_branch
          %757 = sbr.rel (%p755) target = $region36
        $region35: #{joint_diffusion_transformer_forward.1} parent=11 // pred_region
          _
        $region36: #{joint_diffusion_transformer_forward.1} parent=11 // pred_fallthru
          _
        // Predicated region
        $region37: #{joint_diffusion_transformer_forward.1} parent=11 // pred_check
          %p758 = pneg %p217
        $region38: #{joint_diffusion_transformer_forward.1} parent=11 // pred_check_branch
          %760 = sbr.rel (%p758) target = $region40
        $region39: #{joint_diffusion_transformer_forward.1} parent=11 // pred_region
          _
        $region40: #{joint_diffusion_transformer_forward.1} parent=11 // pred_fallthru
          _
        // Predicated region
        $region41: #{joint_diffusion_transformer_forward.1} parent=11 // pred_check
          %p761 = pneg %p238
        $region42: #{joint_diffusion_transformer_forward.1} parent=11 // pred_check_branch
          %763 = sbr.rel (%p761) target = $region44
        $region43: #{joint_diffusion_transformer_forward.1} parent=11 // pred_region
          _
        $region44: #{joint_diffusion_transformer_forward.1} parent=11 // pred_fallthru
          _
        // Predicated region
        $region45: #{joint_diffusion_transformer_forward.1} parent=11 // pred_check
          %p764 = pneg %p259
        $region46: #{joint_diffusion_transformer_forward.1} parent=11 // pred_check_branch
          %766 = sbr.rel (%p764) target = $region48
        $region47: #{joint_diffusion_transformer_forward.1} parent=11 // pred_region
          _
        $region48: #{joint_diffusion_transformer_forward.1} parent=11 // pred_fallthru
          _
        // Predicated region
        $region49: #{joint_diffusion_transformer_forward.1} parent=11 // pred_check
          %p767 = pneg %p280
        $region50: #{joint_diffusion_transformer_forward.1} parent=11 // pred_check_branch
          %769 = sbr.rel (%p767) target = $region52
        $region51: #{joint_diffusion_transformer_forward.1} parent=11 // pred_region
          _
        $region52: #{joint_diffusion_transformer_forward.1} parent=11 // pred_fallthru
          _
        // Predicated region
        $region53: #{joint_diffusion_transformer_forward.1} parent=11 // pred_check
          %p770 = pneg %p301
        $region54: #{joint_diffusion_transformer_forward.1} parent=11 // pred_check_branch
          %772 = sbr.rel (%p770) target = $region56
        $region55: #{joint_diffusion_transformer_forward.1} parent=11 // pred_region
          %s774 = ssub.s32 16, 16
          %775 = vsyncadd [#allocation5], %s774
          %s777 = sshll.u32 [#allocation4], 4
          %s778 = int_to_ptr.vmem [resolvable:$true] %s777
          %780 = dma.hbm_to_vmem [thread:$0]  %s21, 16, %s778, [#allocation5]
        $region56: #{joint_diffusion_transformer_forward.1} parent=11 // pred_fallthru
          _
        // Predicated region
        $region57: #{joint_diffusion_transformer_forward.1} parent=11 // pred_check
          %p781 = pneg %p322
        $region58: #{joint_diffusion_transformer_forward.1} parent=11 // pred_check_branch
          %783 = sbr.rel (%p781) target = $region60
        $region59: #{joint_diffusion_transformer_forward.1} parent=11 // pred_region
          %s785 = ssub.s32 32, 32
          %786 = vsyncadd [#allocation7], %s785
          %s788 = sshll.u32 [#allocation6], 4
          %s789 = int_to_ptr.vmem [resolvable:$true] %s788
          %791 = dma.hbm_to_vmem [thread:$0]  %s23, 32, %s789, [#allocation7]
        $region60: #{joint_diffusion_transformer_forward.1} parent=11 // pred_fallthru
          _
        // Predicated region
        $region61: #{joint_diffusion_transformer_forward.1} parent=11 // pred_check
          %p792 = pneg %p343
        $region62: #{joint_diffusion_transformer_forward.1} parent=11 // pred_check_branch
          %794 = sbr.rel (%p792) target = $region64
        $region63: #{joint_diffusion_transformer_forward.1} parent=11 // pred_region
          %s796 = ssub.s32 16, 16
          %797 = vsyncadd [#allocation7], %s796
          %s799 = sshll.u32 [#allocation8], 4
          %s800 = int_to_ptr.vmem [resolvable:$true] %s799
          %802 = dma.hbm_to_vmem [thread:$0]  %s25, 16, %s800, [#allocation7]
        $region64: #{joint_diffusion_transformer_forward.1} parent=11 // pred_fallthru
          _
        // Predicated region
        $region65: #{joint_diffusion_transformer_forward.1} parent=11 // pred_check
          %p803 = pneg %p364
        $region66: #{joint_diffusion_transformer_forward.1} parent=11 // pred_check_branch
          %805 = sbr.rel (%p803) target = $region68
        $region67: #{joint_diffusion_transformer_forward.1} parent=11 // pred_region
          %s807 = ssub.s32 128, 128
          %808 = vsyncadd [#allocation10], %s807
          %s809 = sshll.u32 [#allocation9], 4
          %s810 = int_to_ptr.vmem [resolvable:$true] %s809
          %815 = dma.hbm_to_vmem [thread:$0]  %s27, 128, %s810, [#allocation10], 64, 64, 4
        $region68: #{joint_diffusion_transformer_forward.1} parent=11 // pred_fallthru
          _
        // Predicated region
        $region69: #{joint_diffusion_transformer_forward.1} parent=11 // pred_check
          %p816 = pneg %p385
        $region70: #{joint_diffusion_transformer_forward.1} parent=11 // pred_check_branch
          %818 = sbr.rel (%p816) target = $region72
        $region71: #{joint_diffusion_transformer_forward.1} parent=11 // pred_region
          %s820 = ssub.s32 16, 16
          %821 = vsyncadd [#allocation10], %s820
          %s823 = sshll.u32 [#allocation11], 4
          %s824 = int_to_ptr.vmem [resolvable:$true] %s823
          %826 = dma.hbm_to_vmem [thread:$0]  %s29, 16, %s824, [#allocation10]
        $region72: #{joint_diffusion_transformer_forward.1} parent=11 // pred_fallthru
          _
        // Predicated region
        $region73: #{joint_diffusion_transformer_forward.1} parent=11 // pred_check
          %p827 = pneg %p406
        $region74: #{joint_diffusion_transformer_forward.1} parent=11 // pred_check_branch
          %829 = sbr.rel (%p827) target = $region76
        $region75: #{joint_diffusion_transformer_forward.1} parent=11 // pred_region
          _
        $region76: #{joint_diffusion_transformer_forward.1} parent=11 // pred_fallthru
          _
        // Predicated region
        $region77: #{joint_diffusion_transformer_forward.1} parent=11 // pred_check
          %p830 = pneg %p427
        $region78: #{joint_diffusion_transformer_forward.1} parent=11 // pred_check_branch
          %832 = sbr.rel (%p830) target = $region80
        $region79: #{joint_diffusion_transformer_forward.1} parent=11 // pred_region
          %s834 = ssub.s32 16, 16
          %835 = vsyncadd [#allocation13], %s834
          %s837 = sshll.u32 [#allocation12], 4
          %s838 = int_to_ptr.vmem [resolvable:$true] %s837
          %840 = dma.hbm_to_vmem [thread:$0]  %s33, 16, %s838, [#allocation13]
        $region80: #{joint_diffusion_transformer_forward.1} parent=11 // pred_fallthru
          _
        // Predicated region
        $region81: #{joint_diffusion_transformer_forward.1} parent=11 // pred_check
          %p841 = pneg %p448
        $region82: #{joint_diffusion_transformer_forward.1} parent=11 // pred_check_branch
          %843 = sbr.rel (%p841) target = $region84
        $region83: #{joint_diffusion_transformer_forward.1} parent=11 // pred_region
          _
        $region84: #{joint_diffusion_transformer_forward.1} parent=11 // pred_fallthru
          _
        // Predicated region
        $region85: #{joint_diffusion_transformer_forward.1} parent=11 // pred_check
          %p844 = pneg %p469
        $region86: #{joint_diffusion_transformer_forward.1} parent=11 // pred_check_branch
          %846 = sbr.rel (%p844) target = $region88
        $region87: #{joint_diffusion_transformer_forward.1} parent=11 // pred_region
          _
        $region88: #{joint_diffusion_transformer_forward.1} parent=11 // pred_fallthru
          _
        // Predicated region
        $region89: #{joint_diffusion_transformer_forward.1} parent=11 // pred_check
          %p847 = pneg %p620
        $region90: #{joint_diffusion_transformer_forward.1} parent=11 // pred_check_branch
          %849 = sbr.rel (%p847) target = $region92
        $region91: #{joint_diffusion_transformer_forward.1} parent=11 // pred_region
          _
        $region92: #{joint_diffusion_transformer_forward.1} parent=11 // pred_fallthru
          _
        // Predicated region
        $region93: #{joint_diffusion_transformer_forward.1} parent=11 // pred_check
          %p850 = pneg %p641
        $region94: #{joint_diffusion_transformer_forward.1} parent=11 // pred_check_branch
          %852 = sbr.rel (%p850) target = $region96
        $region95: #{joint_diffusion_transformer_forward.1} parent=11 // pred_region
          %s854 = ssub.s32 32, 32
          %855 = vsyncadd [#allocation7], %s854
          %s857 = sshll.u32 [#allocation19], 4
          %s858 = int_to_ptr.vmem [resolvable:$true] %s857
          %860 = dma.hbm_to_vmem [thread:$0]  %s51, 32, %s858, [#allocation7]
        $region96: #{joint_diffusion_transformer_forward.1} parent=11 // pred_fallthru
          _
        // Predicated region
        $region97: #{joint_diffusion_transformer_forward.1} parent=11 // pred_check
          %p861 = pneg %p662
        $region98: #{joint_diffusion_transformer_forward.1} parent=11 // pred_check_branch
          %863 = sbr.rel (%p861) target = $region100
        $region99: #{joint_diffusion_transformer_forward.1} parent=11 // pred_region
          _
        $region100: #{joint_diffusion_transformer_forward.1} parent=11 // pred_fallthru
          _
        // Predicated region
        $region101: #{joint_diffusion_transformer_forward.1} parent=11 // pred_check
          %p864 = pneg %p683
        $region102: #{joint_diffusion_transformer_forward.1} parent=11 // pred_check_branch
          %866 = sbr.rel (%p864) target = $region104
        $region103: #{joint_diffusion_transformer_forward.1} parent=11 // pred_region
          %s868 = ssub.s32 16, 16
          %869 = vsyncadd [#allocation10], %s868
          %s871 = sshll.u32 [#allocation20], 4
          %s872 = int_to_ptr.vmem [resolvable:$true] %s871
          %874 = dma.hbm_to_vmem [thread:$0]  %s55, 16, %s872, [#allocation10]
        $region104: #{joint_diffusion_transformer_forward.1} parent=11 // pred_fallthru
          _
      $region12: #{joint_diffusion_transformer_forward.1} parent=5 // pred_fallthru
        _
      %p875 = scmp.lt.s32.totalorder %s70, 3
      // Predicated region
      $region105: #{joint_diffusion_transformer_forward.1} parent=5 // pred_check
        %p876 = pneg %p875
      $region106: #{joint_diffusion_transformer_forward.1} parent=5 // pred_check_branch
        %878 = sbr.rel (%p876) target = $region108
      $region107: #{joint_diffusion_transformer_forward.1} parent=5 // pred_region
        // Predicated region
        $region109: #{joint_diffusion_transformer_forward.1} parent=107 // pred_check
          %p879 = pneg %p489
        $region110: #{joint_diffusion_transformer_forward.1} parent=107 // pred_check_branch
          %881 = sbr.rel (%p879) target = $region112
        $region111: #{joint_diffusion_transformer_forward.1} parent=107 // pred_region
          %s882 = sand.u32 %s70, 1
          %s883 = scalar_lea.sflag [#allocation5], %s882
          %s884 = sand.u32 %s479, 1
          %s885 = smul.addr %s884, 192
          %s886 = scalar_lea.vmem [#allocation14], %s885
          %s888 = ssub.s32 3072, 3072
          %889 = vsyncadd %s883, %s888
          %s890 = smul.addr %s70, 48
          %s891 = smul.addr %s890, 64
          %s892 = scalar_lea.hbm %s39, %s891
          %s893 = sshll.u32 %s886, 4
          %s894 = int_to_ptr.vmem [resolvable:$true] %s893
          %899 = dma.hbm_to_vmem [thread:$0]  %s892, 3072, %s894, %s883, 192, 192, 12
        $region112: #{joint_diffusion_transformer_forward.1} parent=107 // pred_fallthru
          _
        // Predicated region
        $region113: #{joint_diffusion_transformer_forward.1} parent=107 // pred_check
          %p900 = pneg %p515
        $region114: #{joint_diffusion_transformer_forward.1} parent=107 // pred_check_branch
          %902 = sbr.rel (%p900) target = $region116
        $region115: #{joint_diffusion_transformer_forward.1} parent=107 // pred_region
          %s903 = sand.u32 %s70, 1
          %s904 = scalar_lea.sflag [#allocation5], %s903
          %s905 = sand.u32 %s505, 1
          %s906 = smul.addr %s905, 128
          %s907 = scalar_lea.vmem [#allocation15], %s906
          %s909 = ssub.s32 2048, 2048
          %910 = vsyncadd %s904, %s909
          %s911 = smul.addr %s70, 32
          %s912 = smul.addr %s911, 64
          %s913 = scalar_lea.hbm %s41, %s912
          %s914 = sshll.u32 %s907, 4
          %s915 = int_to_ptr.vmem [resolvable:$true] %s914
          %920 = dma.hbm_to_vmem [thread:$0]  %s913, 2048, %s915, %s904, 128, 128, 8
        $region116: #{joint_diffusion_transformer_forward.1} parent=107 // pred_fallthru
          _
        // Predicated region
        $region117: #{joint_diffusion_transformer_forward.1} parent=107 // pred_check
          %p921 = pneg %p541
        $region118: #{joint_diffusion_transformer_forward.1} parent=107 // pred_check_branch
          %923 = sbr.rel (%p921) target = $region120
        $region119: #{joint_diffusion_transformer_forward.1} parent=107 // pred_region
          %s924 = sand.u32 %s70, 1
          %s925 = scalar_lea.sflag [#allocation5], %s924
          %s926 = sand.u32 %s531, 1
          %s927 = smul.addr %s926, 512
          %s928 = scalar_lea.vmem [#allocation16], %s927
          %s930 = ssub.s32 8192, 8192
          %931 = vsyncadd %s925, %s930
          %s932 = smul.addr %s70, 128
          %s933 = smul.addr %s932, 64
          %s934 = scalar_lea.hbm %s43, %s933
          %s935 = sshll.u32 %s928, 4
          %s936 = int_to_ptr.vmem [resolvable:$true] %s935
          %941 = dma.hbm_to_vmem [thread:$0]  %s934, 8192, %s936, %s925, 64, 64, 4
        $region120: #{joint_diffusion_transformer_forward.1} parent=107 // pred_fallthru
          _
        // Predicated region
        $region121: #{joint_diffusion_transformer_forward.1} parent=107 // pred_check
          %p942 = pneg %p567
        $region122: #{joint_diffusion_transformer_forward.1} parent=107 // pred_check_branch
          %944 = sbr.rel (%p942) target = $region124
        $region123: #{joint_diffusion_transformer_forward.1} parent=107 // pred_region
          %s945 = sand.u32 %s70, 1
          %s946 = scalar_lea.sflag [#allocation5], %s945
          %s947 = sand.u32 %s557, 1
          %s948 = smul.addr %s947, 6
          %s949 = scalar_lea.vmem [#allocation17], %s948
          %s951 = ssub.s32 96, 96
          %952 = vsyncadd %s946, %s951
          %s953 = smul.addr %s70, 3
          %s954 = smul.addr %s953, 32
          %s955 = scalar_lea.hbm %s45, %s954
          %s957 = sshll.u32 %s949, 4
          %s958 = int_to_ptr.vmem [resolvable:$true] %s957
          %960 = dma.hbm_to_vmem [thread:$0]  %s955, 96, %s958, %s946
        $region124: #{joint_diffusion_transformer_forward.1} parent=107 // pred_fallthru
          _
        // Predicated region
        $region125: #{joint_diffusion_transformer_forward.1} parent=107 // pred_check
          %p961 = pneg %p593
        $region126: #{joint_diffusion_transformer_forward.1} parent=107 // pred_check_branch
          %963 = sbr.rel (%p961) target = $region128
        $region127: #{joint_diffusion_transformer_forward.1} parent=107 // pred_region
          %s964 = sand.u32 %s70, 1
          %s965 = scalar_lea.sflag [#allocation5], %s964
          %s966 = sand.u32 %s583, 1
          %s967 = smul.addr %s966, 4
          %s968 = scalar_lea.vmem [#allocation18], %s967
          %s970 = ssub.s32 64, 64
          %971 = vsyncadd %s965, %s970
          %s972 = smul.addr %s70, 64
          %s973 = scalar_lea.hbm %s47, %s972
          %s975 = sshll.u32 %s968, 4
          %s976 = int_to_ptr.vmem [resolvable:$true] %s975
          %978 = dma.hbm_to_vmem [thread:$0]  %s973, 64, %s976, %s965
        $region128: #{joint_diffusion_transformer_forward.1} parent=107 // pred_fallthru
          _
      $region108: #{joint_diffusion_transformer_forward.1} parent=5 // pred_fallthru
        _
      %p979 = scmp.le.s32.totalorder 1, %s70
      %p980 = scmp.lt.s32.totalorder %s70, 4
      %p981 = pnand %p979, %p980
      %p982 = pneg %p981
      // Predicated region
      $region129: #{joint_diffusion_transformer_forward.1} parent=5 // pred_check
        _
      $region130: #{joint_diffusion_transformer_forward.1} parent=5 // pred_check_branch
        %984 = sbr.rel (%p981) target = $region132
      $region131: #{joint_diffusion_transformer_forward.1} parent=5 // pred_region
        %s985 = ssub.s32 %s70, 1
        // Predicated region
        $region133: #{joint_diffusion_transformer_forward.1} parent=131 // pred_check
          %p986 = pneg %p301
        $region134: #{joint_diffusion_transformer_forward.1} parent=131 // pred_check_branch
          %988 = sbr.rel (%p986) target = $region136
        $region135: #{joint_diffusion_transformer_forward.1} parent=131 // pred_region
          %989 = dma.done [#allocation5], 16
        $region136: #{joint_diffusion_transformer_forward.1} parent=131 // pred_fallthru
          _
        // Predicated region
        $region137: #{joint_diffusion_transformer_forward.1} parent=131 // pred_check
          %p990 = pneg %p322
        $region138: #{joint_diffusion_transformer_forward.1} parent=131 // pred_check_branch
          %992 = sbr.rel (%p990) target = $region140
        $region139: #{joint_diffusion_transformer_forward.1} parent=131 // pred_region
          %993 = dma.done [#allocation7], 32
        $region140: #{joint_diffusion_transformer_forward.1} parent=131 // pred_fallthru
          _
        // Predicated region
        $region141: #{joint_diffusion_transformer_forward.1} parent=131 // pred_check
          %p994 = pneg %p343
        $region142: #{joint_diffusion_transformer_forward.1} parent=131 // pred_check_branch
          %996 = sbr.rel (%p994) target = $region144
        $region143: #{joint_diffusion_transformer_forward.1} parent=131 // pred_region
          %997 = dma.done [#allocation7], 16
        $region144: #{joint_diffusion_transformer_forward.1} parent=131 // pred_fallthru
          _
        // Predicated region
        $region145: #{joint_diffusion_transformer_forward.1} parent=131 // pred_check
          %p998 = pneg %p364
        $region146: #{joint_diffusion_transformer_forward.1} parent=131 // pred_check_branch
          %1000 = sbr.rel (%p998) target = $region148
        $region147: #{joint_diffusion_transformer_forward.1} parent=131 // pred_region
          %1001 = dma.done [#allocation10], 128
        $region148: #{joint_diffusion_transformer_forward.1} parent=131 // pred_fallthru
          _
        // Predicated region
        $region149: #{joint_diffusion_transformer_forward.1} parent=131 // pred_check
          %p1002 = pneg %p385
        $region150: #{joint_diffusion_transformer_forward.1} parent=131 // pred_check_branch
          %1004 = sbr.rel (%p1002) target = $region152
        $region151: #{joint_diffusion_transformer_forward.1} parent=131 // pred_region
          %1005 = dma.done [#allocation10], 16
        $region152: #{joint_diffusion_transformer_forward.1} parent=131 // pred_fallthru
          _
        // Predicated region
        $region153: #{joint_diffusion_transformer_forward.1} parent=131 // pred_check
          %p1006 = pneg %p427
        $region154: #{joint_diffusion_transformer_forward.1} parent=131 // pred_check_branch
          %1008 = sbr.rel (%p1006) target = $region156
        $region155: #{joint_diffusion_transformer_forward.1} parent=131 // pred_region
          %1009 = dma.done [#allocation13], 16
        $region156: #{joint_diffusion_transformer_forward.1} parent=131 // pred_fallthru
          _
        %s1010 = sand.u32 %s75, 1
        %s1011 = scalar_lea.sflag [#allocation5], %s1010
        %s1012 = sand.u32 %s482, 1
        %s1013 = smul.addr %s1012, 192
        %s1014 = scalar_lea.vmem [#allocation14], %s1013
        // Predicated region
        $region157: #{joint_diffusion_transformer_forward.1} parent=131 // pred_check
          %p1015 = pneg %p495
        $region158: #{joint_diffusion_transformer_forward.1} parent=131 // pred_check_branch
          %1017 = sbr.rel (%p1015) target = $region160
        $region159: #{joint_diffusion_transformer_forward.1} parent=131 // pred_region
          %1018 = dma.done %s1011, 3072
        $region160: #{joint_diffusion_transformer_forward.1} parent=131 // pred_fallthru
          _
        %s1019 = sand.u32 %s75, 1
        %s1020 = scalar_lea.sflag [#allocation5], %s1019
        %s1021 = sand.u32 %s508, 1
        %s1022 = smul.addr %s1021, 128
        %s1023 = scalar_lea.vmem [#allocation15], %s1022
        // Predicated region
        $region161: #{joint_diffusion_transformer_forward.1} parent=131 // pred_check
          %p1024 = pneg %p521
        $region162: #{joint_diffusion_transformer_forward.1} parent=131 // pred_check_branch
          %1026 = sbr.rel (%p1024) target = $region164
        $region163: #{joint_diffusion_transformer_forward.1} parent=131 // pred_region
          %1027 = dma.done %s1020, 2048
        $region164: #{joint_diffusion_transformer_forward.1} parent=131 // pred_fallthru
          _
        %s1028 = sand.u32 %s75, 1
        %s1029 = scalar_lea.sflag [#allocation5], %s1028
        %s1030 = sand.u32 %s534, 1
        %s1031 = smul.addr %s1030, 512
        %s1032 = scalar_lea.vmem [#allocation16], %s1031
        // Predicated region
        $region165: #{joint_diffusion_transformer_forward.1} parent=131 // pred_check
          %p1033 = pneg %p547
        $region166: #{joint_diffusion_transformer_forward.1} parent=131 // pred_check_branch
          %1035 = sbr.rel (%p1033) target = $region168
        $region167: #{joint_diffusion_transformer_forward.1} parent=131 // pred_region
          %1036 = dma.done %s1029, 8192
        $region168: #{joint_diffusion_transformer_forward.1} parent=131 // pred_fallthru
          _
        %s1037 = sand.u32 %s75, 1
        %s1038 = scalar_lea.sflag [#allocation5], %s1037
        %s1039 = sand.u32 %s560, 1
        %s1040 = smul.addr %s1039, 6
        %s1041 = scalar_lea.vmem [#allocation17], %s1040
        // Predicated region
        $region169: #{joint_diffusion_transformer_forward.1} parent=131 // pred_check
          %p1042 = pneg %p573
        $region170: #{joint_diffusion_transformer_forward.1} parent=131 // pred_check_branch
          %1044 = sbr.rel (%p1042) target = $region172
        $region171: #{joint_diffusion_transformer_forward.1} parent=131 // pred_region
          %1045 = dma.done %s1038, 96
        $region172: #{joint_diffusion_transformer_forward.1} parent=131 // pred_fallthru
          _
        %s1046 = sand.u32 %s75, 1
        %s1047 = scalar_lea.sflag [#allocation5], %s1046
        %s1048 = sand.u32 %s586, 1
        %s1049 = smul.addr %s1048, 4
        %s1050 = scalar_lea.vmem [#allocation18], %s1049
        // Predicated region
        $region173: #{joint_diffusion_transformer_forward.1} parent=131 // pred_check
          %p1051 = pneg %p599
        $region174: #{joint_diffusion_transformer_forward.1} parent=131 // pred_check_branch
          %1053 = sbr.rel (%p1051) target = $region176
        $region175: #{joint_diffusion_transformer_forward.1} parent=131 // pred_region
          %1054 = dma.done %s1047, 64
        $region176: #{joint_diffusion_transformer_forward.1} parent=131 // pred_fallthru
          _
        // Predicated region
        $region177: #{joint_diffusion_transformer_forward.1} parent=131 // pred_check
          %p1055 = pneg %p641
        $region178: #{joint_diffusion_transformer_forward.1} parent=131 // pred_check_branch
          %1057 = sbr.rel (%p1055) target = $region180
        $region179: #{joint_diffusion_transformer_forward.1} parent=131 // pred_region
          %1058 = dma.done [#allocation7], 32
        $region180: #{joint_diffusion_transformer_forward.1} parent=131 // pred_fallthru
          _
        // Predicated region
        $region181: #{joint_diffusion_transformer_forward.1} parent=131 // pred_check
          %p1059 = pneg %p683
        $region182: #{joint_diffusion_transformer_forward.1} parent=131 // pred_check_branch
          %1061 = sbr.rel (%p1059) target = $region184
        $region183: #{joint_diffusion_transformer_forward.1} parent=131 // pred_region
          %1062 = dma.done [#allocation10], 16
        $region184: #{joint_diffusion_transformer_forward.1} parent=131 // pred_fallthru
          _
        %p1063 = pneg %p91
        %p1064 = pneg %p88
        %p1065 = pneg %p112
        %p1066 = pneg %p109
        %p1067 = pneg %p133
        %p1068 = pneg %p130
        %p1069 = pneg %p154
        %p1070 = pneg %p151
        %p1071 = pneg %p175
        %p1072 = pneg %p172
        %p1073 = pneg %p196
        %p1074 = pneg %p193
        %p1075 = pneg %p217
        %p1076 = pneg %p214
        %p1077 = pneg %p238
        %p1078 = pneg %p235
        %p1079 = pneg %p259
        %p1080 = pneg %p256
        %p1081 = pneg %p280
        %p1082 = pneg %p277
        %p1083 = pneg %p301
        %p1084 = pneg %p298
        %p1085 = pneg %p322
        %p1086 = pneg %p319
        %p1087 = pneg %p343
        %p1088 = pneg %p340
        %p1089 = pneg %p364
        %p1090 = pneg %p361
        %p1091 = pneg %p385
        %p1092 = pneg %p382
        %p1093 = pneg %p406
        %p1094 = pneg %p403
        %p1095 = pneg %p427
        %p1096 = pneg %p424
        %p1097 = pneg %p448
        %p1098 = pneg %p445
        %p1099 = pneg %p469
        %p1100 = pneg %p466
        %s1101 = sand.u32 %s75, 1
        %s1102 = scalar_lea.sflag [#allocation5], %s1101
        %s1103 = sand.u32 %s482, 1
        %s1104 = smul.addr %s1103, 192
        %s1105 = scalar_lea.vmem [#allocation14], %s1104
        %p1106 = pneg %p495
        %p1107 = pneg %p492
        %s1108 = sand.u32 %s75, 1
        %s1109 = scalar_lea.sflag [#allocation5], %s1108
        %s1110 = sand.u32 %s508, 1
        %s1111 = smul.addr %s1110, 128
        %s1112 = scalar_lea.vmem [#allocation15], %s1111
        %p1113 = pneg %p521
        %p1114 = pneg %p518
        %s1115 = sand.u32 %s75, 1
        %s1116 = scalar_lea.sflag [#allocation5], %s1115
        %s1117 = sand.u32 %s534, 1
        %s1118 = smul.addr %s1117, 512
        %s1119 = scalar_lea.vmem [#allocation16], %s1118
        %p1120 = pneg %p547
        %p1121 = pneg %p544
        %s1122 = sand.u32 %s75, 1
        %s1123 = scalar_lea.sflag [#allocation5], %s1122
        %s1124 = sand.u32 %s560, 1
        %s1125 = smul.addr %s1124, 6
        %s1126 = scalar_lea.vmem [#allocation17], %s1125
        %p1127 = pneg %p573
        %p1128 = pneg %p570
        %s1129 = sand.u32 %s75, 1
        %s1130 = scalar_lea.sflag [#allocation5], %s1129
        %s1131 = sand.u32 %s586, 1
        %s1132 = smul.addr %s1131, 4
        %s1133 = scalar_lea.vmem [#allocation18], %s1132
        %p1134 = pneg %p599
        %p1135 = pneg %p596
        %p1136 = pneg %p620
        %p1137 = pneg %p617
        %p1138 = pneg %p641
        %p1139 = pneg %p638
        %p1140 = pneg %p662
        %p1141 = pneg %p659
        %p1142 = pneg %p683
        %p1143 = pneg %p680
        %p1144 = pneg %p704
        %p1145 = pneg %p701
        %p1146 = pneg %p725
        %p1147 = pneg %p722
        %p1149 = scmp.eq.s32.totalorder %s75, 0
        // Predicated region
        $region185: #{joint_diffusion_transformer_forward.1} parent=131 // pred_check
          %p1150 = pneg %p1149
        $region186: #{joint_diffusion_transformer_forward.1} parent=131 // pred_check_branch
          %1152 = sbr.rel (%p1150) target = $region188
        $region187: #{joint_diffusion_transformer_forward.1} parent=131 // pred_region
          %v1153 = vld [vmem:[%s1] sm:$0xff]
          %v1154 = vld [vmem:[%s1 + $0x8] sm:$0xff]
          %v1155 = vlaneseq
          %v1156 = vand.u32 %v1155, 127
          %1157 = vset.pattern.permute.xlu0 0
          %1158 = vperm.xlu0 %1157, %v1153
          %v1159 = vpop.permute.xlu0 %1158
          %1160 = vset.pattern.permute.xlu0 0
          %1161 = vperm.xlu0 %1160, %v1154
          %v1162 = vpop.permute.xlu0 %1161
          %vm1163 = vcmp.eq.s32.totalorder %v1159, %v1156
          %vm1164 = vcmp.eq.s32.totalorder %v1162, %v1156
          %v1165 = vsel %vm1163, 1, 0
          %v1166 = vsel %vm1164, 1, 0
          %v1167 = vcvt.s32.f32 %v1165
          %v1168 = vcvt.s32.f32 %v1166
          %v1169 = vld [vmem:[%s13] sm:$0xff]
          %v1170 = vld [vmem:[%s13 + $0x8] sm:$0xff]
          %v1171 = vpack.c.bf16 %v1170, %v1169
          %v1172 = vld [vmem:[#allocation6] sm:$0x3]
          %v1173 = vld [vmem:[#allocation8] sm:$0x1]
          %v1175 = vlaneseq
          %v1176 = vshrl.u32 %v1175, 7
          %v1177 = vsub.s32 0, %v1176
          %v1178 = vrot.slane %v1173, %v1177
          %vm1180 = vcmask 23552
          %v1182 = vsel %vm1180, %v1171, 0
          %vm1184 = vcmask 1040384
          %vm1185 = vcmask 1041408
          %v1186 = vsel %vm1184, 4294967295, 65535
          %v1187 = vsel %vm1185, %v1186, 0
          %v1189 = vand.u32 %v1172, %v1187
          %1191 = vmatprep.subr.bf16.mxu0 0
          %1192 = vmatpush1.bf16.msra.mxu0 %v1189
          %1193 = vmatprep.subr.bf16.mxu0 0
          %1194 = vmatpush1.bf16.msra.mxu0 0
          %1195 = vmatprep.subr.bf16.mxu0 0
          %1196 = vmatpush1.bf16.msra.mxu0 0
          %1197 = vmatprep.subr.bf16.mxu0 0
          %1198 = vmatpush1.bf16.msra.mxu0 0
          %1199 = vmatprep.subr.bf16.mxu0 0
          %1200 = vmatpush1.bf16.msra.mxu0 0
          %1201 = vmatprep.subr.bf16.mxu0 0
          %1202 = vmatpush1.bf16.msra.mxu0 0
          %1203 = vmatprep.subr.bf16.mxu0 0
          %1204 = vmatpush1.bf16.msra.mxu0 0
          %1205 = vmatprep.subr.bf16.mxu0 0
          %1206 = vmatpush1.bf16.msra.mxu0 0
          %1207 = vmatprep.subr.bf16.mxu0 0
          %1208 = vmatpush1.bf16.msra.mxu0 0
          %1209 = vmatprep.subr.bf16.mxu0 0
          %1210 = vmatpush1.bf16.msra.mxu0 0
          %1211 = vmatprep.subr.bf16.mxu0 0
          %1212 = vmatpush1.bf16.msra.mxu0 0
          %1213 = vmatprep.subr.bf16.mxu0 0
          %1214 = vmatpush1.bf16.msra.mxu0 0
          %1215 = vmatprep.subr.bf16.mxu0 0
          %1216 = vmatpush1.bf16.msra.mxu0 0
          %1217 = vmatprep.subr.bf16.mxu0 0
          %1218 = vmatpush1.bf16.msra.mxu0 0
          %1219 = vmatprep.subr.bf16.mxu0 0
          %1220 = vmatpush1.bf16.msra.mxu0 0
          %1221 = vmatprep.subr.bf16.mxu0 0
          %1222 = vmatpush1.bf16.msra.mxu0 0
          %1223 = vmatprep.mubr.bf16.mxu0 0
          %1224 = vmatmul.mubr.bf16.gmra.mrb[0].mxu0 %v1182
          %v1225 = vpop.f32.mrb[0].mxu0
          %v1226 = vadd.f32 %v1178, %v1225
          %v1227 = vpop.f32.mrb[0].mxu0
          %v1228 = vpop.f32.mrb[0].mxu0
          %v1229 = vadd.f32 %v1178, %v1228
          %v1230 = vpop.f32.mrb[0].mxu0
          %1231 = vdwg.mxu0
          %v1232 = vld [vmem:[%s17] sm:$0x3]
          %v1233 = vpack.c.bf16 %v1232, %v1232
          %v1234 = vld [vmem:[#allocation9] sm:$0xf]
          %v1235 = vld [vmem:[#allocation9 + $0x4] sm:$0x1]
          %v1236 = vld [vmem:[#allocation11] sm:$0x1]
          %v1238 = vlaneseq
          %v1239 = vshrl.u32 %v1238, 7
          %v1240 = vsub.s32 0, %v1239
          %v1241 = vrot.slane %v1236, %v1240
          %v1245 = vunpack.c.l.b16 %v1234
          %v1246 = vunpack.c.l.b16 %v1235
          %v1247 = vpack.c.b16 %v1246, %v1245
          %vm1248 = vcmask 72704
          %v1250 = vsel %vm1248, %v1233, 0
          %vm1252 = vcmask 1043456
          %vm1253 = vcmask 1044480
          %v1254 = vsel %vm1252, 4294967295, 65535
          %v1255 = vsel %vm1253, %v1254, 0
          %v1257 = vand.u32 %v1247, %v1255
          %1259 = vmatprep.subr.bf16.mxu0 0
          %1260 = vmatpush1.bf16.msra.mxu0 %v1257
          %1261 = vmatprep.subr.bf16.mxu0 0
          %1262 = vmatpush1.bf16.msra.mxu0 0
          %1263 = vmatprep.subr.bf16.mxu0 0
          %1264 = vmatpush1.bf16.msra.mxu0 0
          %1265 = vmatprep.subr.bf16.mxu0 0
          %1266 = vmatpush1.bf16.msra.mxu0 0
          %1267 = vmatprep.subr.bf16.mxu0 0
          %1268 = vmatpush1.bf16.msra.mxu0 0
          %1269 = vmatprep.subr.bf16.mxu0 0
          %1270 = vmatpush1.bf16.msra.mxu0 0
          %1271 = vmatprep.subr.bf16.mxu0 0
          %1272 = vmatpush1.bf16.msra.mxu0 0
          %1273 = vmatprep.subr.bf16.mxu0 0
          %1274 = vmatpush1.bf16.msra.mxu0 0
          %1275 = vmatprep.subr.bf16.mxu0 0
          %1276 = vmatpush1.bf16.msra.mxu0 0
          %1277 = vmatprep.subr.bf16.mxu0 0
          %1278 = vmatpush1.bf16.msra.mxu0 0
          %1279 = vmatprep.subr.bf16.mxu0 0
          %1280 = vmatpush1.bf16.msra.mxu0 0
          %1281 = vmatprep.subr.bf16.mxu0 0
          %1282 = vmatpush1.bf16.msra.mxu0 0
          %1283 = vmatprep.subr.bf16.mxu0 0
          %1284 = vmatpush1.bf16.msra.mxu0 0
          %1285 = vmatprep.subr.bf16.mxu0 0
          %1286 = vmatpush1.bf16.msra.mxu0 0
          %1287 = vmatprep.subr.bf16.mxu0 0
          %1288 = vmatpush1.bf16.msra.mxu0 0
          %1289 = vmatprep.subr.bf16.mxu0 0
          %1290 = vmatpush1.bf16.msra.mxu0 0
          %1291 = vmatprep.mubr.bf16.mxu0 0
          %1292 = vmatmul.mubr.bf16.gmra.mrb[0].mxu0 %v1250
          %v1293 = vpop.f32.mrb[0].mxu0
          %v1294 = vadd.f32 %v1241, %v1293
          %v1295 = vpop.f32.mrb[0].mxu0
          %v1296 = vpop.f32.mrb[0].mxu0
          %v1297 = vpop.f32.mrb[0].mxu0
          %1298 = vdwg.mxu0
          %v1299 = vld [vmem:[%s15] sm:$0x3]
          %v1300 = vadd.f32 %v1299, %v1294
          %v1301 = vpack.c.bf16 %v1300, %v1300
          %v1302 = vld [vmem:[%s3] sm:$0xff]
          %v1303 = vld [vmem:[%s3 + $0x8] sm:$0xff]
          %1304 = vset.pattern.permute.xlu0 0
          %1305 = vperm.xlu0 %1304, %v1302
          %v1306 = vpop.permute.xlu0 %1305
          %1307 = vset.pattern.permute.xlu0 0
          %1308 = vperm.xlu0 %1307, %v1303
          %v1309 = vpop.permute.xlu0 %1308
          %vm1310 = vcmp.eq.s32.totalorder %v1306, %v1156
          %vm1311 = vcmp.eq.s32.totalorder %v1309, %v1156
          %v1312 = vsel %vm1310, 1, 0
          %v1313 = vsel %vm1311, 1, 0
          %v1314 = vcvt.s32.f32 %v1312
          %v1315 = vcvt.s32.f32 %v1313
          %v1316 = vpack.c.bf16 %v1315, %v1314
          %v1317 = vadd.f32 %v1167, %v1226
          %v1318 = vadd.f32 %v1168, %v1229
          %vm1319 = vcmask 15360
          %v1321 = vsel %vm1319, %v1316, 0
          %v1324 = vsel %vm1184, %v1301, 0
          %1326 = vmatprep.subr.bf16.mxu0 0
          %1327 = vmatpush1.bf16.msra.mxu0 %v1324
          %1328 = vmatprep.subr.bf16.mxu0 0
          %1329 = vmatpush1.bf16.msra.mxu0 0
          %1330 = vmatprep.subr.bf16.mxu0 0
          %1331 = vmatpush1.bf16.msra.mxu0 0
          %1332 = vmatprep.subr.bf16.mxu0 0
          %1333 = vmatpush1.bf16.msra.mxu0 0
          %1334 = vmatprep.subr.bf16.mxu0 0
          %1335 = vmatpush1.bf16.msra.mxu0 0
          %1336 = vmatprep.subr.bf16.mxu0 0
          %1337 = vmatpush1.bf16.msra.mxu0 0
          %1338 = vmatprep.subr.bf16.mxu0 0
          %1339 = vmatpush1.bf16.msra.mxu0 0
          %1340 = vmatprep.subr.bf16.mxu0 0
          %1341 = vmatpush1.bf16.msra.mxu0 0
          %1342 = vmatprep.subr.bf16.mxu0 0
          %1343 = vmatpush1.bf16.msra.mxu0 0
          %1344 = vmatprep.subr.bf16.mxu0 0
          %1345 = vmatpush1.bf16.msra.mxu0 0
          %1346 = vmatprep.subr.bf16.mxu0 0
          %1347 = vmatpush1.bf16.msra.mxu0 0
          %1348 = vmatprep.subr.bf16.mxu0 0
          %1349 = vmatpush1.bf16.msra.mxu0 0
          %1350 = vmatprep.subr.bf16.mxu0 0
          %1351 = vmatpush1.bf16.msra.mxu0 0
          %1352 = vmatprep.subr.bf16.mxu0 0
          %1353 = vmatpush1.bf16.msra.mxu0 0
          %1354 = vmatprep.subr.bf16.mxu0 0
          %1355 = vmatpush1.bf16.msra.mxu0 0
          %1356 = vmatprep.subr.bf16.mxu0 0
          %1357 = vmatpush1.bf16.msra.mxu0 0
          %1358 = vmatprep.mubr.bf16.mxu0 0
          %1359 = vmatmul.mubr.bf16.gmra.mrb[0].mxu0 %v1321
          %v1360 = vpop.f32.mrb[0].mxu0
          %v1361 = vadd.f32 0.0, %v1360
          %v1362 = vpop.f32.mrb[0].mxu0
          %v1363 = vpop.f32.mrb[0].mxu0
          %v1364 = vadd.f32 0.0, %v1363
          %v1365 = vpop.f32.mrb[0].mxu0
          %1366 = vdwg.mxu0
          %v1367 = vadd.f32 %v1317, %v1361
          %v1368 = vadd.f32 %v1318, %v1364
          %v1369 = vpack.c.bf16 %v1368, %v1367
          %v1370 = vld [vmem:[%s31] sm:$0xf]
          %v1371 = vld [vmem:[%s31 + $0x4] sm:$0xf]
          %v1372 = vld [vmem:[%s31 + $0x8] sm:$0xf]
          %v1373 = vld [vmem:[%s31 + $0xc] sm:$0xf]
          %v1374 = vld [vmem:[%s31 + $0x10] sm:$0xf]
          %v1375 = vld [vmem:[%s31 + $0x14] sm:$0xf]
          %v1376 = vld [vmem:[%s31 + $0x18] sm:$0xf]
          %v1377 = vld [vmem:[%s31 + $0x1c] sm:$0xf]
          %v1378 = vld [vmem:[%s31 + $0x20] sm:$0xf]
          %v1379 = vld [vmem:[%s31 + $0x24] sm:$0xf]
          %v1380 = vld [vmem:[%s31 + $0x28] sm:$0xf]
          %v1381 = vld [vmem:[%s31 + $0x2c] sm:$0xf]
          %v1382 = vld [vmem:[%s31 + $0x30] sm:$0xf]
          %v1383 = vld [vmem:[%s31 + $0x34] sm:$0xf]
          %v1384 = vld [vmem:[%s31 + $0x38] sm:$0xf]
          %v1385 = vld [vmem:[%s31 + $0x3c] sm:$0xf]
          %v1386 = vld [vmem:[#allocation12] sm:$0x1]
          %v1388 = vlaneseq
          %v1389 = vshrl.u32 %v1388, 7
          %v1390 = vsub.s32 0, %v1389
          %v1391 = vrot.slane %v1386, %v1390
          %v1409 = vunpack.c.l.b16 %v1370
          %v1410 = vunpack.c.l.b16 %v1371
          %v1411 = vunpack.c.l.b16 %v1372
          %v1412 = vunpack.c.l.b16 %v1373
          %v1413 = vunpack.c.l.b16 %v1374
          %v1414 = vunpack.c.l.b16 %v1375
          %v1415 = vunpack.c.l.b16 %v1376
          %v1416 = vunpack.c.l.b16 %v1377
          %v1417 = vunpack.c.l.b16 %v1378
          %v1418 = vunpack.c.l.b16 %v1379
          %v1419 = vunpack.c.l.b16 %v1380
          %v1420 = vunpack.c.l.b16 %v1381
          %v1421 = vunpack.c.l.b16 %v1382
          %v1422 = vunpack.c.l.b16 %v1383
          %v1423 = vunpack.c.l.b16 %v1384
          %v1424 = vunpack.c.l.b16 %v1385
          %v1425 = vpack.c.b16 %v1410, %v1409
          %v1426 = vpack.c.b16 %v1412, %v1411
          %v1427 = vpack.c.b16 %v1414, %v1413
          %v1428 = vpack.c.b16 %v1416, %v1415
          %v1429 = vpack.c.b16 %v1418, %v1417
          %v1430 = vpack.c.b16 %v1420, %v1419
          %v1431 = vpack.c.b16 %v1422, %v1421
          %v1432 = vpack.c.b16 %v1424, %v1423
          %1441 = vmatprep.subr.bf16.mxu0 0
          %1442 = vmatpush1.bf16.msra.mxu0 %v1425
          %1443 = vmatprep.subr.bf16.mxu0 0
          %1444 = vmatpush1.bf16.msra.mxu0 %v1426
          %1445 = vmatprep.subr.bf16.mxu0 0
          %1446 = vmatpush1.bf16.msra.mxu0 %v1427
          %1447 = vmatprep.subr.bf16.mxu0 0
          %1448 = vmatpush1.bf16.msra.mxu0 %v1428
          %1449 = vmatprep.subr.bf16.mxu0 0
          %1450 = vmatpush1.bf16.msra.mxu0 %v1429
          %1451 = vmatprep.subr.bf16.mxu0 0
          %1452 = vmatpush1.bf16.msra.mxu0 %v1430
          %1453 = vmatprep.subr.bf16.mxu0 0
          %1454 = vmatpush1.bf16.msra.mxu0 %v1431
          %1455 = vmatprep.subr.bf16.mxu0 0
          %1456 = vmatpush1.bf16.msra.mxu0 %v1432
          %1457 = vmatprep.subr.bf16.mxu0 0
          %1458 = vmatpush1.bf16.msra.mxu0 0
          %1459 = vmatprep.subr.bf16.mxu0 0
          %1460 = vmatpush1.bf16.msra.mxu0 0
          %1461 = vmatprep.subr.bf16.mxu0 0
          %1462 = vmatpush1.bf16.msra.mxu0 0
          %1463 = vmatprep.subr.bf16.mxu0 0
          %1464 = vmatpush1.bf16.msra.mxu0 0
          %1465 = vmatprep.subr.bf16.mxu0 0
          %1466 = vmatpush1.bf16.msra.mxu0 0
          %1467 = vmatprep.subr.bf16.mxu0 0
          %1468 = vmatpush1.bf16.msra.mxu0 0
          %1469 = vmatprep.subr.bf16.mxu0 0
          %1470 = vmatpush1.bf16.msra.mxu0 0
          %1471 = vmatprep.subr.bf16.mxu0 0
          %1472 = vmatpush1.bf16.msra.mxu0 0
          %1473 = vmatprep.mubr.bf16.mxu0 0
          %1474 = vmatmul.mubr.bf16.gmra.mrb[0].mxu0 %v1369
          %v1475 = vpop.f32.mrb[0].mxu0
          %v1476 = vadd.f32 %v1391, %v1475
          %v1477 = vpop.f32.mrb[0].mxu0
          %v1478 = vpop.f32.mrb[0].mxu0
          %v1479 = vadd.f32 %v1391, %v1478
          %v1480 = vpop.f32.mrb[0].mxu0
          %1481 = vdwg.mxu0
          %1482 = vst [vmem:[#allocation2] sm:$0xff] %v1476
          %1483 = vst [vmem:[#allocation2 + $0x8] sm:$0xff] %v1479
          %v1484 = vld [vmem:[%s19] sm:$0xff]
          %v1485 = vld [vmem:[%s19 + $0x8] sm:$0xff]
          %v1486 = vld [vmem:[%s19 + $0x10] sm:$0xff]
          %v1487 = vld [vmem:[%s19 + $0x18] sm:$0xff]
          %v1488 = vld [vmem:[%s19 + $0x20] sm:$0xff]
          %v1489 = vld [vmem:[%s19 + $0x28] sm:$0xff]
          %v1490 = vmul.f32 %v1484, %v1484
          %v1491 = vmul.f32 %v1485, %v1485
          %v1492 = vmul.f32 %v1486, %v1486
          %v1493 = vmul.f32 %v1487, %v1487
          %v1494 = vmul.f32 %v1488, %v1488
          %v1495 = vmul.f32 %v1489, %v1489
          %v1496 = vsel %vm1180, %v1490, 0.0
          %1497 = vadd.xlane.f32.xlu0 %v1496
          %v1498 = vpop.xlane.xlu0 %1497
          %v1499 = vsel %vm1180, %v1491, 0.0
          %1500 = vadd.xlane.f32.xlu0 %v1499
          %v1501 = vpop.xlane.xlu0 %1500
          %v1502 = vsel %vm1180, %v1492, 0.0
          %1503 = vadd.xlane.f32.xlu0 %v1502
          %v1504 = vpop.xlane.xlu0 %1503
          %v1505 = vsel %vm1180, %v1493, 0.0
          %1506 = vadd.xlane.f32.xlu0 %v1505
          %v1507 = vpop.xlane.xlu0 %1506
          %v1508 = vsel %vm1180, %v1494, 0.0
          %1509 = vadd.xlane.f32.xlu0 %v1508
          %v1510 = vpop.xlane.xlu0 %1509
          %v1511 = vsel %vm1180, %v1495, 0.0
          %1512 = vadd.xlane.f32.xlu0 %v1511
          %v1513 = vpop.xlane.xlu0 %1512
          %v1514 = vrsqrt.pop %v1498
          %v1515 = vmul.f32 %v1498, %v1514
          %vm1516 = vcmp.eq.f32.partialorder %v1498, inf
          %v1517 = vsel %vm1516, %v1498, %v1515
          %vm1518 = vcmp.eq.f32.partialorder %v1498, 0.0
          %v1519 = vand.u32 %v1498, 2147483648
          %v1520 = vsel %vm1518, %v1519, %v1517
          %v1521 = vrsqrt.pop %v1501
          %v1522 = vmul.f32 %v1501, %v1521
          %vm1523 = vcmp.eq.f32.partialorder %v1501, inf
          %v1524 = vsel %vm1523, %v1501, %v1522
          %vm1525 = vcmp.eq.f32.partialorder %v1501, 0.0
          %v1526 = vand.u32 %v1501, 2147483648
          %v1527 = vsel %vm1525, %v1526, %v1524
          %v1528 = vrsqrt.pop %v1504
          %v1529 = vmul.f32 %v1504, %v1528
          %vm1530 = vcmp.eq.f32.partialorder %v1504, inf
          %v1531 = vsel %vm1530, %v1504, %v1529
          %vm1532 = vcmp.eq.f32.partialorder %v1504, 0.0
          %v1533 = vand.u32 %v1504, 2147483648
          %v1534 = vsel %vm1532, %v1533, %v1531
          %v1535 = vrsqrt.pop %v1507
          %v1536 = vmul.f32 %v1507, %v1535
          %vm1537 = vcmp.eq.f32.partialorder %v1507, inf
          %v1538 = vsel %vm1537, %v1507, %v1536
          %vm1539 = vcmp.eq.f32.partialorder %v1507, 0.0
          %v1540 = vand.u32 %v1507, 2147483648
          %v1541 = vsel %vm1539, %v1540, %v1538
          %v1542 = vrsqrt.pop %v1510
          %v1543 = vmul.f32 %v1510, %v1542
          %vm1544 = vcmp.eq.f32.partialorder %v1510, inf
          %v1545 = vsel %vm1544, %v1510, %v1543
          %vm1546 = vcmp.eq.f32.partialorder %v1510, 0.0
          %v1547 = vand.u32 %v1510, 2147483648
          %v1548 = vsel %vm1546, %v1547, %v1545
          %v1549 = vrsqrt.pop %v1513
          %v1550 = vmul.f32 %v1513, %v1549
          %vm1551 = vcmp.eq.f32.partialorder %v1513, inf
          %v1552 = vsel %vm1551, %v1513, %v1550
          %vm1553 = vcmp.eq.f32.partialorder %v1513, 0.0
          %v1554 = vand.u32 %v1513, 2147483648
          %v1555 = vsel %vm1553, %v1554, %v1552
          %v1556 = vrcp.pop %v1520
          %v1557 = vrcp.pop %v1527
          %v1558 = vrcp.pop %v1534
          %v1559 = vrcp.pop %v1541
          %v1560 = vrcp.pop %v1548
          %v1561 = vrcp.pop %v1555
          %v1562 = vmul.f32 %v1556, -0.75
          %v1563 = vmul.f32 %v1557, -0.75
          %v1564 = vmul.f32 %v1558, -0.75
          %v1565 = vmul.f32 %v1559, -0.75
          %v1566 = vmul.f32 %v1560, -0.75
          %v1567 = vmul.f32 %v1561, -0.75
          %v1568 = vld [vmem:[#allocation4] sm:$0x1]
          %v1570 = vlaneseq
          %v1571 = vshrl.u32 %v1570, 7
          %v1572 = vsub.s32 0, %v1571
          %v1573 = vrot.slane %v1568, %v1572
          %v1575 = vsub.f32 %v1562, %v1573
          %v1576 = vsub.f32 %v1563, %v1573
          %v1577 = vsub.f32 %v1564, %v1573
          %v1578 = vsub.f32 %v1565, %v1573
          %v1579 = vsub.f32 %v1566, %v1573
          %v1580 = vsub.f32 %v1567, %v1573
          %v1581 = vmul.f32 %v1575, %v1575
          %v1582 = vmul.f32 %v1576, %v1576
          %v1583 = vmul.f32 %v1577, %v1577
          %v1584 = vmul.f32 %v1578, %v1578
          %v1585 = vmul.f32 %v1579, %v1579
          %v1586 = vmul.f32 %v1580, %v1580
          %v1587 = vmul.f32 %v1581, -31.75
          %v1588 = vmul.f32 %v1582, -31.75
          %v1589 = vmul.f32 %v1583, -31.75
          %v1590 = vmul.f32 %v1584, -31.75
          %v1591 = vmul.f32 %v1585, -31.75
          %v1592 = vmul.f32 %v1586, -31.75
          %v1593 = vmul.f32 %v1587, 1.442695
          %v1594 = vpow.pop %v1593
          %v1595 = vmul.f32 %v1588, 1.442695
          %v1596 = vpow.pop %v1595
          %v1597 = vmul.f32 %v1589, 1.442695
          %v1598 = vpow.pop %v1597
          %v1599 = vmul.f32 %v1590, 1.442695
          %v1600 = vpow.pop %v1599
          %v1601 = vmul.f32 %v1591, 1.442695
          %v1602 = vpow.pop %v1601
          %v1603 = vmul.f32 %v1592, 1.442695
          %v1604 = vpow.pop %v1603
          %v1605 = vpack.c.bf16 %v1596, %v1594
          %v1606 = vpack.c.bf16 %v1600, %v1598
          %v1607 = vpack.c.bf16 %v1604, %v1602
          %v1608 = vld [vmem:[%s35] sm:$0xf]
          %v1609 = vld [vmem:[%s35 + $0x4] sm:$0xf]
          %v1610 = vld [vmem:[%s35 + $0x8] sm:$0xf]
          %v1611 = vld [vmem:[%s35 + $0xc] sm:$0xf]
          %v1612 = vld [vmem:[%s35 + $0x10] sm:$0xf]
          %v1613 = vld [vmem:[%s35 + $0x14] sm:$0xf]
          %v1614 = vld [vmem:[%s35 + $0x18] sm:$0xf]
          %v1615 = vld [vmem:[%s35 + $0x1c] sm:$0xf]
          %v1616 = vld [vmem:[%s35 + $0x20] sm:$0xf]
          %v1617 = vld [vmem:[%s35 + $0x24] sm:$0xf]
          %v1618 = vld [vmem:[%s35 + $0x28] sm:$0xf]
          %v1619 = vld [vmem:[%s35 + $0x2c] sm:$0xf]
          %v1620 = vld [vmem:[%s35 + $0x30] sm:$0xf]
          %v1621 = vld [vmem:[%s35 + $0x34] sm:$0xf]
          %v1622 = vld [vmem:[%s35 + $0x38] sm:$0xf]
          %v1623 = vld [vmem:[%s35 + $0x3c] sm:$0xf]
          %v1624 = vld [vmem:[%s37] sm:$0x1]
          %v1626 = vlaneseq
          %v1627 = vshrl.u32 %v1626, 7
          %v1628 = vsub.s32 0, %v1627
          %v1629 = vrot.slane %v1624, %v1628
          %v1647 = vunpack.c.l.b16 %v1608
          %v1648 = vunpack.c.l.b16 %v1609
          %v1649 = vunpack.c.l.b16 %v1610
          %v1650 = vunpack.c.l.b16 %v1611
          %v1651 = vunpack.c.l.b16 %v1612
          %v1652 = vunpack.c.l.b16 %v1613
          %v1653 = vunpack.c.l.b16 %v1614
          %v1654 = vunpack.c.l.b16 %v1615
          %v1655 = vunpack.c.l.b16 %v1616
          %v1656 = vunpack.c.l.b16 %v1617
          %v1657 = vunpack.c.l.b16 %v1618
          %v1658 = vunpack.c.l.b16 %v1619
          %v1659 = vunpack.c.l.b16 %v1620
          %v1660 = vunpack.c.l.b16 %v1621
          %v1661 = vunpack.c.l.b16 %v1622
          %v1662 = vunpack.c.l.b16 %v1623
          %v1663 = vpack.c.b16 %v1648, %v1647
          %v1664 = vpack.c.b16 %v1650, %v1649
          %v1665 = vpack.c.b16 %v1652, %v1651
          %v1666 = vpack.c.b16 %v1654, %v1653
          %v1667 = vpack.c.b16 %v1656, %v1655
          %v1668 = vpack.c.b16 %v1658, %v1657
          %v1669 = vpack.c.b16 %v1660, %v1659
          %v1670 = vpack.c.b16 %v1662, %v1661
          %1679 = vmatprep.subr.bf16.mxu0 0
          %1680 = vmatpush1.bf16.msra.mxu0 %v1663
          %1681 = vmatprep.subr.bf16.mxu0 0
          %1682 = vmatpush1.bf16.msra.mxu0 %v1664
          %1683 = vmatprep.subr.bf16.mxu0 0
          %1684 = vmatpush1.bf16.msra.mxu0 %v1665
          %1685 = vmatprep.subr.bf16.mxu0 0
          %1686 = vmatpush1.bf16.msra.mxu0 %v1666
          %1687 = vmatprep.subr.bf16.mxu0 0
          %1688 = vmatpush1.bf16.msra.mxu0 %v1667
          %1689 = vmatprep.subr.bf16.mxu0 0
          %1690 = vmatpush1.bf16.msra.mxu0 %v1668
          %1691 = vmatprep.subr.bf16.mxu0 0
          %1692 = vmatpush1.bf16.msra.mxu0 %v1669
          %1693 = vmatprep.subr.bf16.mxu0 0
          %1694 = vmatpush1.bf16.msra.mxu0 %v1670
          %1695 = vmatprep.subr.bf16.mxu0 0
          %1696 = vmatpush1.bf16.msra.mxu0 0
          %1697 = vmatprep.subr.bf16.mxu0 0
          %1698 = vmatpush1.bf16.msra.mxu0 0
          %1699 = vmatprep.subr.bf16.mxu0 0
          %1700 = vmatpush1.bf16.msra.mxu0 0
          %1701 = vmatprep.subr.bf16.mxu0 0
          %1702 = vmatpush1.bf16.msra.mxu0 0
          %1703 = vmatprep.subr.bf16.mxu0 0
          %1704 = vmatpush1.bf16.msra.mxu0 0
          %1705 = vmatprep.subr.bf16.mxu0 0
          %1706 = vmatpush1.bf16.msra.mxu0 0
          %1707 = vmatprep.subr.bf16.mxu0 0
          %1708 = vmatpush1.bf16.msra.mxu0 0
          %1709 = vmatprep.subr.bf16.mxu0 0
          %1710 = vmatpush1.bf16.msra.mxu0 0
          %1711 = vmatprep.mubr.bf16.mxu0 0
          %1712 = vmatmul.mubr.bf16.gmra.mrb[0].mxu0 %v1605
          %v1713 = vpop.f32.mrb[0].mxu0
          %v1714 = vadd.f32 %v1629, %v1713
          %v1715 = vpop.f32.mrb[0].mxu0
          %v1716 = vpop.f32.mrb[0].mxu0
          %v1717 = vadd.f32 %v1629, %v1716
          %v1718 = vpop.f32.mrb[0].mxu0
          %1719 = vmatprep.mubr.bf16.mxu0 0
          %1720 = vmatmul.mubr.bf16.gmra.mrb[0].mxu0 %v1606
          %v1721 = vpop.f32.mrb[0].mxu0
          %v1722 = vadd.f32 %v1629, %v1721
          %v1723 = vpop.f32.mrb[0].mxu0
          %v1724 = vpop.f32.mrb[0].mxu0
          %v1725 = vadd.f32 %v1629, %v1724
          %v1726 = vpop.f32.mrb[0].mxu0
          %1727 = vmatprep.mubr.bf16.mxu0 0
          %1728 = vmatmul.mubr.bf16.gmra.mrb[0].mxu0 %v1607
          %v1729 = vpop.f32.mrb[0].mxu0
          %v1730 = vadd.f32 %v1629, %v1729
          %v1731 = vpop.f32.mrb[0].mxu0
          %v1732 = vpop.f32.mrb[0].mxu0
          %v1733 = vadd.f32 %v1629, %v1732
          %v1734 = vpop.f32.mrb[0].mxu0
          %1735 = vdwg.mxu0
          %v1736 = vmax.f32 %v1714, 0.0
          %v1737 = vmax.f32 %v1717, 0.0
          %v1738 = vmax.f32 %v1722, 0.0
          %v1739 = vmax.f32 %v1725, 0.0
          %v1740 = vmax.f32 %v1730, 0.0
          %v1741 = vmax.f32 %v1733, 0.0
          %v1742 = vand.u32 2147483647, %v1714
          %v1743 = vand.u32 2147483647, %v1717
          %v1744 = vand.u32 2147483647, %v1722
          %v1745 = vand.u32 2147483647, %v1725
          %v1746 = vand.u32 2147483647, %v1730
          %v1747 = vand.u32 2147483647, %v1733
          %v1748 = vsub.f32 0.0, %v1742
          %v1749 = vsub.f32 0.0, %v1743
          %v1750 = vsub.f32 0.0, %v1744
          %v1751 = vsub.f32 0.0, %v1745
          %v1752 = vsub.f32 0.0, %v1746
          %v1753 = vsub.f32 0.0, %v1747
          %v1754 = vmul.f32 %v1748, 1.442695
          %v1755 = vpow.pop %v1754
          %v1756 = vmul.f32 %v1749, 1.442695
          %v1757 = vpow.pop %v1756
          %v1758 = vmul.f32 %v1750, 1.442695
          %v1759 = vpow.pop %v1758
          %v1760 = vmul.f32 %v1751, 1.442695
          %v1761 = vpow.pop %v1760
          %v1762 = vmul.f32 %v1752, 1.442695
          %v1763 = vpow.pop %v1762
          %v1764 = vmul.f32 %v1753, 1.442695
          %v1765 = vpow.pop %v1764
          %v1766 = vadd.f32 %v1755, 1.0
          %v1767 = vlog2.pop %v1766
          %v1768 = vmul.f32 %v1767, 0.6931472
          %v1769 = vmul.f32 -0.5, %v1755
          %v1770 = vadd.f32 %v1769, 1.0
          %v1771 = vmul.f32 %v1770, %v1755
          %v1772 = vand.u32 2147483647, %v1755
          %vm1773 = vcmp.lt.f32.partialorder %v1772, 0.0004427343
          %v1774 = vsel %vm1773, %v1771, %v1768
          %v1775 = vadd.f32 %v1757, 1.0
          %v1776 = vlog2.pop %v1775
          %v1777 = vmul.f32 %v1776, 0.6931472
          %v1778 = vmul.f32 -0.5, %v1757
          %v1779 = vadd.f32 %v1778, 1.0
          %v1780 = vmul.f32 %v1779, %v1757
          %v1781 = vand.u32 2147483647, %v1757
          %vm1782 = vcmp.lt.f32.partialorder %v1781, 0.0004427343
          %v1783 = vsel %vm1782, %v1780, %v1777
          %v1784 = vadd.f32 %v1759, 1.0
          %v1785 = vlog2.pop %v1784
          %v1786 = vmul.f32 %v1785, 0.6931472
          %v1787 = vmul.f32 -0.5, %v1759
          %v1788 = vadd.f32 %v1787, 1.0
          %v1789 = vmul.f32 %v1788, %v1759
          %v1790 = vand.u32 2147483647, %v1759
          %vm1791 = vcmp.lt.f32.partialorder %v1790, 0.0004427343
          %v1792 = vsel %vm1791, %v1789, %v1786
          %v1793 = vadd.f32 %v1761, 1.0
          %v1794 = vlog2.pop %v1793
          %v1795 = vmul.f32 %v1794, 0.6931472
          %v1796 = vmul.f32 -0.5, %v1761
          %v1797 = vadd.f32 %v1796, 1.0
          %v1798 = vmul.f32 %v1797, %v1761
          %v1799 = vand.u32 2147483647, %v1761
          %vm1800 = vcmp.lt.f32.partialorder %v1799, 0.0004427343
          %v1801 = vsel %vm1800, %v1798, %v1795
          %v1802 = vadd.f32 %v1763, 1.0
          %v1803 = vlog2.pop %v1802
          %v1804 = vmul.f32 %v1803, 0.6931472
          %v1805 = vmul.f32 -0.5, %v1763
          %v1806 = vadd.f32 %v1805, 1.0
          %v1807 = vmul.f32 %v1806, %v1763
          %v1808 = vand.u32 2147483647, %v1763
          %vm1809 = vcmp.lt.f32.partialorder %v1808, 0.0004427343
          %v1810 = vsel %vm1809, %v1807, %v1804
          %v1811 = vadd.f32 %v1765, 1.0
          %v1812 = vlog2.pop %v1811
          %v1813 = vmul.f32 %v1812, 0.6931472
          %v1814 = vmul.f32 -0.5, %v1765
          %v1815 = vadd.f32 %v1814, 1.0
          %v1816 = vmul.f32 %v1815, %v1765
          %v1817 = vand.u32 2147483647, %v1765
          %vm1818 = vcmp.lt.f32.partialorder %v1817, 0.0004427343
          %v1819 = vsel %vm1818, %v1816, %v1813
          %v1820 = vadd.f32 %v1736, %v1774
          %v1821 = vadd.f32 %v1737, %v1783
          %v1822 = vadd.f32 %v1738, %v1792
          %v1823 = vadd.f32 %v1739, %v1801
          %v1824 = vadd.f32 %v1740, %v1810
          %v1825 = vadd.f32 %v1741, %v1819
          %v1826 = vpack.c.bf16 %v1821, %v1820
          %v1827 = vpack.c.bf16 %v1823, %v1822
          %v1828 = vpack.c.bf16 %v1825, %v1824
          %1829 = vst [vmem:[#allocation3] sm:$0xff] %v1826
          %1830 = vst [vmem:[#allocation3 + $0x8] sm:$0xff] %v1827
          %1831 = vst [vmem:[#allocation3 + $0x10] sm:$0xff] %v1828
        $region188: #{joint_diffusion_transformer_forward.1} parent=131 // pred_fallthru
          _
        %v1832 = vld [vmem:[#allocation2] sm:$0xff]
        %v1833 = vld [vmem:[#allocation2 + $0x8] sm:$0xff]
        %v1834 = vpack.c.bf16 %v1833, %v1832
        %v1835 = vld [vmem:[#allocation3] sm:$0xff]
        %v1836 = vld [vmem:[#allocation3 + $0x8] sm:$0xff]
        %v1837 = vld [vmem:[#allocation3 + $0x10] sm:$0xff]
        %v1838 = vld [vmem:[%s1041] sm:$0x3f]
        %v1839 = vld [vmem:[%s1050] sm:$0xf]
        %v1840 = vld [vmem:[%s1014] sm:$0xff]
        %v1841 = vld [vmem:[%s1014 + $0x8] sm:$0xf]
        %v1842 = vld [vmem:[%s1014 + $0xc] sm:$0xff]
        %v1843 = vld [vmem:[%s1014 + $0x14] sm:$0xf]
        %v1844 = vld [vmem:[%s1014 + $0x18] sm:$0xff]
        %v1845 = vld [vmem:[%s1014 + $0x20] sm:$0xf]
        %v1846 = vld [vmem:[%s1014 + $0x24] sm:$0xff]
        %v1847 = vld [vmem:[%s1014 + $0x2c] sm:$0xf]
        %v1848 = vld [vmem:[%s1014 + $0x30] sm:$0xff]
        %v1849 = vld [vmem:[%s1014 + $0x38] sm:$0xf]
        %v1850 = vld [vmem:[%s1014 + $0x3c] sm:$0xff]
        %v1851 = vld [vmem:[%s1014 + $0x44] sm:$0xf]
        %v1852 = vld [vmem:[%s1014 + $0x48] sm:$0xff]
        %v1853 = vld [vmem:[%s1014 + $0x50] sm:$0xf]
        %v1854 = vld [vmem:[%s1014 + $0x54] sm:$0xff]
        %v1855 = vld [vmem:[%s1014 + $0x5c] sm:$0xf]
        %v1856 = vld [vmem:[%s1014 + $0x60] sm:$0xff]
        %v1857 = vld [vmem:[%s1014 + $0x68] sm:$0xf]
        %v1858 = vld [vmem:[%s1014 + $0x6c] sm:$0xff]
        %v1859 = vld [vmem:[%s1014 + $0x74] sm:$0xf]
        %v1860 = vld [vmem:[%s1014 + $0x78] sm:$0xff]
        %v1861 = vld [vmem:[%s1014 + $0x80] sm:$0xf]
        %v1862 = vld [vmem:[%s1014 + $0x84] sm:$0xff]
        %v1863 = vld [vmem:[%s1014 + $0x8c] sm:$0xf]
        %v1864 = vld [vmem:[%s1014 + $0x90] sm:$0xff]
        %v1865 = vld [vmem:[%s1014 + $0x98] sm:$0xf]
        %v1866 = vld [vmem:[%s1014 + $0x9c] sm:$0xff]
        %v1867 = vld [vmem:[%s1014 + $0xa4] sm:$0xf]
        %v1868 = vld [vmem:[%s1014 + $0xa8] sm:$0xff]
        %v1869 = vld [vmem:[%s1014 + $0xb0] sm:$0xf]
        %v1870 = vld [vmem:[%s1014 + $0xb4] sm:$0xff]
        %v1871 = vld [vmem:[%s1014 + $0xbc] sm:$0xf]
        %v1873 = vlaneseq
        %v1874 = vshrl.u32 %v1873, 7
        %v1875 = vsub.s32 0, %v1874
        %v1876 = vrot.slane %v1838, %v1875
        %v1877 = vlaneseq
        %v1878 = vshrl.u32 %v1877, 7
        %v1879 = vsub.s32 2, %v1878
        %v1880 = vrot.slane %v1838, %v1879
        %v1881 = vlaneseq
        %v1882 = vshrl.u32 %v1881, 7
        %v1883 = vsub.s32 4, %v1882
        %v1884 = vrot.slane %v1838, %v1883
        %v1888 = vlaneseq
        %v1889 = vshrl.u32 %v1888, 7
        %v1890 = vsub.s32 0, %v1889
        %v1891 = vrot.slane %v1876, %v1890
        %v1892 = vlaneseq
        %v1893 = vshrl.u32 %v1892, 7
        %v1894 = vsub.s32 0, %v1893
        %v1895 = vrot.slane %v1880, %v1894
        %v1896 = vlaneseq
        %v1897 = vshrl.u32 %v1896, 7
        %v1898 = vsub.s32 0, %v1897
        %v1899 = vrot.slane %v1884, %v1898
        %v1932 = vunpack.c.l.b16 %v1840
        %v1933 = vunpack.c.h.b16 %v1840
        %v1934 = vunpack.c.l.b16 %v1841
        %v1935 = vunpack.c.l.b16 %v1842
        %v1936 = vunpack.c.h.b16 %v1842
        %v1937 = vunpack.c.l.b16 %v1843
        %v1938 = vunpack.c.l.b16 %v1844
        %v1939 = vunpack.c.h.b16 %v1844
        %v1940 = vunpack.c.l.b16 %v1845
        %v1941 = vunpack.c.l.b16 %v1846
        %v1942 = vunpack.c.h.b16 %v1846
        %v1943 = vunpack.c.l.b16 %v1847
        %v1944 = vunpack.c.l.b16 %v1848
        %v1945 = vunpack.c.h.b16 %v1848
        %v1946 = vunpack.c.l.b16 %v1849
        %v1947 = vunpack.c.l.b16 %v1850
        %v1948 = vunpack.c.h.b16 %v1850
        %v1949 = vunpack.c.l.b16 %v1851
        %v1950 = vunpack.c.l.b16 %v1852
        %v1951 = vunpack.c.h.b16 %v1852
        %v1952 = vunpack.c.l.b16 %v1853
        %v1953 = vunpack.c.l.b16 %v1854
        %v1954 = vunpack.c.h.b16 %v1854
        %v1955 = vunpack.c.l.b16 %v1855
        %v1956 = vunpack.c.l.b16 %v1856
        %v1957 = vunpack.c.h.b16 %v1856
        %v1958 = vunpack.c.l.b16 %v1857
        %v1959 = vunpack.c.l.b16 %v1858
        %v1960 = vunpack.c.h.b16 %v1858
        %v1961 = vunpack.c.l.b16 %v1859
        %v1962 = vunpack.c.l.b16 %v1860
        %v1963 = vunpack.c.h.b16 %v1860
        %v1964 = vunpack.c.l.b16 %v1861
        %v1965 = vunpack.c.l.b16 %v1862
        %v1966 = vunpack.c.h.b16 %v1862
        %v1967 = vunpack.c.l.b16 %v1863
        %v1968 = vunpack.c.l.b16 %v1864
        %v1969 = vunpack.c.h.b16 %v1864
        %v1970 = vunpack.c.l.b16 %v1865
        %v1971 = vunpack.c.l.b16 %v1866
        %v1972 = vunpack.c.h.b16 %v1866
        %v1973 = vunpack.c.l.b16 %v1867
        %v1974 = vunpack.c.l.b16 %v1868
        %v1975 = vunpack.c.h.b16 %v1868
        %v1976 = vunpack.c.l.b16 %v1869
        %v1977 = vunpack.c.l.b16 %v1870
        %v1978 = vunpack.c.h.b16 %v1870
        %v1979 = vunpack.c.l.b16 %v1871
        %v1980 = vpack.c.b16 %v1935, %v1932
        %v1981 = vpack.c.b16 %v1936, %v1933
        %v1982 = vpack.c.b16 %v1937, %v1934
        %v1983 = vpack.c.b16 %v1941, %v1938
        %v1984 = vpack.c.b16 %v1942, %v1939
        %v1985 = vpack.c.b16 %v1943, %v1940
        %v1986 = vpack.c.b16 %v1947, %v1944
        %v1987 = vpack.c.b16 %v1948, %v1945
        %v1988 = vpack.c.b16 %v1949, %v1946
        %v1989 = vpack.c.b16 %v1953, %v1950
        %v1990 = vpack.c.b16 %v1954, %v1951
        %v1991 = vpack.c.b16 %v1955, %v1952
        %v1992 = vpack.c.b16 %v1959, %v1956
        %v1993 = vpack.c.b16 %v1960, %v1957
        %v1994 = vpack.c.b16 %v1961, %v1958
        %v1995 = vpack.c.b16 %v1965, %v1962
        %v1996 = vpack.c.b16 %v1966, %v1963
        %v1997 = vpack.c.b16 %v1967, %v1964
        %v1998 = vpack.c.b16 %v1971, %v1968
        %v1999 = vpack.c.b16 %v1972, %v1969
        %v2000 = vpack.c.b16 %v1973, %v1970
        %v2001 = vpack.c.b16 %v1977, %v1974
        %v2002 = vpack.c.b16 %v1978, %v1975
        %v2003 = vpack.c.b16 %v1979, %v1976
        %2028 = vmatprep.subr.bf16.mxu0 %v1981
        %2029 = vmatpush1.bf16.msra.mxu0 %v1980
        %2030 = vmatprep.subr.bf16.mxu0 %v1984
        %2031 = vmatpush1.bf16.msra.mxu0 %v1983
        %2032 = vmatprep.subr.bf16.mxu0 %v1987
        %2033 = vmatpush1.bf16.msra.mxu0 %v1986
        %2034 = vmatprep.subr.bf16.mxu0 %v1990
        %2035 = vmatpush1.bf16.msra.mxu0 %v1989
        %2036 = vmatprep.subr.bf16.mxu0 %v1993
        %2037 = vmatpush1.bf16.msra.mxu0 %v1992
        %2038 = vmatprep.subr.bf16.mxu0 %v1996
        %2039 = vmatpush1.bf16.msra.mxu0 %v1995
        %2040 = vmatprep.subr.bf16.mxu0 %v1999
        %2041 = vmatpush1.bf16.msra.mxu0 %v1998
        %2042 = vmatprep.subr.bf16.mxu0 %v2002
        %2043 = vmatpush1.bf16.msra.mxu0 %v2001
        %2044 = vmatprep.subr.bf16.mxu0 0
        %2045 = vmatpush1.bf16.msra.mxu0 0
        %2046 = vmatprep.subr.bf16.mxu0 0
        %2047 = vmatpush1.bf16.msra.mxu0 0
        %2048 = vmatprep.subr.bf16.mxu0 0
        %2049 = vmatpush1.bf16.msra.mxu0 0
        %2050 = vmatprep.subr.bf16.mxu0 0
        %2051 = vmatpush1.bf16.msra.mxu0 0
        %2052 = vmatprep.subr.bf16.mxu0 0
        %2053 = vmatpush1.bf16.msra.mxu0 0
        %2054 = vmatprep.subr.bf16.mxu0 0
        %2055 = vmatpush1.bf16.msra.mxu0 0
        %2056 = vmatprep.subr.bf16.mxu0 0
        %2057 = vmatpush1.bf16.msra.mxu0 0
        %2058 = vmatprep.subr.bf16.mxu0 0
        %2059 = vmatpush1.bf16.msra.mxu0 0
        %2060 = vmatprep.mubr.bf16.mxu0 0
        %2061 = vmatmul.mubr.bf16.gmra.mrb[0].mxu0 %v1834
        %v2062 = vpop.f32.mrb[0].mxu0
        %v2063 = vadd.f32 %v1891, %v2062
        %v2064 = vpop.f32.mrb[0].mxu0
        %v2065 = vadd.f32 %v1895, %v2064
        %v2066 = vpop.f32.mrb[0].mxu0
        %v2067 = vadd.f32 %v1891, %v2066
        %v2068 = vpop.f32.mrb[0].mxu0
        %v2069 = vadd.f32 %v1895, %v2068
        %2070 = vdwg.mxu0
        %2071 = vmatprep.subr.bf16.mxu0 0
        %2072 = vmatpush1.bf16.msra.mxu0 %v1982
        %2073 = vmatprep.subr.bf16.mxu0 0
        %2074 = vmatpush1.bf16.msra.mxu0 %v1985
        %2075 = vmatprep.subr.bf16.mxu0 0
        %2076 = vmatpush1.bf16.msra.mxu0 %v1988
        %2077 = vmatprep.subr.bf16.mxu0 0
        %2078 = vmatpush1.bf16.msra.mxu0 %v1991
        %2079 = vmatprep.subr.bf16.mxu0 0
        %2080 = vmatpush1.bf16.msra.mxu0 %v1994
        %2081 = vmatprep.subr.bf16.mxu0 0
        %2082 = vmatpush1.bf16.msra.mxu0 %v1997
        %2083 = vmatprep.subr.bf16.mxu0 0
        %2084 = vmatpush1.bf16.msra.mxu0 %v2000
        %2085 = vmatprep.subr.bf16.mxu0 0
        %2086 = vmatpush1.bf16.msra.mxu0 %v2003
        %2087 = vmatprep.subr.bf16.mxu0 0
        %2088 = vmatpush1.bf16.msra.mxu0 0
        %2089 = vmatprep.subr.bf16.mxu0 0
        %2090 = vmatpush1.bf16.msra.mxu0 0
        %2091 = vmatprep.subr.bf16.mxu0 0
        %2092 = vmatpush1.bf16.msra.mxu0 0
        %2093 = vmatprep.subr.bf16.mxu0 0
        %2094 = vmatpush1.bf16.msra.mxu0 0
        %2095 = vmatprep.subr.bf16.mxu0 0
        %2096 = vmatpush1.bf16.msra.mxu0 0
        %2097 = vmatprep.subr.bf16.mxu0 0
        %2098 = vmatpush1.bf16.msra.mxu0 0
        %2099 = vmatprep.subr.bf16.mxu0 0
        %2100 = vmatpush1.bf16.msra.mxu0 0
        %2101 = vmatprep.subr.bf16.mxu0 0
        %2102 = vmatpush1.bf16.msra.mxu0 0
        %2103 = vmatprep.mubr.bf16.mxu0 0
        %2104 = vmatmul.mubr.bf16.gmra.mrb[0].mxu0 %v1834
        %v2105 = vpop.f32.mrb[0].mxu0
        %v2106 = vadd.f32 %v1899, %v2105
        %v2107 = vpop.f32.mrb[0].mxu0
        %v2108 = vpop.f32.mrb[0].mxu0
        %v2109 = vadd.f32 %v1899, %v2108
        %v2110 = vpop.f32.mrb[0].mxu0
        %2111 = vdwg.mxu0
        %v2112 = vpack.c.bf16 %v2067, %v2063
        %v2113 = vpack.c.bf16 %v2069, %v2065
        %v2114 = vpack.c.bf16 %v2109, %v2106
        %v2115 = vld [vmem:[%s1032] sm:$0xf]
        %v2116 = vld [vmem:[%s1032 + $0x4] sm:$0xf]
        %v2117 = vld [vmem:[%s1032 + $0x8] sm:$0xf]
        %v2118 = vld [vmem:[%s1032 + $0xc] sm:$0xf]
        %v2119 = vld [vmem:[%s1032 + $0x10] sm:$0xf]
        %v2120 = vld [vmem:[%s1032 + $0x14] sm:$0xf]
        %v2121 = vld [vmem:[%s1032 + $0x18] sm:$0xf]
        %v2122 = vld [vmem:[%s1032 + $0x1c] sm:$0xf]
        %v2123 = vld [vmem:[%s1032 + $0x20] sm:$0xf]
        %v2124 = vld [vmem:[%s1032 + $0x24] sm:$0xf]
        %v2125 = vld [vmem:[%s1032 + $0x28] sm:$0xf]
        %v2126 = vld [vmem:[%s1032 + $0x2c] sm:$0xf]
        %v2127 = vld [vmem:[%s1032 + $0x30] sm:$0xf]
        %v2128 = vld [vmem:[%s1032 + $0x34] sm:$0xf]
        %v2129 = vld [vmem:[%s1032 + $0x38] sm:$0xf]
        %v2130 = vld [vmem:[%s1032 + $0x3c] sm:$0xf]
        %v2131 = vlaneseq
        %v2132 = vshrl.u32 %v2131, 7
        %v2133 = vsub.s32 0, %v2132
        %v2134 = vrot.slane %v1839, %v2133
        %v2151 = vunpack.c.l.b16 %v2115
        %v2152 = vunpack.c.l.b16 %v2116
        %v2153 = vunpack.c.l.b16 %v2117
        %v2154 = vunpack.c.l.b16 %v2118
        %v2155 = vunpack.c.l.b16 %v2119
        %v2156 = vunpack.c.l.b16 %v2120
        %v2157 = vunpack.c.l.b16 %v2121
        %v2158 = vunpack.c.l.b16 %v2122
        %v2159 = vunpack.c.l.b16 %v2123
        %v2160 = vunpack.c.l.b16 %v2124
        %v2161 = vunpack.c.l.b16 %v2125
        %v2162 = vunpack.c.l.b16 %v2126
        %v2163 = vunpack.c.l.b16 %v2127
        %v2164 = vunpack.c.l.b16 %v2128
        %v2165 = vunpack.c.l.b16 %v2129
        %v2166 = vunpack.c.l.b16 %v2130
        %v2167 = vpack.c.b16 %v2152, %v2151
        %v2168 = vpack.c.b16 %v2154, %v2153
        %v2169 = vpack.c.b16 %v2156, %v2155
        %v2170 = vpack.c.b16 %v2158, %v2157
        %v2171 = vpack.c.b16 %v2160, %v2159
        %v2172 = vpack.c.b16 %v2162, %v2161
        %v2173 = vpack.c.b16 %v2164, %v2163
        %v2174 = vpack.c.b16 %v2166, %v2165
        %2183 = vmatprep.subr.bf16.mxu0 0
        %2184 = vmatpush1.bf16.msra.mxu0 %v2167
        %2185 = vmatprep.subr.bf16.mxu0 0
        %2186 = vmatpush1.bf16.msra.mxu0 %v2168
        %2187 = vmatprep.subr.bf16.mxu0 0
        %2188 = vmatpush1.bf16.msra.mxu0 %v2169
        %2189 = vmatprep.subr.bf16.mxu0 0
        %2190 = vmatpush1.bf16.msra.mxu0 %v2170
        %2191 = vmatprep.subr.bf16.mxu0 0
        %2192 = vmatpush1.bf16.msra.mxu0 %v2171
        %2193 = vmatprep.subr.bf16.mxu0 0
        %2194 = vmatpush1.bf16.msra.mxu0 %v2172
        %2195 = vmatprep.subr.bf16.mxu0 0
        %2196 = vmatpush1.bf16.msra.mxu0 %v2173
        %2197 = vmatprep.subr.bf16.mxu0 0
        %2198 = vmatpush1.bf16.msra.mxu0 %v2174
        %2199 = vmatprep.subr.bf16.mxu0 0
        %2200 = vmatpush1.bf16.msra.mxu0 0
        %2201 = vmatprep.subr.bf16.mxu0 0
        %2202 = vmatpush1.bf16.msra.mxu0 0
        %2203 = vmatprep.subr.bf16.mxu0 0
        %2204 = vmatpush1.bf16.msra.mxu0 0
        %2205 = vmatprep.subr.bf16.mxu0 0
        %2206 = vmatpush1.bf16.msra.mxu0 0
        %2207 = vmatprep.subr.bf16.mxu0 0
        %2208 = vmatpush1.bf16.msra.mxu0 0
        %2209 = vmatprep.subr.bf16.mxu0 0
        %2210 = vmatpush1.bf16.msra.mxu0 0
        %2211 = vmatprep.subr.bf16.mxu0 0
        %2212 = vmatpush1.bf16.msra.mxu0 0
        %2213 = vmatprep.subr.bf16.mxu0 0
        %2214 = vmatpush1.bf16.msra.mxu0 0
        %2215 = vmatprep.mubr.bf16.mxu0 0
        %2216 = vmatmul.mubr.bf16.gmra.mrb[0].mxu0 %v1835
        %v2217 = vpop.f32.mrb[0].mxu0
        %v2218 = vadd.f32 %v2134, %v2217
        %v2219 = vpop.f32.mrb[0].mxu0
        %v2220 = vpop.f32.mrb[0].mxu0
        %v2221 = vadd.f32 %v2134, %v2220
        %v2222 = vpop.f32.mrb[0].mxu0
        %2223 = vmatprep.mubr.bf16.mxu0 0
        %2224 = vmatmul.mubr.bf16.gmra.mrb[0].mxu0 %v1836
        %v2225 = vpop.f32.mrb[0].mxu0
        %v2226 = vadd.f32 %v2134, %v2225
        %v2227 = vpop.f32.mrb[0].mxu0
        %v2228 = vpop.f32.mrb[0].mxu0
        %v2229 = vadd.f32 %v2134, %v2228
        %v2230 = vpop.f32.mrb[0].mxu0
        %2231 = vmatprep.mubr.bf16.mxu0 0
        %2232 = vmatmul.mubr.bf16.gmra.mrb[0].mxu0 %v1837
        %v2233 = vpop.f32.mrb[0].mxu0
        %v2234 = vadd.f32 %v2134, %v2233
        %v2235 = vpop.f32.mrb[0].mxu0
        %v2236 = vpop.f32.mrb[0].mxu0
        %v2237 = vadd.f32 %v2134, %v2236
        %v2238 = vpop.f32.mrb[0].mxu0
        %2239 = vdwg.mxu0
        %v2240 = vpack.c.bf16 %v2221, %v2218
        %v2241 = vpack.c.bf16 %v2229, %v2226
        %v2242 = vpack.c.bf16 %v2237, %v2234
        %v2243 = vld [vmem:[%s1023] sm:$0xff]
        %v2244 = vld [vmem:[%s1023 + $0x8] sm:$0xff]
        %v2245 = vld [vmem:[%s1023 + $0x10] sm:$0xff]
        %v2246 = vld [vmem:[%s1023 + $0x18] sm:$0xff]
        %v2247 = vld [vmem:[%s1023 + $0x20] sm:$0xff]
        %v2248 = vld [vmem:[%s1023 + $0x28] sm:$0xff]
        %v2249 = vld [vmem:[%s1023 + $0x30] sm:$0xff]
        %v2250 = vld [vmem:[%s1023 + $0x38] sm:$0xff]
        %v2251 = vld [vmem:[%s1023 + $0x40] sm:$0xff]
        %v2252 = vld [vmem:[%s1023 + $0x48] sm:$0xff]
        %v2253 = vld [vmem:[%s1023 + $0x50] sm:$0xff]
        %v2254 = vld [vmem:[%s1023 + $0x58] sm:$0xff]
        %v2255 = vld [vmem:[%s1023 + $0x60] sm:$0xff]
        %v2256 = vld [vmem:[%s1023 + $0x68] sm:$0xff]
        %v2257 = vld [vmem:[%s1023 + $0x70] sm:$0xff]
        %v2258 = vld [vmem:[%s1023 + $0x78] sm:$0xff]
        %v2259 = vlaneseq
        %v2260 = vshrl.u32 %v2259, 7
        %v2261 = vsub.s32 1, %v2260
        %v2262 = vrot.slane %v1838, %v2261
        %v2263 = vlaneseq
        %v2264 = vshrl.u32 %v2263, 7
        %v2265 = vsub.s32 3, %v2264
        %v2266 = vrot.slane %v1838, %v2265
        %v2269 = vlaneseq
        %v2270 = vshrl.u32 %v2269, 7
        %v2271 = vsub.s32 1, %v2270
        %v2272 = vrot.slane %v2262, %v2271
        %v2273 = vlaneseq
        %v2274 = vshrl.u32 %v2273, 7
        %v2275 = vsub.s32 1, %v2274
        %v2276 = vrot.slane %v2266, %v2275
        %v2293 = vunpack.c.l.b16 %v2243
        %v2294 = vunpack.c.h.b16 %v2243
        %v2295 = vunpack.c.l.b16 %v2244
        %v2296 = vunpack.c.h.b16 %v2244
        %v2297 = vunpack.c.l.b16 %v2245
        %v2298 = vunpack.c.h.b16 %v2245
        %v2299 = vunpack.c.l.b16 %v2246
        %v2300 = vunpack.c.h.b16 %v2246
        %v2301 = vunpack.c.l.b16 %v2247
        %v2302 = vunpack.c.h.b16 %v2247
        %v2303 = vunpack.c.l.b16 %v2248
        %v2304 = vunpack.c.h.b16 %v2248
        %v2305 = vunpack.c.l.b16 %v2249
        %v2306 = vunpack.c.h.b16 %v2249
        %v2307 = vunpack.c.l.b16 %v2250
        %v2308 = vunpack.c.h.b16 %v2250
        %v2309 = vunpack.c.l.b16 %v2251
        %v2310 = vunpack.c.h.b16 %v2251
        %v2311 = vunpack.c.l.b16 %v2252
        %v2312 = vunpack.c.h.b16 %v2252
        %v2313 = vunpack.c.l.b16 %v2253
        %v2314 = vunpack.c.h.b16 %v2253
        %v2315 = vunpack.c.l.b16 %v2254
        %v2316 = vunpack.c.h.b16 %v2254
        %v2317 = vunpack.c.l.b16 %v2255
        %v2318 = vunpack.c.h.b16 %v2255
        %v2319 = vunpack.c.l.b16 %v2256
        %v2320 = vunpack.c.h.b16 %v2256
        %v2321 = vunpack.c.l.b16 %v2257
        %v2322 = vunpack.c.h.b16 %v2257
        %v2323 = vunpack.c.l.b16 %v2258
        %v2324 = vunpack.c.h.b16 %v2258
        %v2325 = vpack.c.b16 %v2295, %v2293
        %v2326 = vpack.c.b16 %v2296, %v2294
        %v2327 = vpack.c.b16 %v2299, %v2297
        %v2328 = vpack.c.b16 %v2300, %v2298
        %v2329 = vpack.c.b16 %v2303, %v2301
        %v2330 = vpack.c.b16 %v2304, %v2302
        %v2331 = vpack.c.b16 %v2307, %v2305
        %v2332 = vpack.c.b16 %v2308, %v2306
        %v2333 = vpack.c.b16 %v2311, %v2309
        %v2334 = vpack.c.b16 %v2312, %v2310
        %v2335 = vpack.c.b16 %v2315, %v2313
        %v2336 = vpack.c.b16 %v2316, %v2314
        %v2337 = vpack.c.b16 %v2319, %v2317
        %v2338 = vpack.c.b16 %v2320, %v2318
        %v2339 = vpack.c.b16 %v2323, %v2321
        %v2340 = vpack.c.b16 %v2324, %v2322
        %2357 = vmatprep.subr.bf16.mxu0 %v2326
        %2358 = vmatpush1.bf16.msra.mxu0 %v2325
        %2359 = vmatprep.subr.bf16.mxu0 %v2328
        %2360 = vmatpush1.bf16.msra.mxu0 %v2327
        %2361 = vmatprep.subr.bf16.mxu0 %v2330
        %2362 = vmatpush1.bf16.msra.mxu0 %v2329
        %2363 = vmatprep.subr.bf16.mxu0 %v2332
        %2364 = vmatpush1.bf16.msra.mxu0 %v2331
        %2365 = vmatprep.subr.bf16.mxu0 %v2334
        %2366 = vmatpush1.bf16.msra.mxu0 %v2333
        %2367 = vmatprep.subr.bf16.mxu0 %v2336
        %2368 = vmatpush1.bf16.msra.mxu0 %v2335
        %2369 = vmatprep.subr.bf16.mxu0 %v2338
        %2370 = vmatpush1.bf16.msra.mxu0 %v2337
        %2371 = vmatprep.subr.bf16.mxu0 %v2340
        %2372 = vmatpush1.bf16.msra.mxu0 %v2339
        %2373 = vmatprep.subr.bf16.mxu0 0
        %2374 = vmatpush1.bf16.msra.mxu0 0
        %2375 = vmatprep.subr.bf16.mxu0 0
        %2376 = vmatpush1.bf16.msra.mxu0 0
        %2377 = vmatprep.subr.bf16.mxu0 0
        %2378 = vmatpush1.bf16.msra.mxu0 0
        %2379 = vmatprep.subr.bf16.mxu0 0
        %2380 = vmatpush1.bf16.msra.mxu0 0
        %2381 = vmatprep.subr.bf16.mxu0 0
        %2382 = vmatpush1.bf16.msra.mxu0 0
        %2383 = vmatprep.subr.bf16.mxu0 0
        %2384 = vmatpush1.bf16.msra.mxu0 0
        %2385 = vmatprep.subr.bf16.mxu0 0
        %2386 = vmatpush1.bf16.msra.mxu0 0
        %2387 = vmatprep.subr.bf16.mxu0 0
        %2388 = vmatpush1.bf16.msra.mxu0 0
        %2389 = vmatprep.mubr.bf16.mxu0 0
        %2390 = vmatmul.mubr.bf16.gmra.mrb[0].mxu0 %v2240
        %v2391 = vpop.f32.mrb[0].mxu0
        %v2392 = vadd.f32 %v2272, %v2391
        %v2393 = vpop.f32.mrb[0].mxu0
        %v2394 = vadd.f32 %v2276, %v2393
        %v2395 = vpop.f32.mrb[0].mxu0
        %v2396 = vadd.f32 %v2272, %v2395
        %v2397 = vpop.f32.mrb[0].mxu0
        %v2398 = vadd.f32 %v2276, %v2397
        %2399 = vmatprep.mubr.bf16.mxu0 0
        %2400 = vmatmul.mubr.bf16.gmra.mrb[0].mxu0 %v2241
        %v2401 = vpop.f32.mrb[0].mxu0
        %v2402 = vadd.f32 %v2272, %v2401
        %v2403 = vpop.f32.mrb[0].mxu0
        %v2404 = vadd.f32 %v2276, %v2403
        %v2405 = vpop.f32.mrb[0].mxu0
        %v2406 = vadd.f32 %v2272, %v2405
        %v2407 = vpop.f32.mrb[0].mxu0
        %v2408 = vadd.f32 %v2276, %v2407
        %2409 = vmatprep.mubr.bf16.mxu0 0
        %2410 = vmatmul.mubr.bf16.gmra.mrb[0].mxu0 %v2242
        %v2411 = vpop.f32.mrb[0].mxu0
        %v2412 = vadd.f32 %v2272, %v2411
        %v2413 = vpop.f32.mrb[0].mxu0
        %v2414 = vadd.f32 %v2276, %v2413
        %v2415 = vpop.f32.mrb[0].mxu0
        %v2416 = vadd.f32 %v2272, %v2415
        %v2417 = vpop.f32.mrb[0].mxu0
        %v2418 = vadd.f32 %v2276, %v2417
        %2419 = vdwg.mxu0
        %v2420 = vld [vmem:[%s9] sm:$0xff]
        %v2421 = vld [vmem:[%s9 + $0x8] sm:$0xff]
        %v2422 = vld [vmem:[%s9 + $0x10] sm:$0xff]
        %v2423 = vld [vmem:[%s9 + $0x18] sm:$0xff]
        %v2424 = vld [vmem:[%s9 + $0x20] sm:$0xff]
        %v2425 = vld [vmem:[%s9 + $0x28] sm:$0xff]
        %v2426 = vlaneseq
        %v2427 = vand.u32 %v2426, 127
        %2428 = vset.pattern.permute.xlu0 0
        %2429 = vperm.xlu0 %2428, %v2420
        %v2430 = vpop.permute.xlu0 %2429
        %2431 = vset.pattern.permute.xlu0 0
        %2432 = vperm.xlu0 %2431, %v2421
        %v2433 = vpop.permute.xlu0 %2432
        %2434 = vset.pattern.permute.xlu0 0
        %2435 = vperm.xlu0 %2434, %v2422
        %v2436 = vpop.permute.xlu0 %2435
        %2437 = vset.pattern.permute.xlu0 0
        %2438 = vperm.xlu0 %2437, %v2423
        %v2439 = vpop.permute.xlu0 %2438
        %2440 = vset.pattern.permute.xlu0 0
        %2441 = vperm.xlu0 %2440, %v2424
        %v2442 = vpop.permute.xlu0 %2441
        %2443 = vset.pattern.permute.xlu0 0
        %2444 = vperm.xlu0 %2443, %v2425
        %v2445 = vpop.permute.xlu0 %2444
        %vm2446 = vcmp.eq.s32.totalorder %v2430, %v2427
        %vm2447 = vcmp.eq.s32.totalorder %v2433, %v2427
        %vm2448 = vcmp.eq.s32.totalorder %v2436, %v2427
        %vm2449 = vcmp.eq.s32.totalorder %v2439, %v2427
        %vm2450 = vcmp.eq.s32.totalorder %v2442, %v2427
        %vm2451 = vcmp.eq.s32.totalorder %v2445, %v2427
        %v2452 = vsel %vm2446, 1, 0
        %v2453 = vsel %vm2447, 1, 0
        %v2454 = vsel %vm2448, 1, 0
        %v2455 = vsel %vm2449, 1, 0
        %v2456 = vsel %vm2450, 1, 0
        %v2457 = vsel %vm2451, 1, 0
        %v2458 = vcvt.s32.f32 %v2452
        %v2459 = vcvt.s32.f32 %v2453
        %v2460 = vcvt.s32.f32 %v2454
        %v2461 = vcvt.s32.f32 %v2455
        %v2462 = vcvt.s32.f32 %v2456
        %v2463 = vcvt.s32.f32 %v2457
        %v2464 = vpack.c.bf16 %v2459, %v2458
        %v2465 = vpack.c.bf16 %v2461, %v2460
        %v2466 = vpack.c.bf16 %v2463, %v2462
        %v2467 = vld [vmem:[%s7] sm:$0xff]
        %v2468 = vld [vmem:[%s7 + $0x8] sm:$0xff]
        %v2469 = vld [vmem:[%s7 + $0x10] sm:$0xff]
        %v2470 = vld [vmem:[%s7 + $0x18] sm:$0xff]
        %v2471 = vld [vmem:[%s7 + $0x20] sm:$0xff]
        %v2472 = vld [vmem:[%s7 + $0x28] sm:$0xff]
        %2473 = vset.pattern.permute.xlu0 0
        %2474 = vperm.xlu0 %2473, %v2467
        %v2475 = vpop.permute.xlu0 %2474
        %2476 = vset.pattern.permute.xlu0 0
        %2477 = vperm.xlu0 %2476, %v2468
        %v2478 = vpop.permute.xlu0 %2477
        %2479 = vset.pattern.permute.xlu0 0
        %2480 = vperm.xlu0 %2479, %v2469
        %v2481 = vpop.permute.xlu0 %2480
        %2482 = vset.pattern.permute.xlu0 0
        %2483 = vperm.xlu0 %2482, %v2470
        %v2484 = vpop.permute.xlu0 %2483
        %2485 = vset.pattern.permute.xlu0 0
        %2486 = vperm.xlu0 %2485, %v2471
        %v2487 = vpop.permute.xlu0 %2486
        %2488 = vset.pattern.permute.xlu0 0
        %2489 = vperm.xlu0 %2488, %v2472
        %v2490 = vpop.permute.xlu0 %2489
        %vm2491 = vcmp.eq.s32.totalorder %v2475, %v2427
        %vm2492 = vcmp.eq.s32.totalorder %v2478, %v2427
        %vm2493 = vcmp.eq.s32.totalorder %v2481, %v2427
        %vm2494 = vcmp.eq.s32.totalorder %v2484, %v2427
        %vm2495 = vcmp.eq.s32.totalorder %v2487, %v2427
        %vm2496 = vcmp.eq.s32.totalorder %v2490, %v2427
        %v2497 = vsel %vm2491, 1, 0
        %v2498 = vsel %vm2492, 1, 0
        %v2499 = vsel %vm2493, 1, 0
        %v2500 = vsel %vm2494, 1, 0
        %v2501 = vsel %vm2495, 1, 0
        %v2502 = vsel %vm2496, 1, 0
        %v2503 = vcvt.s32.f32 %v2497
        %v2504 = vcvt.s32.f32 %v2498
        %v2505 = vcvt.s32.f32 %v2499
        %v2506 = vcvt.s32.f32 %v2500
        %v2507 = vcvt.s32.f32 %v2501
        %v2508 = vcvt.s32.f32 %v2502
        %v2509 = vpack.c.bf16 %v2504, %v2503
        %v2510 = vpack.c.bf16 %v2506, %v2505
        %v2511 = vpack.c.bf16 %v2508, %v2507
        %vm2512 = vcmask 130048
        %v2514 = vsel %vm2512, %v2464, 0
        %v2517 = vsel %vm2512, %v2465, 0
        %v2520 = vsel %vm2512, %v2466, 0
        %2522 = vmatprep.subr.bf16.mxu0 %v2113
        %2523 = vmatpush1.bf16.msra.mxu0 %v2112
        %2524 = vmatprep.subr.bf16.mxu0 0
        %2525 = vmatpush1.bf16.msra.mxu0 0
        %2526 = vmatprep.subr.bf16.mxu0 0
        %2527 = vmatpush1.bf16.msra.mxu0 0
        %2528 = vmatprep.subr.bf16.mxu0 0
        %2529 = vmatpush1.bf16.msra.mxu0 0
        %2530 = vmatprep.subr.bf16.mxu0 0
        %2531 = vmatpush1.bf16.msra.mxu0 0
        %2532 = vmatprep.subr.bf16.mxu0 0
        %2533 = vmatpush1.bf16.msra.mxu0 0
        %2534 = vmatprep.subr.bf16.mxu0 0
        %2535 = vmatpush1.bf16.msra.mxu0 0
        %2536 = vmatprep.subr.bf16.mxu0 0
        %2537 = vmatpush1.bf16.msra.mxu0 0
        %2538 = vmatprep.subr.bf16.mxu0 0
        %2539 = vmatpush1.bf16.msra.mxu0 0
        %2540 = vmatprep.subr.bf16.mxu0 0
        %2541 = vmatpush1.bf16.msra.mxu0 0
        %2542 = vmatprep.subr.bf16.mxu0 0
        %2543 = vmatpush1.bf16.msra.mxu0 0
        %2544 = vmatprep.subr.bf16.mxu0 0
        %2545 = vmatpush1.bf16.msra.mxu0 0
        %2546 = vmatprep.subr.bf16.mxu0 0
        %2547 = vmatpush1.bf16.msra.mxu0 0
        %2548 = vmatprep.subr.bf16.mxu0 0
        %2549 = vmatpush1.bf16.msra.mxu0 0
        %2550 = vmatprep.subr.bf16.mxu0 0
        %2551 = vmatpush1.bf16.msra.mxu0 0
        %2552 = vmatprep.subr.bf16.mxu0 0
        %2553 = vmatpush1.bf16.msra.mxu0 0
        %2554 = vmatprep.mubr.bf16.mxu0 0
        %2555 = vmatmul.mubr.bf16.gmra.mrb[0].mxu0 %v2514
        %v2556 = vpop.f32.mrb[0].mxu0
        %v2557 = vadd.f32 0.0, %v2556
        %v2558 = vpop.f32.mrb[0].mxu0
        %v2559 = vadd.f32 0.0, %v2558
        %v2560 = vpop.f32.mrb[0].mxu0
        %v2561 = vadd.f32 0.0, %v2560
        %v2562 = vpop.f32.mrb[0].mxu0
        %v2563 = vadd.f32 0.0, %v2562
        %2564 = vmatprep.mubr.bf16.mxu0 0
        %2565 = vmatmul.mubr.bf16.gmra.mrb[0].mxu0 %v2517
        %v2566 = vpop.f32.mrb[0].mxu0
        %v2567 = vadd.f32 0.0, %v2566
        %v2568 = vpop.f32.mrb[0].mxu0
        %v2569 = vadd.f32 0.0, %v2568
        %v2570 = vpop.f32.mrb[0].mxu0
        %v2571 = vadd.f32 0.0, %v2570
        %v2572 = vpop.f32.mrb[0].mxu0
        %v2573 = vadd.f32 0.0, %v2572
        %2574 = vmatprep.mubr.bf16.mxu0 0
        %2575 = vmatmul.mubr.bf16.gmra.mrb[0].mxu0 %v2520
        %v2576 = vpop.f32.mrb[0].mxu0
        %v2577 = vadd.f32 0.0, %v2576
        %v2578 = vpop.f32.mrb[0].mxu0
        %v2579 = vadd.f32 0.0, %v2578
        %v2580 = vpop.f32.mrb[0].mxu0
        %v2581 = vadd.f32 0.0, %v2580
        %v2582 = vpop.f32.mrb[0].mxu0
        %v2583 = vadd.f32 0.0, %v2582
        %2584 = vdwg.mxu0
        %2585 = vmatprep.subr.bf16.mxu0 0
        %2586 = vmatpush1.bf16.msra.mxu0 %v2114
        %2587 = vmatprep.subr.bf16.mxu0 0
        %2588 = vmatpush1.bf16.msra.mxu0 0
        %2589 = vmatprep.subr.bf16.mxu0 0
        %2590 = vmatpush1.bf16.msra.mxu0 0
        %2591 = vmatprep.subr.bf16.mxu0 0
        %2592 = vmatpush1.bf16.msra.mxu0 0
        %2593 = vmatprep.subr.bf16.mxu0 0
        %2594 = vmatpush1.bf16.msra.mxu0 0
        %2595 = vmatprep.subr.bf16.mxu0 0
        %2596 = vmatpush1.bf16.msra.mxu0 0
        %2597 = vmatprep.subr.bf16.mxu0 0
        %2598 = vmatpush1.bf16.msra.mxu0 0
        %2599 = vmatprep.subr.bf16.mxu0 0
        %2600 = vmatpush1.bf16.msra.mxu0 0
        %2601 = vmatprep.subr.bf16.mxu0 0
        %2602 = vmatpush1.bf16.msra.mxu0 0
        %2603 = vmatprep.subr.bf16.mxu0 0
        %2604 = vmatpush1.bf16.msra.mxu0 0
        %2605 = vmatprep.subr.bf16.mxu0 0
        %2606 = vmatpush1.bf16.msra.mxu0 0
        %2607 = vmatprep.subr.bf16.mxu0 0
        %2608 = vmatpush1.bf16.msra.mxu0 0
        %2609 = vmatprep.subr.bf16.mxu0 0
        %2610 = vmatpush1.bf16.msra.mxu0 0
        %2611 = vmatprep.subr.bf16.mxu0 0
        %2612 = vmatpush1.bf16.msra.mxu0 0
        %2613 = vmatprep.subr.bf16.mxu0 0
        %2614 = vmatpush1.bf16.msra.mxu0 0
        %2615 = vmatprep.subr.bf16.mxu0 0
        %2616 = vmatpush1.bf16.msra.mxu0 0
        %2617 = vmatprep.mubr.bf16.mxu0 0
        %2618 = vmatmul.mubr.bf16.gmra.mrb[0].mxu0 %v2514
        %v2619 = vpop.f32.mrb[0].mxu0
        %v2620 = vadd.f32 0.0, %v2619
        %v2621 = vpop.f32.mrb[0].mxu0
        %v2622 = vpop.f32.mrb[0].mxu0
        %v2623 = vadd.f32 0.0, %v2622
        %v2624 = vpop.f32.mrb[0].mxu0
        %2625 = vmatprep.mubr.bf16.mxu0 0
        %2626 = vmatmul.mubr.bf16.gmra.mrb[0].mxu0 %v2517
        %v2627 = vpop.f32.mrb[0].mxu0
        %v2628 = vadd.f32 0.0, %v2627
        %v2629 = vpop.f32.mrb[0].mxu0
        %v2630 = vpop.f32.mrb[0].mxu0
        %v2631 = vadd.f32 0.0, %v2630
        %v2632 = vpop.f32.mrb[0].mxu0
        %2633 = vmatprep.mubr.bf16.mxu0 0
        %2634 = vmatmul.mubr.bf16.gmra.mrb[0].mxu0 %v2520
        %v2635 = vpop.f32.mrb[0].mxu0
        %v2636 = vadd.f32 0.0, %v2635
        %v2637 = vpop.f32.mrb[0].mxu0
        %v2638 = vpop.f32.mrb[0].mxu0
        %v2639 = vadd.f32 0.0, %v2638
        %v2640 = vpop.f32.mrb[0].mxu0
        %2641 = vdwg.mxu0
        %v2643 = vsel %vm2512, %v2509, 0
        %v2646 = vsel %vm2512, %v2510, 0
        %v2649 = vsel %vm2512, %v2511, 0
        %2651 = vmatprep.subr.bf16.mxu0 %v2114
        %2652 = vmatpush1.bf16.msra.mxu0 %v2113
        %2653 = vmatprep.subr.bf16.mxu0 0
        %2654 = vmatpush1.bf16.msra.mxu0 0
        %2655 = vmatprep.subr.bf16.mxu0 0
        %2656 = vmatpush1.bf16.msra.mxu0 0
        %2657 = vmatprep.subr.bf16.mxu0 0
        %2658 = vmatpush1.bf16.msra.mxu0 0
        %2659 = vmatprep.subr.bf16.mxu0 0
        %2660 = vmatpush1.bf16.msra.mxu0 0
        %2661 = vmatprep.subr.bf16.mxu0 0
        %2662 = vmatpush1.bf16.msra.mxu0 0
        %2663 = vmatprep.subr.bf16.mxu0 0
        %2664 = vmatpush1.bf16.msra.mxu0 0
        %2665 = vmatprep.subr.bf16.mxu0 0
        %2666 = vmatpush1.bf16.msra.mxu0 0
        %2667 = vmatprep.subr.bf16.mxu0 0
        %2668 = vmatpush1.bf16.msra.mxu0 0
        %2669 = vmatprep.subr.bf16.mxu0 0
        %2670 = vmatpush1.bf16.msra.mxu0 0
        %2671 = vmatprep.subr.bf16.mxu0 0
        %2672 = vmatpush1.bf16.msra.mxu0 0
        %2673 = vmatprep.subr.bf16.mxu0 0
        %2674 = vmatpush1.bf16.msra.mxu0 0
        %2675 = vmatprep.subr.bf16.mxu0 0
        %2676 = vmatpush1.bf16.msra.mxu0 0
        %2677 = vmatprep.subr.bf16.mxu0 0
        %2678 = vmatpush1.bf16.msra.mxu0 0
        %2679 = vmatprep.subr.bf16.mxu0 0
        %2680 = vmatpush1.bf16.msra.mxu0 0
        %2681 = vmatprep.subr.bf16.mxu0 0
        %2682 = vmatpush1.bf16.msra.mxu0 0
        %2683 = vmatprep.mubr.bf16.mxu0 0
        %2684 = vmatmul.mubr.bf16.gmra.mrb[0].mxu0 %v2643
        %v2685 = vpop.f32.mrb[0].mxu0
        %v2686 = vadd.f32 0.0, %v2685
        %v2687 = vpop.f32.mrb[0].mxu0
        %v2688 = vadd.f32 0.0, %v2687
        %v2689 = vpop.f32.mrb[0].mxu0
        %v2690 = vadd.f32 0.0, %v2689
        %v2691 = vpop.f32.mrb[0].mxu0
        %v2692 = vadd.f32 0.0, %v2691
        %2693 = vmatprep.mubr.bf16.mxu0 0
        %2694 = vmatmul.mubr.bf16.gmra.mrb[0].mxu0 %v2646
        %v2695 = vpop.f32.mrb[0].mxu0
        %v2696 = vadd.f32 0.0, %v2695
        %v2697 = vpop.f32.mrb[0].mxu0
        %v2698 = vadd.f32 0.0, %v2697
        %v2699 = vpop.f32.mrb[0].mxu0
        %v2700 = vadd.f32 0.0, %v2699
        %v2701 = vpop.f32.mrb[0].mxu0
        %v2702 = vadd.f32 0.0, %v2701
        %2703 = vmatprep.mubr.bf16.mxu0 0
        %2704 = vmatmul.mubr.bf16.gmra.mrb[0].mxu0 %v2649
        %v2705 = vpop.f32.mrb[0].mxu0
        %v2706 = vadd.f32 0.0, %v2705
        %v2707 = vpop.f32.mrb[0].mxu0
        %v2708 = vadd.f32 0.0, %v2707
        %v2709 = vpop.f32.mrb[0].mxu0
        %v2710 = vadd.f32 0.0, %v2709
        %v2711 = vpop.f32.mrb[0].mxu0
        %v2712 = vadd.f32 0.0, %v2711
        %2713 = vdwg.mxu0
        %v2714 = vpack.c.bf16 %v2563, %v2559
        %v2715 = vpack.c.bf16 %v2573, %v2569
        %v2716 = vpack.c.bf16 %v2583, %v2579
        %s2717 = scalar_lea.vmem %s1032, 256 [#allocation16]
        %v2718 = vld [vmem:[%s2717] sm:$0xf]
        %v2719 = vld [vmem:[%s2717 + $0x4] sm:$0xf]
        %v2720 = vld [vmem:[%s2717 + $0x8] sm:$0xf]
        %v2721 = vld [vmem:[%s2717 + $0xc] sm:$0xf]
        %v2722 = vld [vmem:[%s2717 + $0x10] sm:$0xf]
        %v2723 = vld [vmem:[%s2717 + $0x14] sm:$0xf]
        %v2724 = vld [vmem:[%s2717 + $0x18] sm:$0xf]
        %v2725 = vld [vmem:[%s2717 + $0x1c] sm:$0xf]
        %v2726 = vld [vmem:[%s2717 + $0x20] sm:$0xf]
        %v2727 = vld [vmem:[%s2717 + $0x24] sm:$0xf]
        %v2728 = vld [vmem:[%s2717 + $0x28] sm:$0xf]
        %v2729 = vld [vmem:[%s2717 + $0x2c] sm:$0xf]
        %v2730 = vld [vmem:[%s2717 + $0x30] sm:$0xf]
        %v2731 = vld [vmem:[%s2717 + $0x34] sm:$0xf]
        %v2732 = vld [vmem:[%s2717 + $0x38] sm:$0xf]
        %v2733 = vld [vmem:[%s2717 + $0x3c] sm:$0xf]
        %v2734 = vpack.c.bf16 %v2690, %v2686
        %v2735 = vpack.c.bf16 %v2700, %v2696
        %v2736 = vpack.c.bf16 %v2710, %v2706
        %s2737 = scalar_lea.vmem %s1032, 320 [#allocation16]
        %v2738 = vld [vmem:[%s2737] sm:$0xf]
        %v2739 = vld [vmem:[%s2737 + $0x4] sm:$0xf]
        %v2740 = vld [vmem:[%s2737 + $0x8] sm:$0xf]
        %v2741 = vld [vmem:[%s2737 + $0xc] sm:$0xf]
        %v2742 = vld [vmem:[%s2737 + $0x10] sm:$0xf]
        %v2743 = vld [vmem:[%s2737 + $0x14] sm:$0xf]
        %v2744 = vld [vmem:[%s2737 + $0x18] sm:$0xf]
        %v2745 = vld [vmem:[%s2737 + $0x1c] sm:$0xf]
        %v2746 = vld [vmem:[%s2737 + $0x20] sm:$0xf]
        %v2747 = vld [vmem:[%s2737 + $0x24] sm:$0xf]
        %v2748 = vld [vmem:[%s2737 + $0x28] sm:$0xf]
        %v2749 = vld [vmem:[%s2737 + $0x2c] sm:$0xf]
        %v2750 = vld [vmem:[%s2737 + $0x30] sm:$0xf]
        %v2751 = vld [vmem:[%s2737 + $0x34] sm:$0xf]
        %v2752 = vld [vmem:[%s2737 + $0x38] sm:$0xf]
        %v2753 = vld [vmem:[%s2737 + $0x3c] sm:$0xf]
        %v2770 = vunpack.c.l.b16 %v2738
        %v2771 = vunpack.c.l.b16 %v2739
        %v2772 = vunpack.c.l.b16 %v2740
        %v2773 = vunpack.c.l.b16 %v2741
        %v2774 = vunpack.c.l.b16 %v2742
        %v2775 = vunpack.c.l.b16 %v2743
        %v2776 = vunpack.c.l.b16 %v2744
        %v2777 = vunpack.c.l.b16 %v2745
        %v2778 = vunpack.c.l.b16 %v2746
        %v2779 = vunpack.c.l.b16 %v2747
        %v2780 = vunpack.c.l.b16 %v2748
        %v2781 = vunpack.c.l.b16 %v2749
        %v2782 = vunpack.c.l.b16 %v2750
        %v2783 = vunpack.c.l.b16 %v2751
        %v2784 = vunpack.c.l.b16 %v2752
        %v2785 = vunpack.c.l.b16 %v2753
        %v2786 = vpack.c.b16 %v2771, %v2770
        %v2787 = vpack.c.b16 %v2773, %v2772
        %v2788 = vpack.c.b16 %v2775, %v2774
        %v2789 = vpack.c.b16 %v2777, %v2776
        %v2790 = vpack.c.b16 %v2779, %v2778
        %v2791 = vpack.c.b16 %v2781, %v2780
        %v2792 = vpack.c.b16 %v2783, %v2782
        %v2793 = vpack.c.b16 %v2785, %v2784
        %2802 = vmatprep.subr.bf16.mxu0 0
        %2803 = vmatpush1.bf16.msra.mxu0 %v2786
        %2804 = vmatprep.subr.bf16.mxu0 0
        %2805 = vmatpush1.bf16.msra.mxu0 %v2787
        %2806 = vmatprep.subr.bf16.mxu0 0
        %2807 = vmatpush1.bf16.msra.mxu0 %v2788
        %2808 = vmatprep.subr.bf16.mxu0 0
        %2809 = vmatpush1.bf16.msra.mxu0 %v2789
        %2810 = vmatprep.subr.bf16.mxu0 0
        %2811 = vmatpush1.bf16.msra.mxu0 %v2790
        %2812 = vmatprep.subr.bf16.mxu0 0
        %2813 = vmatpush1.bf16.msra.mxu0 %v2791
        %2814 = vmatprep.subr.bf16.mxu0 0
        %2815 = vmatpush1.bf16.msra.mxu0 %v2792
        %2816 = vmatprep.subr.bf16.mxu0 0
        %2817 = vmatpush1.bf16.msra.mxu0 %v2793
        %2818 = vmatprep.subr.bf16.mxu0 0
        %2819 = vmatpush1.bf16.msra.mxu0 0
        %2820 = vmatprep.subr.bf16.mxu0 0
        %2821 = vmatpush1.bf16.msra.mxu0 0
        %2822 = vmatprep.subr.bf16.mxu0 0
        %2823 = vmatpush1.bf16.msra.mxu0 0
        %2824 = vmatprep.subr.bf16.mxu0 0
        %2825 = vmatpush1.bf16.msra.mxu0 0
        %2826 = vmatprep.subr.bf16.mxu0 0
        %2827 = vmatpush1.bf16.msra.mxu0 0
        %2828 = vmatprep.subr.bf16.mxu0 0
        %2829 = vmatpush1.bf16.msra.mxu0 0
        %2830 = vmatprep.subr.bf16.mxu0 0
        %2831 = vmatpush1.bf16.msra.mxu0 0
        %2832 = vmatprep.subr.bf16.mxu0 0
        %2833 = vmatpush1.bf16.msra.mxu0 0
        %2834 = vmatprep.mubr.bf16.mxu0 0
        %2835 = vmatmul.mubr.bf16.gmra.mrb[0].mxu0 %v2734
        %v2836 = vpop.f32.mrb[0].mxu0
        %v2837 = vadd.f32 0.0, %v2836
        %v2838 = vpop.f32.mrb[0].mxu0
        %v2839 = vpop.f32.mrb[0].mxu0
        %v2840 = vadd.f32 0.0, %v2839
        %v2841 = vpop.f32.mrb[0].mxu0
        %2842 = vmatprep.mubr.bf16.mxu0 0
        %2843 = vmatmul.mubr.bf16.gmra.mrb[0].mxu0 %v2735
        %v2844 = vpop.f32.mrb[0].mxu0
        %v2845 = vadd.f32 0.0, %v2844
        %v2846 = vpop.f32.mrb[0].mxu0
        %v2847 = vpop.f32.mrb[0].mxu0
        %v2848 = vadd.f32 0.0, %v2847
        %v2849 = vpop.f32.mrb[0].mxu0
        %2850 = vmatprep.mubr.bf16.mxu0 0
        %2851 = vmatmul.mubr.bf16.gmra.mrb[0].mxu0 %v2736
        %v2852 = vpop.f32.mrb[0].mxu0
        %v2853 = vadd.f32 0.0, %v2852
        %v2854 = vpop.f32.mrb[0].mxu0
        %v2855 = vpop.f32.mrb[0].mxu0
        %v2856 = vadd.f32 0.0, %v2855
        %v2857 = vpop.f32.mrb[0].mxu0
        %2858 = vdwg.mxu0
        %v2875 = vunpack.c.l.b16 %v2718
        %v2876 = vunpack.c.l.b16 %v2719
        %v2877 = vunpack.c.l.b16 %v2720
        %v2878 = vunpack.c.l.b16 %v2721
        %v2879 = vunpack.c.l.b16 %v2722
        %v2880 = vunpack.c.l.b16 %v2723
        %v2881 = vunpack.c.l.b16 %v2724
        %v2882 = vunpack.c.l.b16 %v2725
        %v2883 = vunpack.c.l.b16 %v2726
        %v2884 = vunpack.c.l.b16 %v2727
        %v2885 = vunpack.c.l.b16 %v2728
        %v2886 = vunpack.c.l.b16 %v2729
        %v2887 = vunpack.c.l.b16 %v2730
        %v2888 = vunpack.c.l.b16 %v2731
        %v2889 = vunpack.c.l.b16 %v2732
        %v2890 = vunpack.c.l.b16 %v2733
        %v2891 = vpack.c.b16 %v2876, %v2875
        %v2892 = vpack.c.b16 %v2878, %v2877
        %v2893 = vpack.c.b16 %v2880, %v2879
        %v2894 = vpack.c.b16 %v2882, %v2881
        %v2895 = vpack.c.b16 %v2884, %v2883
        %v2896 = vpack.c.b16 %v2886, %v2885
        %v2897 = vpack.c.b16 %v2888, %v2887
        %v2898 = vpack.c.b16 %v2890, %v2889
        %2907 = vmatprep.subr.bf16.mxu0 0
        %2908 = vmatpush1.bf16.msra.mxu0 %v2891
        %2909 = vmatprep.subr.bf16.mxu0 0
        %2910 = vmatpush1.bf16.msra.mxu0 %v2892
        %2911 = vmatprep.subr.bf16.mxu0 0
        %2912 = vmatpush1.bf16.msra.mxu0 %v2893
        %2913 = vmatprep.subr.bf16.mxu0 0
        %2914 = vmatpush1.bf16.msra.mxu0 %v2894
        %2915 = vmatprep.subr.bf16.mxu0 0
        %2916 = vmatpush1.bf16.msra.mxu0 %v2895
        %2917 = vmatprep.subr.bf16.mxu0 0
        %2918 = vmatpush1.bf16.msra.mxu0 %v2896
        %2919 = vmatprep.subr.bf16.mxu0 0
        %2920 = vmatpush1.bf16.msra.mxu0 %v2897
        %2921 = vmatprep.subr.bf16.mxu0 0
        %2922 = vmatpush1.bf16.msra.mxu0 %v2898
        %2923 = vmatprep.subr.bf16.mxu0 0
        %2924 = vmatpush1.bf16.msra.mxu0 0
        %2925 = vmatprep.subr.bf16.mxu0 0
        %2926 = vmatpush1.bf16.msra.mxu0 0
        %2927 = vmatprep.subr.bf16.mxu0 0
        %2928 = vmatpush1.bf16.msra.mxu0 0
        %2929 = vmatprep.subr.bf16.mxu0 0
        %2930 = vmatpush1.bf16.msra.mxu0 0
        %2931 = vmatprep.subr.bf16.mxu0 0
        %2932 = vmatpush1.bf16.msra.mxu0 0
        %2933 = vmatprep.subr.bf16.mxu0 0
        %2934 = vmatpush1.bf16.msra.mxu0 0
        %2935 = vmatprep.subr.bf16.mxu0 0
        %2936 = vmatpush1.bf16.msra.mxu0 0
        %2937 = vmatprep.subr.bf16.mxu0 0
        %2938 = vmatpush1.bf16.msra.mxu0 0
        %2939 = vmatprep.mubr.bf16.mxu0 0
        %2940 = vmatmul.mubr.bf16.gmra.mrb[0].mxu0 %v2714
        %v2941 = vpop.f32.mrb[0].mxu0
        %v2942 = vadd.f32 %v2837, %v2941
        %v2943 = vpop.f32.mrb[0].mxu0
        %v2944 = vpop.f32.mrb[0].mxu0
        %v2945 = vadd.f32 %v2840, %v2944
        %v2946 = vpop.f32.mrb[0].mxu0
        %2947 = vmatprep.mubr.bf16.mxu0 0
        %2948 = vmatmul.mubr.bf16.gmra.mrb[0].mxu0 %v2715
        %v2949 = vpop.f32.mrb[0].mxu0
        %v2950 = vadd.f32 %v2845, %v2949
        %v2951 = vpop.f32.mrb[0].mxu0
        %v2952 = vpop.f32.mrb[0].mxu0
        %v2953 = vadd.f32 %v2848, %v2952
        %v2954 = vpop.f32.mrb[0].mxu0
        %2955 = vmatprep.mubr.bf16.mxu0 0
        %2956 = vmatmul.mubr.bf16.gmra.mrb[0].mxu0 %v2716
        %v2957 = vpop.f32.mrb[0].mxu0
        %v2958 = vadd.f32 %v2853, %v2957
        %v2959 = vpop.f32.mrb[0].mxu0
        %v2960 = vpop.f32.mrb[0].mxu0
        %v2961 = vadd.f32 %v2856, %v2960
        %v2962 = vpop.f32.mrb[0].mxu0
        %2963 = vdwg.mxu0
        %v2964 = vadd.f32 %v2942, %v2392
        %v2965 = vadd.f32 %v2945, %v2396
        %v2966 = vadd.f32 %v2950, %v2402
        %v2967 = vadd.f32 %v2953, %v2406
        %v2968 = vadd.f32 %v2958, %v2412
        %v2969 = vadd.f32 %v2961, %v2416
        %v2970 = vsub.f32 0.0, %v2964
        %v2971 = vsub.f32 0.0, %v2965
        %v2972 = vsub.f32 0.0, %v2966
        %v2973 = vsub.f32 0.0, %v2967
        %v2974 = vsub.f32 0.0, %v2968
        %v2975 = vsub.f32 0.0, %v2969
        %v2976 = vmul.f32 %v2970, 1.442695
        %v2977 = vpow.pop %v2976
        %v2978 = vmul.f32 %v2971, 1.442695
        %v2979 = vpow.pop %v2978
        %v2980 = vmul.f32 %v2972, 1.442695
        %v2981 = vpow.pop %v2980
        %v2982 = vmul.f32 %v2973, 1.442695
        %v2983 = vpow.pop %v2982
        %v2984 = vmul.f32 %v2974, 1.442695
        %v2985 = vpow.pop %v2984
        %v2986 = vmul.f32 %v2975, 1.442695
        %v2987 = vpow.pop %v2986
        %v2988 = vadd.f32 %v2977, 1.0
        %v2989 = vadd.f32 %v2979, 1.0
        %v2990 = vadd.f32 %v2981, 1.0
        %v2991 = vadd.f32 %v2983, 1.0
        %v2992 = vadd.f32 %v2985, 1.0
        %v2993 = vadd.f32 %v2987, 1.0
        %v2994 = vrcp.pop %v2988
        %v2995 = vrcp.pop %v2989
        %v2996 = vrcp.pop %v2990
        %v2997 = vrcp.pop %v2991
        %v2998 = vrcp.pop %v2992
        %v2999 = vrcp.pop %v2993
        %v3000 = vmul.f32 %v2964, %v2994
        %v3001 = vmul.f32 %v2965, %v2995
        %v3002 = vmul.f32 %v2966, %v2996
        %v3003 = vmul.f32 %v2967, %v2997
        %v3004 = vmul.f32 %v2968, %v2998
        %v3005 = vmul.f32 %v2969, %v2999
        %v3006 = vpack.c.bf16 %v3001, %v3000
        %v3007 = vpack.c.bf16 %v3003, %v3002
        %v3008 = vpack.c.bf16 %v3005, %v3004
        %s3009 = scalar_lea.vmem %s1032, 128 [#allocation16]
        %v3010 = vld [vmem:[%s3009] sm:$0xf]
        %v3011 = vld [vmem:[%s3009 + $0x4] sm:$0xf]
        %v3012 = vld [vmem:[%s3009 + $0x8] sm:$0xf]
        %v3013 = vld [vmem:[%s3009 + $0xc] sm:$0xf]
        %v3014 = vld [vmem:[%s3009 + $0x10] sm:$0xf]
        %v3015 = vld [vmem:[%s3009 + $0x14] sm:$0xf]
        %v3016 = vld [vmem:[%s3009 + $0x18] sm:$0xf]
        %v3017 = vld [vmem:[%s3009 + $0x1c] sm:$0xf]
        %v3018 = vld [vmem:[%s3009 + $0x20] sm:$0xf]
        %v3019 = vld [vmem:[%s3009 + $0x24] sm:$0xf]
        %v3020 = vld [vmem:[%s3009 + $0x28] sm:$0xf]
        %v3021 = vld [vmem:[%s3009 + $0x2c] sm:$0xf]
        %v3022 = vld [vmem:[%s3009 + $0x30] sm:$0xf]
        %v3023 = vld [vmem:[%s3009 + $0x34] sm:$0xf]
        %v3024 = vld [vmem:[%s3009 + $0x38] sm:$0xf]
        %v3025 = vld [vmem:[%s3009 + $0x3c] sm:$0xf]
        %v3026 = vlaneseq
        %v3027 = vshrl.u32 %v3026, 7
        %v3028 = vsub.s32 2, %v3027
        %v3029 = vrot.slane %v1839, %v3028
        %v3046 = vunpack.c.l.b16 %v3010
        %v3047 = vunpack.c.l.b16 %v3011
        %v3048 = vunpack.c.l.b16 %v3012
        %v3049 = vunpack.c.l.b16 %v3013
        %v3050 = vunpack.c.l.b16 %v3014
        %v3051 = vunpack.c.l.b16 %v3015
        %v3052 = vunpack.c.l.b16 %v3016
        %v3053 = vunpack.c.l.b16 %v3017
        %v3054 = vunpack.c.l.b16 %v3018
        %v3055 = vunpack.c.l.b16 %v3019
        %v3056 = vunpack.c.l.b16 %v3020
        %v3057 = vunpack.c.l.b16 %v3021
        %v3058 = vunpack.c.l.b16 %v3022
        %v3059 = vunpack.c.l.b16 %v3023
        %v3060 = vunpack.c.l.b16 %v3024
        %v3061 = vunpack.c.l.b16 %v3025
        %v3062 = vpack.c.b16 %v3047, %v3046
        %v3063 = vpack.c.b16 %v3049, %v3048
        %v3064 = vpack.c.b16 %v3051, %v3050
        %v3065 = vpack.c.b16 %v3053, %v3052
        %v3066 = vpack.c.b16 %v3055, %v3054
        %v3067 = vpack.c.b16 %v3057, %v3056
        %v3068 = vpack.c.b16 %v3059, %v3058
        %v3069 = vpack.c.b16 %v3061, %v3060
        %3078 = vmatprep.subr.bf16.mxu0 0
        %3079 = vmatpush1.bf16.msra.mxu0 %v3062
        %3080 = vmatprep.subr.bf16.mxu0 0
        %3081 = vmatpush1.bf16.msra.mxu0 %v3063
        %3082 = vmatprep.subr.bf16.mxu0 0
        %3083 = vmatpush1.bf16.msra.mxu0 %v3064
        %3084 = vmatprep.subr.bf16.mxu0 0
        %3085 = vmatpush1.bf16.msra.mxu0 %v3065
        %3086 = vmatprep.subr.bf16.mxu0 0
        %3087 = vmatpush1.bf16.msra.mxu0 %v3066
        %3088 = vmatprep.subr.bf16.mxu0 0
        %3089 = vmatpush1.bf16.msra.mxu0 %v3067
        %3090 = vmatprep.subr.bf16.mxu0 0
        %3091 = vmatpush1.bf16.msra.mxu0 %v3068
        %3092 = vmatprep.subr.bf16.mxu0 0
        %3093 = vmatpush1.bf16.msra.mxu0 %v3069
        %3094 = vmatprep.subr.bf16.mxu0 0
        %3095 = vmatpush1.bf16.msra.mxu0 0
        %3096 = vmatprep.subr.bf16.mxu0 0
        %3097 = vmatpush1.bf16.msra.mxu0 0
        %3098 = vmatprep.subr.bf16.mxu0 0
        %3099 = vmatpush1.bf16.msra.mxu0 0
        %3100 = vmatprep.subr.bf16.mxu0 0
        %3101 = vmatpush1.bf16.msra.mxu0 0
        %3102 = vmatprep.subr.bf16.mxu0 0
        %3103 = vmatpush1.bf16.msra.mxu0 0
        %3104 = vmatprep.subr.bf16.mxu0 0
        %3105 = vmatpush1.bf16.msra.mxu0 0
        %3106 = vmatprep.subr.bf16.mxu0 0
        %3107 = vmatpush1.bf16.msra.mxu0 0
        %3108 = vmatprep.subr.bf16.mxu0 0
        %3109 = vmatpush1.bf16.msra.mxu0 0
        %3110 = vmatprep.mubr.bf16.mxu0 0
        %3111 = vmatmul.mubr.bf16.gmra.mrb[0].mxu0 %v3006
        %v3112 = vpop.f32.mrb[0].mxu0
        %v3113 = vadd.f32 %v3029, %v3112
        %v3114 = vpop.f32.mrb[0].mxu0
        %v3115 = vpop.f32.mrb[0].mxu0
        %v3116 = vadd.f32 %v3029, %v3115
        %v3117 = vpop.f32.mrb[0].mxu0
        %3118 = vmatprep.mubr.bf16.mxu0 0
        %3119 = vmatmul.mubr.bf16.gmra.mrb[0].mxu0 %v3007
        %v3120 = vpop.f32.mrb[0].mxu0
        %v3121 = vadd.f32 %v3029, %v3120
        %v3122 = vpop.f32.mrb[0].mxu0
        %v3123 = vpop.f32.mrb[0].mxu0
        %v3124 = vadd.f32 %v3029, %v3123
        %v3125 = vpop.f32.mrb[0].mxu0
        %3126 = vmatprep.mubr.bf16.mxu0 0
        %3127 = vmatmul.mubr.bf16.gmra.mrb[0].mxu0 %v3008
        %v3128 = vpop.f32.mrb[0].mxu0
        %v3129 = vadd.f32 %v3029, %v3128
        %v3130 = vpop.f32.mrb[0].mxu0
        %v3131 = vpop.f32.mrb[0].mxu0
        %v3132 = vadd.f32 %v3029, %v3131
        %v3133 = vpop.f32.mrb[0].mxu0
        %3134 = vdwg.mxu0
        %v3135 = vmul.f32 %v2557, %v3113
        %v3136 = vmul.f32 %v2561, %v3116
        %v3137 = vmul.f32 %v2567, %v3121
        %v3138 = vmul.f32 %v2571, %v3124
        %v3139 = vmul.f32 %v2577, %v3129
        %v3140 = vmul.f32 %v2581, %v3132
        %v3141 = vmul.f32 %v3135, 0.088388346
        %v3142 = vmul.f32 %v3136, 0.088388346
        %v3143 = vmul.f32 %v3137, 0.088388346
        %v3144 = vmul.f32 %v3138, 0.088388346
        %v3145 = vmul.f32 %v3139, 0.088388346
        %v3146 = vmul.f32 %v3140, 0.088388346
        %v3147 = vpack.c.bf16 %v2623, %v2620
        %v3148 = vpack.c.bf16 %v2631, %v2628
        %v3149 = vpack.c.bf16 %v2639, %v2636
        %s3150 = scalar_lea.vmem %s1032, 384 [#allocation16]
        %v3151 = vld [vmem:[%s3150] sm:$0xf]
        %v3152 = vld [vmem:[%s3150 + $0x4] sm:$0xf]
        %v3153 = vld [vmem:[%s3150 + $0x8] sm:$0xf]
        %v3154 = vld [vmem:[%s3150 + $0xc] sm:$0xf]
        %v3155 = vld [vmem:[%s3150 + $0x10] sm:$0xf]
        %v3156 = vld [vmem:[%s3150 + $0x14] sm:$0xf]
        %v3157 = vld [vmem:[%s3150 + $0x18] sm:$0xf]
        %v3158 = vld [vmem:[%s3150 + $0x1c] sm:$0xf]
        %v3159 = vld [vmem:[%s3150 + $0x20] sm:$0xf]
        %v3160 = vld [vmem:[%s3150 + $0x24] sm:$0xf]
        %v3161 = vld [vmem:[%s3150 + $0x28] sm:$0xf]
        %v3162 = vld [vmem:[%s3150 + $0x2c] sm:$0xf]
        %v3163 = vld [vmem:[%s3150 + $0x30] sm:$0xf]
        %v3164 = vld [vmem:[%s3150 + $0x34] sm:$0xf]
        %v3165 = vld [vmem:[%s3150 + $0x38] sm:$0xf]
        %v3166 = vld [vmem:[%s3150 + $0x3c] sm:$0xf]
        %v3167 = vpack.c.bf16 %v2692, %v2688
        %v3168 = vpack.c.bf16 %v2702, %v2698
        %v3169 = vpack.c.bf16 %v2712, %v2708
        %s3170 = scalar_lea.vmem %s1032, 448 [#allocation16]
        %v3171 = vld [vmem:[%s3170] sm:$0xf]
        %v3172 = vld [vmem:[%s3170 + $0x4] sm:$0xf]
        %v3173 = vld [vmem:[%s3170 + $0x8] sm:$0xf]
        %v3174 = vld [vmem:[%s3170 + $0xc] sm:$0xf]
        %v3175 = vld [vmem:[%s3170 + $0x10] sm:$0xf]
        %v3176 = vld [vmem:[%s3170 + $0x14] sm:$0xf]
        %v3177 = vld [vmem:[%s3170 + $0x18] sm:$0xf]
        %v3178 = vld [vmem:[%s3170 + $0x1c] sm:$0xf]
        %v3179 = vld [vmem:[%s3170 + $0x20] sm:$0xf]
        %v3180 = vld [vmem:[%s3170 + $0x24] sm:$0xf]
        %v3181 = vld [vmem:[%s3170 + $0x28] sm:$0xf]
        %v3182 = vld [vmem:[%s3170 + $0x2c] sm:$0xf]
        %v3183 = vld [vmem:[%s3170 + $0x30] sm:$0xf]
        %v3184 = vld [vmem:[%s3170 + $0x34] sm:$0xf]
        %v3185 = vld [vmem:[%s3170 + $0x38] sm:$0xf]
        %v3186 = vld [vmem:[%s3170 + $0x3c] sm:$0xf]
        %v3203 = vunpack.c.l.b16 %v3171
        %v3204 = vunpack.c.l.b16 %v3172
        %v3205 = vunpack.c.l.b16 %v3173
        %v3206 = vunpack.c.l.b16 %v3174
        %v3207 = vunpack.c.l.b16 %v3175
        %v3208 = vunpack.c.l.b16 %v3176
        %v3209 = vunpack.c.l.b16 %v3177
        %v3210 = vunpack.c.l.b16 %v3178
        %v3211 = vunpack.c.l.b16 %v3179
        %v3212 = vunpack.c.l.b16 %v3180
        %v3213 = vunpack.c.l.b16 %v3181
        %v3214 = vunpack.c.l.b16 %v3182
        %v3215 = vunpack.c.l.b16 %v3183
        %v3216 = vunpack.c.l.b16 %v3184
        %v3217 = vunpack.c.l.b16 %v3185
        %v3218 = vunpack.c.l.b16 %v3186
        %v3219 = vpack.c.b16 %v3204, %v3203
        %v3220 = vpack.c.b16 %v3206, %v3205
        %v3221 = vpack.c.b16 %v3208, %v3207
        %v3222 = vpack.c.b16 %v3210, %v3209
        %v3223 = vpack.c.b16 %v3212, %v3211
        %v3224 = vpack.c.b16 %v3214, %v3213
        %v3225 = vpack.c.b16 %v3216, %v3215
        %v3226 = vpack.c.b16 %v3218, %v3217
        %3235 = vmatprep.subr.bf16.mxu0 0
        %3236 = vmatpush1.bf16.msra.mxu0 %v3219
        %3237 = vmatprep.subr.bf16.mxu0 0
        %3238 = vmatpush1.bf16.msra.mxu0 %v3220
        %3239 = vmatprep.subr.bf16.mxu0 0
        %3240 = vmatpush1.bf16.msra.mxu0 %v3221
        %3241 = vmatprep.subr.bf16.mxu0 0
        %3242 = vmatpush1.bf16.msra.mxu0 %v3222
        %3243 = vmatprep.subr.bf16.mxu0 0
        %3244 = vmatpush1.bf16.msra.mxu0 %v3223
        %3245 = vmatprep.subr.bf16.mxu0 0
        %3246 = vmatpush1.bf16.msra.mxu0 %v3224
        %3247 = vmatprep.subr.bf16.mxu0 0
        %3248 = vmatpush1.bf16.msra.mxu0 %v3225
        %3249 = vmatprep.subr.bf16.mxu0 0
        %3250 = vmatpush1.bf16.msra.mxu0 %v3226
        %3251 = vmatprep.subr.bf16.mxu0 0
        %3252 = vmatpush1.bf16.msra.mxu0 0
        %3253 = vmatprep.subr.bf16.mxu0 0
        %3254 = vmatpush1.bf16.msra.mxu0 0
        %3255 = vmatprep.subr.bf16.mxu0 0
        %3256 = vmatpush1.bf16.msra.mxu0 0
        %3257 = vmatprep.subr.bf16.mxu0 0
        %3258 = vmatpush1.bf16.msra.mxu0 0
        %3259 = vmatprep.subr.bf16.mxu0 0
        %3260 = vmatpush1.bf16.msra.mxu0 0
        %3261 = vmatprep.subr.bf16.mxu0 0
        %3262 = vmatpush1.bf16.msra.mxu0 0
        %3263 = vmatprep.subr.bf16.mxu0 0
        %3264 = vmatpush1.bf16.msra.mxu0 0
        %3265 = vmatprep.subr.bf16.mxu0 0
        %3266 = vmatpush1.bf16.msra.mxu0 0
        %3267 = vmatprep.mubr.bf16.mxu0 0
        %3268 = vmatmul.mubr.bf16.gmra.mrb[0].mxu0 %v3167
        %v3269 = vpop.f32.mrb[0].mxu0
        %v3270 = vadd.f32 0.0, %v3269
        %v3271 = vpop.f32.mrb[0].mxu0
        %v3272 = vpop.f32.mrb[0].mxu0
        %v3273 = vadd.f32 0.0, %v3272
        %v3274 = vpop.f32.mrb[0].mxu0
        %3275 = vmatprep.mubr.bf16.mxu0 0
        %3276 = vmatmul.mubr.bf16.gmra.mrb[0].mxu0 %v3168
        %v3277 = vpop.f32.mrb[0].mxu0
        %v3278 = vadd.f32 0.0, %v3277
        %v3279 = vpop.f32.mrb[0].mxu0
        %v3280 = vpop.f32.mrb[0].mxu0
        %v3281 = vadd.f32 0.0, %v3280
        %v3282 = vpop.f32.mrb[0].mxu0
        %3283 = vmatprep.mubr.bf16.mxu0 0
        %3284 = vmatmul.mubr.bf16.gmra.mrb[0].mxu0 %v3169
        %v3285 = vpop.f32.mrb[0].mxu0
        %v3286 = vadd.f32 0.0, %v3285
        %v3287 = vpop.f32.mrb[0].mxu0
        %v3288 = vpop.f32.mrb[0].mxu0
        %v3289 = vadd.f32 0.0, %v3288
        %v3290 = vpop.f32.mrb[0].mxu0
        %3291 = vdwg.mxu0
        %v3308 = vunpack.c.l.b16 %v3151
        %v3309 = vunpack.c.l.b16 %v3152
        %v3310 = vunpack.c.l.b16 %v3153
        %v3311 = vunpack.c.l.b16 %v3154
        %v3312 = vunpack.c.l.b16 %v3155
        %v3313 = vunpack.c.l.b16 %v3156
        %v3314 = vunpack.c.l.b16 %v3157
        %v3315 = vunpack.c.l.b16 %v3158
        %v3316 = vunpack.c.l.b16 %v3159
        %v3317 = vunpack.c.l.b16 %v3160
        %v3318 = vunpack.c.l.b16 %v3161
        %v3319 = vunpack.c.l.b16 %v3162
        %v3320 = vunpack.c.l.b16 %v3163
        %v3321 = vunpack.c.l.b16 %v3164
        %v3322 = vunpack.c.l.b16 %v3165
        %v3323 = vunpack.c.l.b16 %v3166
        %v3324 = vpack.c.b16 %v3309, %v3308
        %v3325 = vpack.c.b16 %v3311, %v3310
        %v3326 = vpack.c.b16 %v3313, %v3312
        %v3327 = vpack.c.b16 %v3315, %v3314
        %v3328 = vpack.c.b16 %v3317, %v3316
        %v3329 = vpack.c.b16 %v3319, %v3318
        %v3330 = vpack.c.b16 %v3321, %v3320
        %v3331 = vpack.c.b16 %v3323, %v3322
        %3340 = vmatprep.subr.bf16.mxu0 0
        %3341 = vmatpush1.bf16.msra.mxu0 %v3324
        %3342 = vmatprep.subr.bf16.mxu0 0
        %3343 = vmatpush1.bf16.msra.mxu0 %v3325
        %3344 = vmatprep.subr.bf16.mxu0 0
        %3345 = vmatpush1.bf16.msra.mxu0 %v3326
        %3346 = vmatprep.subr.bf16.mxu0 0
        %3347 = vmatpush1.bf16.msra.mxu0 %v3327
        %3348 = vmatprep.subr.bf16.mxu0 0
        %3349 = vmatpush1.bf16.msra.mxu0 %v3328
        %3350 = vmatprep.subr.bf16.mxu0 0
        %3351 = vmatpush1.bf16.msra.mxu0 %v3329
        %3352 = vmatprep.subr.bf16.mxu0 0
        %3353 = vmatpush1.bf16.msra.mxu0 %v3330
        %3354 = vmatprep.subr.bf16.mxu0 0
        %3355 = vmatpush1.bf16.msra.mxu0 %v3331
        %3356 = vmatprep.subr.bf16.mxu0 0
        %3357 = vmatpush1.bf16.msra.mxu0 0
        %3358 = vmatprep.subr.bf16.mxu0 0
        %3359 = vmatpush1.bf16.msra.mxu0 0
        %3360 = vmatprep.subr.bf16.mxu0 0
        %3361 = vmatpush1.bf16.msra.mxu0 0
        %3362 = vmatprep.subr.bf16.mxu0 0
        %3363 = vmatpush1.bf16.msra.mxu0 0
        %3364 = vmatprep.subr.bf16.mxu0 0
        %3365 = vmatpush1.bf16.msra.mxu0 0
        %3366 = vmatprep.subr.bf16.mxu0 0
        %3367 = vmatpush1.bf16.msra.mxu0 0
        %3368 = vmatprep.subr.bf16.mxu0 0
        %3369 = vmatpush1.bf16.msra.mxu0 0
        %3370 = vmatprep.subr.bf16.mxu0 0
        %3371 = vmatpush1.bf16.msra.mxu0 0
        %3372 = vmatprep.mubr.bf16.mxu0 0
        %3373 = vmatmul.mubr.bf16.gmra.mrb[0].mxu0 %v3147
        %v3374 = vpop.f32.mrb[0].mxu0
        %v3375 = vadd.f32 %v3270, %v3374
        %v3376 = vpop.f32.mrb[0].mxu0
        %v3377 = vpop.f32.mrb[0].mxu0
        %v3378 = vadd.f32 %v3273, %v3377
        %v3379 = vpop.f32.mrb[0].mxu0
        %3380 = vmatprep.mubr.bf16.mxu0 0
        %3381 = vmatmul.mubr.bf16.gmra.mrb[0].mxu0 %v3148
        %v3382 = vpop.f32.mrb[0].mxu0
        %v3383 = vadd.f32 %v3278, %v3382
        %v3384 = vpop.f32.mrb[0].mxu0
        %v3385 = vpop.f32.mrb[0].mxu0
        %v3386 = vadd.f32 %v3281, %v3385
        %v3387 = vpop.f32.mrb[0].mxu0
        %3388 = vmatprep.mubr.bf16.mxu0 0
        %3389 = vmatmul.mubr.bf16.gmra.mrb[0].mxu0 %v3149
        %v3390 = vpop.f32.mrb[0].mxu0
        %v3391 = vadd.f32 %v3286, %v3390
        %v3392 = vpop.f32.mrb[0].mxu0
        %v3393 = vpop.f32.mrb[0].mxu0
        %v3394 = vadd.f32 %v3289, %v3393
        %v3395 = vpop.f32.mrb[0].mxu0
        %3396 = vdwg.mxu0
        %v3397 = vadd.f32 %v3375, %v2394
        %v3398 = vadd.f32 %v3378, %v2398
        %v3399 = vadd.f32 %v3383, %v2404
        %v3400 = vadd.f32 %v3386, %v2408
        %v3401 = vadd.f32 %v3391, %v2414
        %v3402 = vadd.f32 %v3394, %v2418
        %v3403 = vsub.f32 0.0, %v3397
        %v3404 = vsub.f32 0.0, %v3398
        %v3405 = vsub.f32 0.0, %v3399
        %v3406 = vsub.f32 0.0, %v3400
        %v3407 = vsub.f32 0.0, %v3401
        %v3408 = vsub.f32 0.0, %v3402
        %v3409 = vmul.f32 %v3403, 1.442695
        %v3410 = vpow.pop %v3409
        %v3411 = vmul.f32 %v3404, 1.442695
        %v3412 = vpow.pop %v3411
        %v3413 = vmul.f32 %v3405, 1.442695
        %v3414 = vpow.pop %v3413
        %v3415 = vmul.f32 %v3406, 1.442695
        %v3416 = vpow.pop %v3415
        %v3417 = vmul.f32 %v3407, 1.442695
        %v3418 = vpow.pop %v3417
        %v3419 = vmul.f32 %v3408, 1.442695
        %v3420 = vpow.pop %v3419
        %v3421 = vadd.f32 %v3410, 1.0
        %v3422 = vadd.f32 %v3412, 1.0
        %v3423 = vadd.f32 %v3414, 1.0
        %v3424 = vadd.f32 %v3416, 1.0
        %v3425 = vadd.f32 %v3418, 1.0
        %v3426 = vadd.f32 %v3420, 1.0
        %v3427 = vrcp.pop %v3421
        %v3428 = vrcp.pop %v3422
        %v3429 = vrcp.pop %v3423
        %v3430 = vrcp.pop %v3424
        %v3431 = vrcp.pop %v3425
        %v3432 = vrcp.pop %v3426
        %v3433 = vmul.f32 %v3397, %v3427
        %v3434 = vmul.f32 %v3398, %v3428
        %v3435 = vmul.f32 %v3399, %v3429
        %v3436 = vmul.f32 %v3400, %v3430
        %v3437 = vmul.f32 %v3401, %v3431
        %v3438 = vmul.f32 %v3402, %v3432
        %v3439 = vpack.c.bf16 %v3434, %v3433
        %v3440 = vpack.c.bf16 %v3436, %v3435
        %v3441 = vpack.c.bf16 %v3438, %v3437
        %s3442 = scalar_lea.vmem %s1032, 192 [#allocation16]
        %v3443 = vld [vmem:[%s3442] sm:$0xf]
        %v3444 = vld [vmem:[%s3442 + $0x4] sm:$0xf]
        %v3445 = vld [vmem:[%s3442 + $0x8] sm:$0xf]
        %v3446 = vld [vmem:[%s3442 + $0xc] sm:$0xf]
        %v3447 = vld [vmem:[%s3442 + $0x10] sm:$0xf]
        %v3448 = vld [vmem:[%s3442 + $0x14] sm:$0xf]
        %v3449 = vld [vmem:[%s3442 + $0x18] sm:$0xf]
        %v3450 = vld [vmem:[%s3442 + $0x1c] sm:$0xf]
        %v3451 = vld [vmem:[%s3442 + $0x20] sm:$0xf]
        %v3452 = vld [vmem:[%s3442 + $0x24] sm:$0xf]
        %v3453 = vld [vmem:[%s3442 + $0x28] sm:$0xf]
        %v3454 = vld [vmem:[%s3442 + $0x2c] sm:$0xf]
        %v3455 = vld [vmem:[%s3442 + $0x30] sm:$0xf]
        %v3456 = vld [vmem:[%s3442 + $0x34] sm:$0xf]
        %v3457 = vld [vmem:[%s3442 + $0x38] sm:$0xf]
        %v3458 = vld [vmem:[%s3442 + $0x3c] sm:$0xf]
        %v3459 = vlaneseq
        %v3460 = vshrl.u32 %v3459, 7
        %v3461 = vsub.s32 3, %v3460
        %v3462 = vrot.slane %v1839, %v3461
        %v3479 = vunpack.c.l.b16 %v3443
        %v3480 = vunpack.c.l.b16 %v3444
        %v3481 = vunpack.c.l.b16 %v3445
        %v3482 = vunpack.c.l.b16 %v3446
        %v3483 = vunpack.c.l.b16 %v3447
        %v3484 = vunpack.c.l.b16 %v3448
        %v3485 = vunpack.c.l.b16 %v3449
        %v3486 = vunpack.c.l.b16 %v3450
        %v3487 = vunpack.c.l.b16 %v3451
        %v3488 = vunpack.c.l.b16 %v3452
        %v3489 = vunpack.c.l.b16 %v3453
        %v3490 = vunpack.c.l.b16 %v3454
        %v3491 = vunpack.c.l.b16 %v3455
        %v3492 = vunpack.c.l.b16 %v3456
        %v3493 = vunpack.c.l.b16 %v3457
        %v3494 = vunpack.c.l.b16 %v3458
        %v3495 = vpack.c.b16 %v3480, %v3479
        %v3496 = vpack.c.b16 %v3482, %v3481
        %v3497 = vpack.c.b16 %v3484, %v3483
        %v3498 = vpack.c.b16 %v3486, %v3485
        %v3499 = vpack.c.b16 %v3488, %v3487
        %v3500 = vpack.c.b16 %v3490, %v3489
        %v3501 = vpack.c.b16 %v3492, %v3491
        %v3502 = vpack.c.b16 %v3494, %v3493
        %3511 = vmatprep.subr.bf16.mxu0 0
        %3512 = vmatpush1.bf16.msra.mxu0 %v3495
        %3513 = vmatprep.subr.bf16.mxu0 0
        %3514 = vmatpush1.bf16.msra.mxu0 %v3496
        %3515 = vmatprep.subr.bf16.mxu0 0
        %3516 = vmatpush1.bf16.msra.mxu0 %v3497
        %3517 = vmatprep.subr.bf16.mxu0 0
        %3518 = vmatpush1.bf16.msra.mxu0 %v3498
        %3519 = vmatprep.subr.bf16.mxu0 0
        %3520 = vmatpush1.bf16.msra.mxu0 %v3499
        %3521 = vmatprep.subr.bf16.mxu0 0
        %3522 = vmatpush1.bf16.msra.mxu0 %v3500
        %3523 = vmatprep.subr.bf16.mxu0 0
        %3524 = vmatpush1.bf16.msra.mxu0 %v3501
        %3525 = vmatprep.subr.bf16.mxu0 0
        %3526 = vmatpush1.bf16.msra.mxu0 %v3502
        %3527 = vmatprep.subr.bf16.mxu0 0
        %3528 = vmatpush1.bf16.msra.mxu0 0
        %3529 = vmatprep.subr.bf16.mxu0 0
        %3530 = vmatpush1.bf16.msra.mxu0 0
        %3531 = vmatprep.subr.bf16.mxu0 0
        %3532 = vmatpush1.bf16.msra.mxu0 0
        %3533 = vmatprep.subr.bf16.mxu0 0
        %3534 = vmatpush1.bf16.msra.mxu0 0
        %3535 = vmatprep.subr.bf16.mxu0 0
        %3536 = vmatpush1.bf16.msra.mxu0 0
        %3537 = vmatprep.subr.bf16.mxu0 0
        %3538 = vmatpush1.bf16.msra.mxu0 0
        %3539 = vmatprep.subr.bf16.mxu0 0
        %3540 = vmatpush1.bf16.msra.mxu0 0
        %3541 = vmatprep.subr.bf16.mxu0 0
        %3542 = vmatpush1.bf16.msra.mxu0 0
        %3543 = vmatprep.mubr.bf16.mxu0 0
        %3544 = vmatmul.mubr.bf16.gmra.mrb[0].mxu0 %v3439
        %v3545 = vpop.f32.mrb[0].mxu0
        %v3546 = vadd.f32 %v3462, %v3545
        %v3547 = vpop.f32.mrb[0].mxu0
        %v3548 = vpop.f32.mrb[0].mxu0
        %v3549 = vadd.f32 %v3462, %v3548
        %v3550 = vpop.f32.mrb[0].mxu0
        %3551 = vmatprep.mubr.bf16.mxu0 0
        %3552 = vmatmul.mubr.bf16.gmra.mrb[0].mxu0 %v3440
        %v3553 = vpop.f32.mrb[0].mxu0
        %v3554 = vadd.f32 %v3462, %v3553
        %v3555 = vpop.f32.mrb[0].mxu0
        %v3556 = vpop.f32.mrb[0].mxu0
        %v3557 = vadd.f32 %v3462, %v3556
        %v3558 = vpop.f32.mrb[0].mxu0
        %3559 = vmatprep.mubr.bf16.mxu0 0
        %3560 = vmatmul.mubr.bf16.gmra.mrb[0].mxu0 %v3441
        %v3561 = vpop.f32.mrb[0].mxu0
        %v3562 = vadd.f32 %v3462, %v3561
        %v3563 = vpop.f32.mrb[0].mxu0
        %v3564 = vpop.f32.mrb[0].mxu0
        %v3565 = vadd.f32 %v3462, %v3564
        %v3566 = vpop.f32.mrb[0].mxu0
        %3567 = vdwg.mxu0
        %v3568 = vadd.f32 %v3141, %v3142
        %v3569 = vadd.f32 %v3568, %v3143
        %v3570 = vadd.f32 %v3569, %v3144
        %v3571 = vadd.f32 %v3570, %v3145
        %v3572 = vadd.f32 %v3571, %v3146
        %v3573 = vrot.slane %v3572, 4
        %v3574 = vadd.f32 %v3572, %v3573
        %v3575 = vrot.slane %v3574, 2
        %v3576 = vadd.f32 %v3574, %v3575
        %v3577 = vrot.slane %v3576, 1
        %v3578 = vadd.f32 %v3576, %v3577
        %v3579 = vrcp.pop 48.0
        %v3580 = vmul.f32 %v3578, %v3579
        %v3581 = vsub.f32 %v3141, %v3580
        %v3582 = vsub.f32 %v3142, %v3580
        %v3583 = vsub.f32 %v3143, %v3580
        %v3584 = vsub.f32 %v3144, %v3580
        %v3585 = vsub.f32 %v3145, %v3580
        %v3586 = vsub.f32 %v3146, %v3580
        %v3587 = vmul.f32 %v3581, %v3581
        %v3588 = vmul.f32 %v3582, %v3582
        %v3589 = vmul.f32 %v3583, %v3583
        %v3590 = vmul.f32 %v3584, %v3584
        %v3591 = vmul.f32 %v3585, %v3585
        %v3592 = vmul.f32 %v3586, %v3586
        %v3593 = vadd.f32 %v3587, %v3588
        %v3594 = vadd.f32 %v3593, %v3589
        %v3595 = vadd.f32 %v3594, %v3590
        %v3596 = vadd.f32 %v3595, %v3591
        %v3597 = vadd.f32 %v3596, %v3592
        %v3598 = vrot.slane %v3597, 4
        %v3599 = vadd.f32 %v3597, %v3598
        %v3600 = vrot.slane %v3599, 2
        %v3601 = vadd.f32 %v3599, %v3600
        %v3602 = vrot.slane %v3601, 1
        %v3603 = vadd.f32 %v3601, %v3602
        %v3604 = vmul.f32 %v3603, %v3579
        %v3605 = vadd.f32 %v3604, 1e-05
        %v3606 = vrsqrt.pop %v3605
        %v3607 = vmul.f32 %v3581, %v3606
        %v3608 = vmul.f32 %v3582, %v3606
        %v3609 = vmul.f32 %v3583, %v3606
        %v3610 = vmul.f32 %v3584, %v3606
        %v3611 = vmul.f32 %v3585, %v3606
        %v3612 = vmul.f32 %v3586, %v3606
        %v3613 = vsub.f32 0.0, %v3607
        %v3614 = vsub.f32 0.0, %v3608
        %v3615 = vsub.f32 0.0, %v3609
        %v3616 = vsub.f32 0.0, %v3610
        %v3617 = vsub.f32 0.0, %v3611
        %v3618 = vsub.f32 0.0, %v3612
        %v3619 = vmul.f32 %v3613, 1.442695
        %v3620 = vpow.pop %v3619
        %v3621 = vmul.f32 %v3614, 1.442695
        %v3622 = vpow.pop %v3621
        %v3623 = vmul.f32 %v3615, 1.442695
        %v3624 = vpow.pop %v3623
        %v3625 = vmul.f32 %v3616, 1.442695
        %v3626 = vpow.pop %v3625
        %v3627 = vmul.f32 %v3617, 1.442695
        %v3628 = vpow.pop %v3627
        %v3629 = vmul.f32 %v3618, 1.442695
        %v3630 = vpow.pop %v3629
        %v3631 = vadd.f32 %v3620, 1.0
        %v3632 = vadd.f32 %v3622, 1.0
        %v3633 = vadd.f32 %v3624, 1.0
        %v3634 = vadd.f32 %v3626, 1.0
        %v3635 = vadd.f32 %v3628, 1.0
        %v3636 = vadd.f32 %v3630, 1.0
        %v3637 = vrcp.pop %v3631
        %v3638 = vrcp.pop %v3632
        %v3639 = vrcp.pop %v3633
        %v3640 = vrcp.pop %v3634
        %v3641 = vrcp.pop %v3635
        %v3642 = vrcp.pop %v3636
        %v3643 = vmul.f32 %v3546, %v3637
        %v3644 = vmul.f32 %v3549, %v3638
        %v3645 = vmul.f32 %v3554, %v3639
        %v3646 = vmul.f32 %v3557, %v3640
        %v3647 = vmul.f32 %v3562, %v3641
        %v3648 = vmul.f32 %v3565, %v3642
        %v3649 = vld [vmem:[%s11] sm:$0x1]
        %v3650 = vlaneseq
        %v3651 = vshrl.u32 %v3650, 7
        %v3652 = vadd.s32 %v3651, 8
        %v3653 = vlaneseq
        %v3654 = vshrl.u32 %v3653, 7
        %v3655 = vsub.s32 0, %v3654
        %v3656 = vrot.slane %v3649, %v3655
        %vm3657 = vcmp.eq.s32.totalorder %v3656, %v3651
        %vm3658 = vcmp.eq.s32.totalorder %v3656, %v3652
        %v3659 = vsel %vm3657, 1, 0
        %v3660 = vsel %vm3658, 1, 0
        %v3661 = vcvt.s32.f32 %v3659
        %v3662 = vcvt.s32.f32 %v3660
        %v3663 = vpack.c.bf16 %v3662, %v3661
        %v3664 = vpack.c.bf16 %v3644, %v3643
        %v3665 = vpack.c.bf16 %v3646, %v3645
        %v3666 = vpack.c.bf16 %v3648, %v3647
        %vm3667 = vcmask 392192
        %v3669 = vsel %vm3667, %v3663, 0
        %3671 = vmatprep.subr.bf16.mxu0 0
        %3672 = vmatpush1.bf16.msra.mxu0 %v3664
        %3673 = vmatprep.subr.bf16.mxu0 0
        %3674 = vmatpush1.bf16.msra.mxu0 %v3665
        %3675 = vmatprep.subr.bf16.mxu0 0
        %3676 = vmatpush1.bf16.msra.mxu0 %v3666
        %3677 = vmatprep.subr.bf16.mxu0 0
        %3678 = vmatpush1.bf16.msra.mxu0 0
        %3679 = vmatprep.subr.bf16.mxu0 0
        %3680 = vmatpush1.bf16.msra.mxu0 0
        %3681 = vmatprep.subr.bf16.mxu0 0
        %3682 = vmatpush1.bf16.msra.mxu0 0
        %3683 = vmatprep.subr.bf16.mxu0 0
        %3684 = vmatpush1.bf16.msra.mxu0 0
        %3685 = vmatprep.subr.bf16.mxu0 0
        %3686 = vmatpush1.bf16.msra.mxu0 0
        %3687 = vmatprep.subr.bf16.mxu0 0
        %3688 = vmatpush1.bf16.msra.mxu0 0
        %3689 = vmatprep.subr.bf16.mxu0 0
        %3690 = vmatpush1.bf16.msra.mxu0 0
        %3691 = vmatprep.subr.bf16.mxu0 0
        %3692 = vmatpush1.bf16.msra.mxu0 0
        %3693 = vmatprep.subr.bf16.mxu0 0
        %3694 = vmatpush1.bf16.msra.mxu0 0
        %3695 = vmatprep.subr.bf16.mxu0 0
        %3696 = vmatpush1.bf16.msra.mxu0 0
        %3697 = vmatprep.subr.bf16.mxu0 0
        %3698 = vmatpush1.bf16.msra.mxu0 0
        %3699 = vmatprep.subr.bf16.mxu0 0
        %3700 = vmatpush1.bf16.msra.mxu0 0
        %3701 = vmatprep.subr.bf16.mxu0 0
        %3702 = vmatpush1.bf16.msra.mxu0 0
        %3703 = vmatprep.mubr.bf16.mxu0 0
        %3704 = vmatmul.mubr.bf16.gmra.mrb[0].mxu0 %v3669
        %v3705 = vpop.f32.mrb[0].mxu0
        %v3706 = vadd.f32 0.0, %v3705
        %v3707 = vpop.f32.mrb[0].mxu0
        %v3708 = vpop.f32.mrb[0].mxu0
        %v3709 = vadd.f32 0.0, %v3708
        %v3710 = vpop.f32.mrb[0].mxu0
        %3711 = vdwg.mxu0
        %v3712 = vpack.c.bf16 %v3709, %v3706
        %s3713 = scalar_lea.vmem %s1032, 64 [#allocation16]
        %v3714 = vld [vmem:[%s3713] sm:$0xf]
        %v3715 = vld [vmem:[%s3713 + $0x4] sm:$0xf]
        %v3716 = vld [vmem:[%s3713 + $0x8] sm:$0xf]
        %v3717 = vld [vmem:[%s3713 + $0xc] sm:$0xf]
        %v3718 = vld [vmem:[%s3713 + $0x10] sm:$0xf]
        %v3719 = vld [vmem:[%s3713 + $0x14] sm:$0xf]
        %v3720 = vld [vmem:[%s3713 + $0x18] sm:$0xf]
        %v3721 = vld [vmem:[%s3713 + $0x1c] sm:$0xf]
        %v3722 = vld [vmem:[%s3713 + $0x20] sm:$0xf]
        %v3723 = vld [vmem:[%s3713 + $0x24] sm:$0xf]
        %v3724 = vld [vmem:[%s3713 + $0x28] sm:$0xf]
        %v3725 = vld [vmem:[%s3713 + $0x2c] sm:$0xf]
        %v3726 = vld [vmem:[%s3713 + $0x30] sm:$0xf]
        %v3727 = vld [vmem:[%s3713 + $0x34] sm:$0xf]
        %v3728 = vld [vmem:[%s3713 + $0x38] sm:$0xf]
        %v3729 = vld [vmem:[%s3713 + $0x3c] sm:$0xf]
        %v3730 = vlaneseq
        %v3731 = vshrl.u32 %v3730, 7
        %v3732 = vsub.s32 1, %v3731
        %v3733 = vrot.slane %v1839, %v3732
        %v3750 = vunpack.c.l.b16 %v3714
        %v3751 = vunpack.c.l.b16 %v3715
        %v3752 = vunpack.c.l.b16 %v3716
        %v3753 = vunpack.c.l.b16 %v3717
        %v3754 = vunpack.c.l.b16 %v3718
        %v3755 = vunpack.c.l.b16 %v3719
        %v3756 = vunpack.c.l.b16 %v3720
        %v3757 = vunpack.c.l.b16 %v3721
        %v3758 = vunpack.c.l.b16 %v3722
        %v3759 = vunpack.c.l.b16 %v3723
        %v3760 = vunpack.c.l.b16 %v3724
        %v3761 = vunpack.c.l.b16 %v3725
        %v3762 = vunpack.c.l.b16 %v3726
        %v3763 = vunpack.c.l.b16 %v3727
        %v3764 = vunpack.c.l.b16 %v3728
        %v3765 = vunpack.c.l.b16 %v3729
        %v3766 = vpack.c.b16 %v3751, %v3750
        %v3767 = vpack.c.b16 %v3753, %v3752
        %v3768 = vpack.c.b16 %v3755, %v3754
        %v3769 = vpack.c.b16 %v3757, %v3756
        %v3770 = vpack.c.b16 %v3759, %v3758
        %v3771 = vpack.c.b16 %v3761, %v3760
        %v3772 = vpack.c.b16 %v3763, %v3762
        %v3773 = vpack.c.b16 %v3765, %v3764
        %3782 = vmatprep.subr.bf16.mxu0 0
        %3783 = vmatpush1.bf16.msra.mxu0 %v3766
        %3784 = vmatprep.subr.bf16.mxu0 0
        %3785 = vmatpush1.bf16.msra.mxu0 %v3767
        %3786 = vmatprep.subr.bf16.mxu0 0
        %3787 = vmatpush1.bf16.msra.mxu0 %v3768
        %3788 = vmatprep.subr.bf16.mxu0 0
        %3789 = vmatpush1.bf16.msra.mxu0 %v3769
        %3790 = vmatprep.subr.bf16.mxu0 0
        %3791 = vmatpush1.bf16.msra.mxu0 %v3770
        %3792 = vmatprep.subr.bf16.mxu0 0
        %3793 = vmatpush1.bf16.msra.mxu0 %v3771
        %3794 = vmatprep.subr.bf16.mxu0 0
        %3795 = vmatpush1.bf16.msra.mxu0 %v3772
        %3796 = vmatprep.subr.bf16.mxu0 0
        %3797 = vmatpush1.bf16.msra.mxu0 %v3773
        %3798 = vmatprep.subr.bf16.mxu0 0
        %3799 = vmatpush1.bf16.msra.mxu0 0
        %3800 = vmatprep.subr.bf16.mxu0 0
        %3801 = vmatpush1.bf16.msra.mxu0 0
        %3802 = vmatprep.subr.bf16.mxu0 0
        %3803 = vmatpush1.bf16.msra.mxu0 0
        %3804 = vmatprep.subr.bf16.mxu0 0
        %3805 = vmatpush1.bf16.msra.mxu0 0
        %3806 = vmatprep.subr.bf16.mxu0 0
        %3807 = vmatpush1.bf16.msra.mxu0 0
        %3808 = vmatprep.subr.bf16.mxu0 0
        %3809 = vmatpush1.bf16.msra.mxu0 0
        %3810 = vmatprep.subr.bf16.mxu0 0
        %3811 = vmatpush1.bf16.msra.mxu0 0
        %3812 = vmatprep.subr.bf16.mxu0 0
        %3813 = vmatpush1.bf16.msra.mxu0 0
        %3814 = vmatprep.mubr.bf16.mxu0 0
        %3815 = vmatmul.mubr.bf16.gmra.mrb[0].mxu0 %v3712
        %v3816 = vpop.f32.mrb[0].mxu0
        %v3817 = vadd.f32 %v3733, %v3816
        %v3818 = vpop.f32.mrb[0].mxu0
        %v3819 = vpop.f32.mrb[0].mxu0
        %v3820 = vadd.f32 %v3733, %v3819
        %v3821 = vpop.f32.mrb[0].mxu0
        %3822 = vdwg.mxu0
        %v3823 = vadd.f32 %v3817, %v3820
        %v3824 = vrot.slane %v3823, 4
        %v3825 = vadd.f32 %v3823, %v3824
        %v3826 = vrot.slane %v3825, 2
        %v3827 = vadd.f32 %v3825, %v3826
        %v3828 = vrot.slane %v3827, 1
        %v3829 = vadd.f32 %v3827, %v3828
        %v3830 = vrcp.pop 16.0
        %v3831 = vmul.f32 %v3829, %v3830
        %v3832 = vsub.f32 %v3817, %v3831
        %v3833 = vsub.f32 %v3820, %v3831
        %v3834 = vmul.f32 %v3832, %v3832
        %v3835 = vmul.f32 %v3833, %v3833
        %v3836 = vadd.f32 %v3834, %v3835
        %v3837 = vrot.slane %v3836, 4
        %v3838 = vadd.f32 %v3836, %v3837
        %v3839 = vrot.slane %v3838, 2
        %v3840 = vadd.f32 %v3838, %v3839
        %v3841 = vrot.slane %v3840, 1
        %v3842 = vadd.f32 %v3840, %v3841
        %v3843 = vmul.f32 %v3842, %v3830
        %v3844 = vadd.f32 %v3843, 1e-05
        %v3845 = vrsqrt.pop %v3844
        %v3846 = vmul.f32 %v3832, %v3845
        %v3847 = vmul.f32 %v3833, %v3845
        %v3848 = vadd.f32 %v1832, %v3846
        %v3849 = vadd.f32 %v1833, %v3847
        %v3850 = vmax.f32 %v3848, 0.0
        %v3851 = vmax.f32 %v3849, 0.0
        %v3852 = vand.u32 2147483647, %v3848
        %v3853 = vand.u32 2147483647, %v3849
        %v3854 = vsub.f32 0.0, %v3852
        %v3855 = vsub.f32 0.0, %v3853
        %v3856 = vmul.f32 %v3854, 1.442695
        %v3857 = vpow.pop %v3856
        %v3858 = vmul.f32 %v3855, 1.442695
        %v3859 = vpow.pop %v3858
        %v3860 = vadd.f32 %v3857, 1.0
        %v3861 = vlog2.pop %v3860
        %v3862 = vmul.f32 %v3861, 0.6931472
        %v3863 = vmul.f32 -0.5, %v3857
        %v3864 = vadd.f32 %v3863, 1.0
        %v3865 = vmul.f32 %v3864, %v3857
        %v3866 = vand.u32 2147483647, %v3857
        %vm3867 = vcmp.lt.f32.partialorder %v3866, 0.0004427343
        %v3868 = vsel %vm3867, %v3865, %v3862
        %v3869 = vadd.f32 %v3859, 1.0
        %v3870 = vlog2.pop %v3869
        %v3871 = vmul.f32 %v3870, 0.6931472
        %v3872 = vmul.f32 -0.5, %v3859
        %v3873 = vadd.f32 %v3872, 1.0
        %v3874 = vmul.f32 %v3873, %v3859
        %v3875 = vand.u32 2147483647, %v3859
        %vm3876 = vcmp.lt.f32.partialorder %v3875, 0.0004427343
        %v3877 = vsel %vm3876, %v3874, %v3871
        %v3878 = vadd.f32 %v3850, %v3868
        %v3879 = vadd.f32 %v3851, %v3877
        %3880 = vst [vmem:[#allocation2] sm:$0xff] %v3878
        %3881 = vst [vmem:[#allocation2 + $0x8] sm:$0xff] %v3879
        %p3882 = scmp.eq.s32.totalorder %s75, 2
        // Predicated region
        $region189: #{joint_diffusion_transformer_forward.1} parent=131 // pred_check
          %p3883 = pneg %p3882
        $region190: #{joint_diffusion_transformer_forward.1} parent=131 // pred_check_branch
          %3885 = sbr.rel (%p3883) target = $region192
        $region191: #{joint_diffusion_transformer_forward.1} parent=131 // pred_region
          %v3886 = vpack.c.bf16 %v3879, %v3878
          %v3887 = vld [vmem:[%s49] sm:$0xff]
          %v3888 = vld [vmem:[%s49 + $0x8] sm:$0xff]
          %v3889 = vld [vmem:[%s49 + $0x10] sm:$0xff]
          %v3890 = vld [vmem:[%s49 + $0x18] sm:$0xff]
          %v3891 = vld [vmem:[%s49 + $0x20] sm:$0xff]
          %v3892 = vld [vmem:[%s49 + $0x28] sm:$0xff]
          %v3893 = vld [vmem:[%s49 + $0x30] sm:$0xff]
          %v3894 = vld [vmem:[%s49 + $0x38] sm:$0xff]
          %v3895 = vld [vmem:[%s49 + $0x40] sm:$0xff]
          %v3896 = vld [vmem:[%s49 + $0x48] sm:$0xff]
          %v3897 = vld [vmem:[%s49 + $0x50] sm:$0xff]
          %v3898 = vld [vmem:[%s49 + $0x58] sm:$0xff]
          %v3899 = vld [vmem:[%s49 + $0x60] sm:$0xff]
          %v3900 = vld [vmem:[%s49 + $0x68] sm:$0xff]
          %v3901 = vld [vmem:[%s49 + $0x70] sm:$0xff]
          %v3902 = vld [vmem:[%s49 + $0x78] sm:$0xff]
          %v3903 = vld [vmem:[#allocation19] sm:$0x3]
          %v3905 = vlaneseq
          %v3906 = vshrl.u32 %v3905, 7
          %v3907 = vsub.s32 0, %v3906
          %v3908 = vrot.slane %v3903, %v3907
          %v3909 = vlaneseq
          %v3910 = vshrl.u32 %v3909, 7
          %v3911 = vsub.s32 1, %v3910
          %v3912 = vrot.slane %v3903, %v3911
          %v3931 = vunpack.c.l.b16 %v3887
          %v3932 = vunpack.c.h.b16 %v3887
          %v3933 = vunpack.c.l.b16 %v3888
          %v3934 = vunpack.c.h.b16 %v3888
          %v3935 = vunpack.c.l.b16 %v3889
          %v3936 = vunpack.c.h.b16 %v3889
          %v3937 = vunpack.c.l.b16 %v3890
          %v3938 = vunpack.c.h.b16 %v3890
          %v3939 = vunpack.c.l.b16 %v3891
          %v3940 = vunpack.c.h.b16 %v3891
          %v3941 = vunpack.c.l.b16 %v3892
          %v3942 = vunpack.c.h.b16 %v3892
          %v3943 = vunpack.c.l.b16 %v3893
          %v3944 = vunpack.c.h.b16 %v3893
          %v3945 = vunpack.c.l.b16 %v3894
          %v3946 = vunpack.c.h.b16 %v3894
          %v3947 = vunpack.c.l.b16 %v3895
          %v3948 = vunpack.c.h.b16 %v3895
          %v3949 = vunpack.c.l.b16 %v3896
          %v3950 = vunpack.c.h.b16 %v3896
          %v3951 = vunpack.c.l.b16 %v3897
          %v3952 = vunpack.c.h.b16 %v3897
          %v3953 = vunpack.c.l.b16 %v3898
          %v3954 = vunpack.c.h.b16 %v3898
          %v3955 = vunpack.c.l.b16 %v3899
          %v3956 = vunpack.c.h.b16 %v3899
          %v3957 = vunpack.c.l.b16 %v3900
          %v3958 = vunpack.c.h.b16 %v3900
          %v3959 = vunpack.c.l.b16 %v3901
          %v3960 = vunpack.c.h.b16 %v3901
          %v3961 = vunpack.c.l.b16 %v3902
          %v3962 = vunpack.c.h.b16 %v3902
          %v3963 = vpack.c.b16 %v3933, %v3931
          %v3964 = vpack.c.b16 %v3934, %v3932
          %v3965 = vpack.c.b16 %v3937, %v3935
          %v3966 = vpack.c.b16 %v3938, %v3936
          %v3967 = vpack.c.b16 %v3941, %v3939
          %v3968 = vpack.c.b16 %v3942, %v3940
          %v3969 = vpack.c.b16 %v3945, %v3943
          %v3970 = vpack.c.b16 %v3946, %v3944
          %v3971 = vpack.c.b16 %v3949, %v3947
          %v3972 = vpack.c.b16 %v3950, %v3948
          %v3973 = vpack.c.b16 %v3953, %v3951
          %v3974 = vpack.c.b16 %v3954, %v3952
          %v3975 = vpack.c.b16 %v3957, %v3955
          %v3976 = vpack.c.b16 %v3958, %v3956
          %v3977 = vpack.c.b16 %v3961, %v3959
          %v3978 = vpack.c.b16 %v3962, %v3960
          %3995 = vmatprep.subr.bf16.mxu0 %v3964
          %3996 = vmatpush1.bf16.msra.mxu0 %v3963
          %3997 = vmatprep.subr.bf16.mxu0 %v3966
          %3998 = vmatpush1.bf16.msra.mxu0 %v3965
          %3999 = vmatprep.subr.bf16.mxu0 %v3968
          %4000 = vmatpush1.bf16.msra.mxu0 %v3967
          %4001 = vmatprep.subr.bf16.mxu0 %v3970
          %4002 = vmatpush1.bf16.msra.mxu0 %v3969
          %4003 = vmatprep.subr.bf16.mxu0 %v3972
          %4004 = vmatpush1.bf16.msra.mxu0 %v3971
          %4005 = vmatprep.subr.bf16.mxu0 %v3974
          %4006 = vmatpush1.bf16.msra.mxu0 %v3973
          %4007 = vmatprep.subr.bf16.mxu0 %v3976
          %4008 = vmatpush1.bf16.msra.mxu0 %v3975
          %4009 = vmatprep.subr.bf16.mxu0 %v3978
          %4010 = vmatpush1.bf16.msra.mxu0 %v3977
          %4011 = vmatprep.subr.bf16.mxu0 0
          %4012 = vmatpush1.bf16.msra.mxu0 0
          %4013 = vmatprep.subr.bf16.mxu0 0
          %4014 = vmatpush1.bf16.msra.mxu0 0
          %4015 = vmatprep.subr.bf16.mxu0 0
          %4016 = vmatpush1.bf16.msra.mxu0 0
          %4017 = vmatprep.subr.bf16.mxu0 0
          %4018 = vmatpush1.bf16.msra.mxu0 0
          %4019 = vmatprep.subr.bf16.mxu0 0
          %4020 = vmatpush1.bf16.msra.mxu0 0
          %4021 = vmatprep.subr.bf16.mxu0 0
          %4022 = vmatpush1.bf16.msra.mxu0 0
          %4023 = vmatprep.subr.bf16.mxu0 0
          %4024 = vmatpush1.bf16.msra.mxu0 0
          %4025 = vmatprep.subr.bf16.mxu0 0
          %4026 = vmatpush1.bf16.msra.mxu0 0
          %4027 = vmatprep.mubr.bf16.mxu0 0
          %4028 = vmatmul.mubr.bf16.gmra.mrb[0].mxu0 %v3886
          %v4029 = vpop.f32.mrb[0].mxu0
          %v4030 = vadd.f32 %v3908, %v4029
          %v4031 = vpop.f32.mrb[0].mxu0
          %v4032 = vadd.f32 %v3912, %v4031
          %v4033 = vpop.f32.mrb[0].mxu0
          %v4034 = vadd.f32 %v3908, %v4033
          %v4035 = vpop.f32.mrb[0].mxu0
          %v4036 = vadd.f32 %v3912, %v4035
          %4037 = vdwg.mxu0
          %4038 = vst [vmem:[%s57] sm:$0xff] %v4030
          %4039 = vst [vmem:[%s57 + $0x8] sm:$0xff] %v4032
          %4040 = vst [vmem:[%s57 + $0x10] sm:$0xff] %v4034
          %4041 = vst [vmem:[%s57 + $0x18] sm:$0xff] %v4036
          %v4042 = vld [vmem:[%s5] sm:$0x1]
          %v4043 = vlaneseq
          %v4044 = vshrl.u32 %v4043, 7
          %v4045 = vsub.s32 0, %v4044
          %v4046 = vrot.slane %v4042, %v4045
          %vm4047 = vcmp.eq.s32.totalorder %v4046, %v3651
          %v4048 = vsel %vm4047, 1, 0
          %v4049 = vcvt.s32.f32 %v4048
          %vm4050 = vcmask 123904
          %v4051 = vsel %vm4050, %v4049, 0.0
          %4052 = vadd.xlane.f32.xlu0 %v4051
          %v4053 = vpop.xlane.xlu0 %4052
          %v4054 = vmax.f32 %v4053, 1.0
          %v4055 = vpack.c.bf16 %v4049, %v4049
          %v4057 = vsel %vm2512, %v4055, 0
          %4059 = vmatprep.subr.bf16.mxu0 0
          %4060 = vmatpush1.bf16.msra.mxu0 %v3886
          %4061 = vmatprep.subr.bf16.mxu0 0
          %4062 = vmatpush1.bf16.msra.mxu0 0
          %4063 = vmatprep.subr.bf16.mxu0 0
          %4064 = vmatpush1.bf16.msra.mxu0 0
          %4065 = vmatprep.subr.bf16.mxu0 0
          %4066 = vmatpush1.bf16.msra.mxu0 0
          %4067 = vmatprep.subr.bf16.mxu0 0
          %4068 = vmatpush1.bf16.msra.mxu0 0
          %4069 = vmatprep.subr.bf16.mxu0 0
          %4070 = vmatpush1.bf16.msra.mxu0 0
          %4071 = vmatprep.subr.bf16.mxu0 0
          %4072 = vmatpush1.bf16.msra.mxu0 0
          %4073 = vmatprep.subr.bf16.mxu0 0
          %4074 = vmatpush1.bf16.msra.mxu0 0
          %4075 = vmatprep.subr.bf16.mxu0 0
          %4076 = vmatpush1.bf16.msra.mxu0 0
          %4077 = vmatprep.subr.bf16.mxu0 0
          %4078 = vmatpush1.bf16.msra.mxu0 0
          %4079 = vmatprep.subr.bf16.mxu0 0
          %4080 = vmatpush1.bf16.msra.mxu0 0
          %4081 = vmatprep.subr.bf16.mxu0 0
          %4082 = vmatpush1.bf16.msra.mxu0 0
          %4083 = vmatprep.subr.bf16.mxu0 0
          %4084 = vmatpush1.bf16.msra.mxu0 0
          %4085 = vmatprep.subr.bf16.mxu0 0
          %4086 = vmatpush1.bf16.msra.mxu0 0
          %4087 = vmatprep.subr.bf16.mxu0 0
          %4088 = vmatpush1.bf16.msra.mxu0 0
          %4089 = vmatprep.subr.bf16.mxu0 0
          %4090 = vmatpush1.bf16.msra.mxu0 0
          %4091 = vmatprep.mubr.bf16.mxu0 0
          %4092 = vmatmul.mubr.bf16.gmra.mrb[0].mxu0 %v4057
          %v4093 = vpop.f32.mrb[0].mxu0
          %v4094 = vadd.f32 0.0, %v4093
          %v4095 = vpop.f32.mrb[0].mxu0
          %v4096 = vpop.f32.mrb[0].mxu0
          %v4097 = vpop.f32.mrb[0].mxu0
          %4098 = vdwg.mxu0
          %v4099 = vrcp.pop %v4054
          %v4100 = vmul.f32 %v4094, %v4099
          %v4101 = vpack.c.bf16 %v4100, %v4100
          %v4102 = vld [vmem:[%s53] sm:$0xf]
          %v4103 = vld [vmem:[%s53 + $0x4] sm:$0xf]
          %v4104 = vld [vmem:[%s53 + $0x8] sm:$0xf]
          %v4105 = vld [vmem:[%s53 + $0xc] sm:$0xf]
          %v4106 = vld [vmem:[%s53 + $0x10] sm:$0xf]
          %v4107 = vld [vmem:[%s53 + $0x14] sm:$0xf]
          %v4108 = vld [vmem:[%s53 + $0x18] sm:$0xf]
          %v4109 = vld [vmem:[%s53 + $0x1c] sm:$0xf]
          %v4110 = vld [vmem:[%s53 + $0x20] sm:$0xf]
          %v4111 = vld [vmem:[%s53 + $0x24] sm:$0xf]
          %v4112 = vld [vmem:[%s53 + $0x28] sm:$0xf]
          %v4113 = vld [vmem:[%s53 + $0x2c] sm:$0xf]
          %v4114 = vld [vmem:[%s53 + $0x30] sm:$0xf]
          %v4115 = vld [vmem:[%s53 + $0x34] sm:$0xf]
          %v4116 = vld [vmem:[%s53 + $0x38] sm:$0xf]
          %v4117 = vld [vmem:[%s53 + $0x3c] sm:$0xf]
          %v4118 = vld [vmem:[#allocation20] sm:$0x1]
          %v4120 = vlaneseq
          %v4121 = vshrl.u32 %v4120, 7
          %v4122 = vsub.s32 0, %v4121
          %v4123 = vrot.slane %v4118, %v4122
          %v4141 = vunpack.c.l.b16 %v4102
          %v4142 = vunpack.c.l.b16 %v4103
          %v4143 = vunpack.c.l.b16 %v4104
          %v4144 = vunpack.c.l.b16 %v4105
          %v4145 = vunpack.c.l.b16 %v4106
          %v4146 = vunpack.c.l.b16 %v4107
          %v4147 = vunpack.c.l.b16 %v4108
          %v4148 = vunpack.c.l.b16 %v4109
          %v4149 = vunpack.c.l.b16 %v4110
          %v4150 = vunpack.c.l.b16 %v4111
          %v4151 = vunpack.c.l.b16 %v4112
          %v4152 = vunpack.c.l.b16 %v4113
          %v4153 = vunpack.c.l.b16 %v4114
          %v4154 = vunpack.c.l.b16 %v4115
          %v4155 = vunpack.c.l.b16 %v4116
          %v4156 = vunpack.c.l.b16 %v4117
          %v4157 = vpack.c.b16 %v4142, %v4141
          %v4158 = vpack.c.b16 %v4144, %v4143
          %v4159 = vpack.c.b16 %v4146, %v4145
          %v4160 = vpack.c.b16 %v4148, %v4147
          %v4161 = vpack.c.b16 %v4150, %v4149
          %v4162 = vpack.c.b16 %v4152, %v4151
          %v4163 = vpack.c.b16 %v4154, %v4153
          %v4164 = vpack.c.b16 %v4156, %v4155
          %4173 = vmatprep.subr.bf16.mxu0 0
          %4174 = vmatpush1.bf16.msra.mxu0 %v4157
          %4175 = vmatprep.subr.bf16.mxu0 0
          %4176 = vmatpush1.bf16.msra.mxu0 %v4158
          %4177 = vmatprep.subr.bf16.mxu0 0
          %4178 = vmatpush1.bf16.msra.mxu0 %v4159
          %4179 = vmatprep.subr.bf16.mxu0 0
          %4180 = vmatpush1.bf16.msra.mxu0 %v4160
          %4181 = vmatprep.subr.bf16.mxu0 0
          %4182 = vmatpush1.bf16.msra.mxu0 %v4161
          %4183 = vmatprep.subr.bf16.mxu0 0
          %4184 = vmatpush1.bf16.msra.mxu0 %v4162
          %4185 = vmatprep.subr.bf16.mxu0 0
          %4186 = vmatpush1.bf16.msra.mxu0 %v4163
          %4187 = vmatprep.subr.bf16.mxu0 0
          %4188 = vmatpush1.bf16.msra.mxu0 %v4164
          %4189 = vmatprep.subr.bf16.mxu0 0
          %4190 = vmatpush1.bf16.msra.mxu0 0
          %4191 = vmatprep.subr.bf16.mxu0 0
          %4192 = vmatpush1.bf16.msra.mxu0 0
          %4193 = vmatprep.subr.bf16.mxu0 0
          %4194 = vmatpush1.bf16.msra.mxu0 0
          %4195 = vmatprep.subr.bf16.mxu0 0
          %4196 = vmatpush1.bf16.msra.mxu0 0
          %4197 = vmatprep.subr.bf16.mxu0 0
          %4198 = vmatpush1.bf16.msra.mxu0 0
          %4199 = vmatprep.subr.bf16.mxu0 0
          %4200 = vmatpush1.bf16.msra.mxu0 0
          %4201 = vmatprep.subr.bf16.mxu0 0
          %4202 = vmatpush1.bf16.msra.mxu0 0
          %4203 = vmatprep.subr.bf16.mxu0 0
          %4204 = vmatpush1.bf16.msra.mxu0 0
          %4205 = vmatprep.mubr.bf16.mxu0 0
          %4206 = vmatmul.mubr.bf16.gmra.mrb[0].mxu0 %v4101
          %v4207 = vpop.f32.mrb[0].mxu0
          %v4208 = vadd.f32 %v4123, %v4207
          %v4209 = vpop.f32.mrb[0].mxu0
          %v4210 = vpop.f32.mrb[0].mxu0
          %v4211 = vpop.f32.mrb[0].mxu0
          %4212 = vdwg.mxu0
          %4213 = vst [vmem:[%s59] sm:$0x3] %v4208
        $region192: #{joint_diffusion_transformer_forward.1} parent=131 // pred_fallthru
          _
        // Predicated region
        $region193: #{joint_diffusion_transformer_forward.1} parent=131 // pred_check
          %p4214 = pneg %p701
        $region194: #{joint_diffusion_transformer_forward.1} parent=131 // pred_check_branch
          %4216 = sbr.rel (%p4214) target = $region196
        $region195: #{joint_diffusion_transformer_forward.1} parent=131 // pred_region
          _
        $region196: #{joint_diffusion_transformer_forward.1} parent=131 // pred_fallthru
          _
        // Predicated region
        $region197: #{joint_diffusion_transformer_forward.1} parent=131 // pred_check
          %p4217 = pneg %p722
        $region198: #{joint_diffusion_transformer_forward.1} parent=131 // pred_check_branch
          %4219 = sbr.rel (%p4217) target = $region200
        $region199: #{joint_diffusion_transformer_forward.1} parent=131 // pred_region
          _
        $region200: #{joint_diffusion_transformer_forward.1} parent=131 // pred_fallthru
          _
        // Predicated region
        $region201: #{joint_diffusion_transformer_forward.1} parent=131 // pred_check
          %p4220 = pneg %p701
        $region202: #{joint_diffusion_transformer_forward.1} parent=131 // pred_check_branch
          %4222 = sbr.rel (%p4220) target = $region204
        $region203: #{joint_diffusion_transformer_forward.1} parent=131 // pred_region
          _
        $region204: #{joint_diffusion_transformer_forward.1} parent=131 // pred_fallthru
          _
        // Predicated region
        $region205: #{joint_diffusion_transformer_forward.1} parent=131 // pred_check
          %p4223 = pneg %p722
        $region206: #{joint_diffusion_transformer_forward.1} parent=131 // pred_check_branch
          %4225 = sbr.rel (%p4223) target = $region208
        $region207: #{joint_diffusion_transformer_forward.1} parent=131 // pred_region
          _
        $region208: #{joint_diffusion_transformer_forward.1} parent=131 // pred_fallthru
          _
      $region132: #{joint_diffusion_transformer_forward.1} parent=5 // pred_fallthru
        _
      %p4226 = scmp.le.s32.totalorder 2, %s70
      // Predicated region
      $region209: #{joint_diffusion_transformer_forward.1} parent=5 // pred_check
        %p4227 = pneg %p4226
      $region210: #{joint_diffusion_transformer_forward.1} parent=5 // pred_check_branch
        %4229 = sbr.rel (%p4227) target = $region212
      $region211: #{joint_diffusion_transformer_forward.1} parent=5 // pred_region
        %s4230 = ssub.s32 %s70, 2
      $region212: #{joint_diffusion_transformer_forward.1} parent=5 // pred_fallthru
        _
    $region6: #{joint_diffusion_transformer_forward.1} parent=1 // loop_footer
      %s74 = sadd.s32 1, %s70
    $region7: #{joint_diffusion_transformer_forward.1} parent=1 // loop_footer_branch
      %69 = sbr.rel target = $region3
    $region8: #{joint_diffusion_transformer_forward.1} parent=1 // loop_exit
      _
    %4231 = vsyncpa [#allocation5], 1
    %s4232 = scalar_lea.sflag [#allocation5], 1
    %4233 = vsyncpa %s4232, 1
    %4234 = vsyncpa [#allocation7], 1
    %4235 = vsyncpa [#allocation10], 1
    %4236 = vsyncpa [#allocation13], 1

</llo_original>
